<compile_context>
chip_gen: v5e
topology: v5e:2x2
jax: 0.10.0
libtpu: 0.0.40
codegen_flags: <defaults>
</compile_context>

<pallas_src>
import math

import jax
import jax.numpy as jnp
import numpy as np
from jax.experimental import pallas as pl
from jax.experimental.pallas import tpu as pltpu


# ---------------------------------------------------------------------------
# Host-side weight packing
# ---------------------------------------------------------------------------
def _pack_banded_conv_weight(w_hwio, Wp, Wo, Wq):
    """(K, K, Cin, Cout) -> (K, Wp*Cin, Wo*Cout) banded matrices (one per kh).

    Output column order is (wo_parity, wq, cout) so the 2x2 W-pool becomes a
    max of the two contiguous lane halves of the conv output.
    """
    K, _, Cin, Cout = w_hwio.shape
    w_np = np.asarray(w_hwio, np.float32)
    banded = np.zeros((K, Wp * Cin, Wo * Cout), np.float32)
    for kh in range(K):
        for kw in range(K):
            for wo in range(Wo):
                wq, parity = wo // 2, wo % 2
                col = parity * (Wq * Cout) + wq * Cout
                row = (wo + kw) * Cin
                banded[kh, row:row + Cin, col:col + Cout] = w_np[kh, kw]
    return jnp.asarray(banded)


# ---------------------------------------------------------------------------
# Kernel
# ---------------------------------------------------------------------------
def _conv_pool_relu_block(pad_ref, wband_ref, bias_row, *, K, Hq, WqCout):
    """Conv (K banded matmuls) + 2x2 max-pool + bias + ReLU.

    pad_ref:   (Hp, Wp*Cin) zero-border padded input, lanes (w, c)-flat
    wband_ref: (K, Wp*Cin, Wo*Cout) banded weights, cols (parity, wq, c)-flat
    bias_row:  (1, Wq*Cout)
    returns:   (Hq, Wq*Cout) value, lanes (w, c)-flat
    """
    acc_e = acc_o = None
    for kh in range(K):
        wb = wband_ref[kh]                                     # (Wp*Cin, Wo*Cout)
        # Even / odd conv-output rows as two strided-row matmuls: the H-pool
        # then needs no sublane shuffling at all.
        pe = jnp.dot(pad_ref[pl.ds(kh, Hq, stride=2), :], wb,
                     preferred_element_type=jnp.float32)
        po = jnp.dot(pad_ref[pl.ds(kh + 1, Hq, stride=2), :], wb,
                     preferred_element_type=jnp.float32)
        acc_e = pe if acc_e is None else acc_e + pe
        acc_o = po if acc_o is None else acc_o + po
    hmax = jnp.maximum(acc_e, acc_o)                           # H-pool -> (Hq, Wo*Cout)
    pooled = jnp.maximum(hmax[:, :WqCout], hmax[:, WqCout:])   # W-pool -> (Hq, Wq*Cout)
    # Bias is a per-channel constant, so adding it after max-pool is exact.
    return jnp.maximum(pooled + bias_row, 0.0)


def _make_fused_kernel(layer_cfgs, batch_block):
    L = len(layer_cfgs)

    def kernel(*refs):
        # refs = [x, (wband_i, bias_i)*L, lw, lb, out, pad_scratch_1..L]
        x_ref = refs[0]
        lw_ref = refs[1 + 2 * L]
        lb_ref = refs[2 + 2 * L]
        o_ref = refs[3 + 2 * L]
        pad_refs = refs[4 + 2 * L:]

        # Zero only the p-wide border strips, once per grid step; the interior
        # is fully overwritten by every sample.  (Not gated on program_id:
        # under "parallel" semantics every core must init its own scratch.)
        for li, cfg in enumerate(layer_cfgs):
            p, H, Cin = cfg["pad"], cfg["H"], cfg["Cin"]
            Hp, WpC = cfg["Hp"], cfg["Wp"] * Cin
            WC = cfg["W"] * Cin
            if p > 0:
                pad_ref = pad_refs[li]
                pad_ref[0:p, :] = jnp.zeros((p, WpC), jnp.float32)
                pad_ref[p + H:Hp, :] = jnp.zeros((p, WpC), jnp.float32)
                pad_ref[p:p + H, 0:p * Cin] = jnp.zeros((H, p * Cin), jnp.float32)
                pad_ref[p:p + H, p * Cin + WC:WpC] = jnp.zeros((H, p * Cin), jnp.float32)

        lw = lw_ref[...]                                   # (Hf, Wf*Cf) linear weight
        biases = [refs[2 + 2 * li][...] for li in range(L)]

        outs = []
        for b in range(batch_block):                       # static unroll over the block
            a = x_ref[b]                                   # (H0, W0*C0), lane-dense
            for li, cfg in enumerate(layer_cfgs):
                p, H, Cin = cfg["pad"], cfg["H"], cfg["Cin"]
                WC = cfg["W"] * Cin
                pad_ref = pad_refs[li]
                pad_ref[p:p + H, p * Cin:p * Cin + WC] = a
                a = _conv_pool_relu_block(
                    pad_ref, refs[1 + 2 * li], biases[li],
                    K=cfg["K"], Hq=cfg["Hq"], WqCout=cfg["Wq"] * cfg["Cout"])
            # Final Linear for this sample: VPU multiply + full reduce.
            outs.append(jnp.sum(a * lw).reshape(1, 1))
        # One lane-dense (1, B) output row per grid step.
        o_ref[...] = jnp.concatenate(outs, axis=1) + lb_ref[...]

    return kernel


# ---------------------------------------------------------------------------
# Wrapper: pre-pack weights into kernel layouts, build the pallas_call
# ---------------------------------------------------------------------------
def build_fused_forward(conv_params, linear_params, input_chw, batch_block=8):
    C0, H0, W0 = input_chw

    layer_cfgs = []
    weight_inputs = []
    in_specs = [pl.BlockSpec((batch_block, H0, W0 * C0), lambda i: (i, 0, 0))]
    scratch_shapes = []

    h, w, c = H0, W0, C0
    for prm in conv_params:
        K = prm["w"].shape[0]
        p = prm["pad"]
        Cout = prm["w"].shape[3]
        Hp, Wp = h + 2 * p, w + 2 * p
        Ho, Wo = Hp - K + 1, Wp - K + 1
        # TODO(synk): odd conv-output sizes (MaxPool2d floor-drops the last
        # row/col) are not handled; supported configs keep Ho/Wo even.
        assert Ho % 2 == 0 and Wo % 2 == 0
        Hq, Wq = Ho // 2, Wo // 2
        layer_cfgs.append(dict(K=K, pad=p, H=h, W=w, Cin=c, Cout=Cout,
                               Hp=Hp, Wp=Wp, Ho=Ho, Wo=Wo, Hq=Hq, Wq=Wq))
        wband = _pack_banded_conv_weight(prm["w"], Wp=Wp, Wo=Wo, Wq=Wq)
        b_row = jnp.tile(prm["b"].reshape(1, Cout), (1, Wq)).astype(jnp.float32)
        weight_inputs += [wband, b_row]
        in_specs += [pl.BlockSpec((K, Wp * c, Wo * Cout), lambda i: (0, 0, 0)),
                     pl.BlockSpec((1, Wq * Cout), lambda i: (0, 0))]
        # 2-D lane-dense padded scratch: (Hp, Wp*Cin), not (Hp, Wp, Cin).
        scratch_shapes.append(pltpu.VMEM((Hp, Wp * c), jnp.float32))
        h, w, c = Hq, Wq, Cout

    lw, lb = linear_params
    D = h * w * c
    assert lw.shape == (D, 1)
    # Torch flattens activations in (C,H,W) order; the kernel's activation is
    # (H, (W,C))-flat, so permute the Linear weight once on the host.
    lw_hwc = jnp.transpose(lw.reshape(c, h, w), (1, 2, 0)).reshape(h, w * c)
    weight_inputs += [lw_hwc.astype(jnp.float32),
                      lb.reshape(1, 1).astype(jnp.float32)]
    in_specs += [pl.BlockSpec((h, w * c), lambda i: (0, 0)),
                 pl.BlockSpec((1, 1), lambda i: (0, 0))]

    kernel = _make_fused_kernel(layer_cfgs, batch_block)

    def forward(x_nchw):
        N = x_nchw.shape[0]
        # NCHW -> NHWC -> lane-dense (N, H, W*C); dense contiguous input DMA.
        x2d = jnp.transpose(x_nchw, (0, 2, 3, 1)).astype(jnp.float32)
        x2d = x2d.reshape(N, H0, W0 * C0)
        G = pl.cdiv(N, batch_block)
        Npad = G * batch_block
        if Npad != N:
            x2d = jnp.concatenate(
                [x2d, jnp.zeros((Npad - N, H0, W0 * C0), jnp.float32)], axis=0)
        out = pl.pallas_call(
            kernel,
            out_shape=jax.ShapeDtypeStruct((G, 1, batch_block), jnp.float32),
            grid=(G,),
            in_specs=in_specs,
            out_specs=pl.BlockSpec((None, 1, batch_block), lambda i: (i, 0, 0)),
            scratch_shapes=scratch_shapes,
            compiler_params=pltpu.CompilerParams(
                dimension_semantics=("parallel",)),   # v7x: shard steps over 2 TCs
        )(x2d, *weight_inputs)
        return out.reshape(Npad, 1)[:N]

    return jax.jit(forward)


# ---------------------------------------------------------------------------
# Deterministic parameter init (mirrors SimpleCNNModel.__init__/initialize)
# ---------------------------------------------------------------------------
def _xavier_normal(key, shape, fan_in, fan_out, gain):
    std = gain * math.sqrt(2.0 / (fan_in + fan_out))
    return std * jax.random.normal(key, shape, dtype=jnp.float32)


def build_params(key, input_c, input_h, input_w, kernel_sizes, extra_padding):
    gain = math.sqrt(2.0)  # nn.init.calculate_gain('relu')
    conv_params = []
    c, h, w = input_c, input_h, input_w
    for k, ep in zip(kernel_sizes, extra_padding):
        p = (k - 1) // 2 + ep
        cout = 2 * c
        key, wk = jax.random.split(key)
        wgt = _xavier_normal(wk, (k, k, c, cout),
                             fan_in=c * k * k, fan_out=cout * k * k, gain=gain)
        conv_params.append(dict(w=wgt, b=jnp.zeros((cout,), jnp.float32), pad=p))
        h = h // 2 + ep
        w = w // 2 + ep
        c = cout
    lin_dim = h * w * c
    key, lk = jax.random.split(key)
    lw = _xavier_normal(lk, (lin_dim, 1), fan_in=lin_dim, fan_out=1, gain=1.0)
    lb = jnp.zeros((1, 1), jnp.float32)
    return conv_params, (lw, lb), lin_dim


# ---------------------------------------------------------------------------
# Pure-JAX reference (sanity check of the Pallas path)
# ---------------------------------------------------------------------------
def ref_forward(x_nchw, conv_params, linear_params):
    y = x_nchw
    for prm in conv_params:
        w_oihw = jnp.transpose(prm["w"], (3, 2, 0, 1))
        y = jax.lax.conv_general_dilated(
            y, w_oihw, window_strides=(1, 1),
            padding=[(prm["pad"], prm["pad"])] * 2,
            dimension_numbers=("NCHW", "OIHW", "NCHW"),
            precision=jax.lax.Precision.HIGHEST)
        y = y + prm["b"][None, :, None, None]
        y = jax.lax.reduce_window(y, -jnp.inf, jax.lax.max,
                                  (1, 1, 2, 2), (1, 1, 2, 2), "VALID")
        y = jnp.maximum(y, 0.0)
    flat = y.reshape(y.shape[0], -1)                 # (C,H,W)-flat, like torch .view
    lw, lb = linear_params
    return jnp.dot(flat, lw, precision=jax.lax.Precision.HIGHEST) + lb.reshape(1, 1)


# ---------------------------------------------------------------------------
if __name__ == "__main__":
    key = jax.random.PRNGKey(0)
    N, C, H, W = 16, 4, 16, 16                 # N=16 with B=8 -> 2 grid steps
    kernel_sizes = [3, 3]
    extra_padding = [0, 0]

    key, xkey, pkey = jax.random.split(key, 3)
    x = jax.random.normal(xkey, (N, C, H, W), dtype=jnp.float32)

    conv_params, linear_params, lin_dim = build_params(
        pkey, C, H, W, kernel_sizes, extra_padding)
    assert lin_dim == (H // 4) * (W // 4) * (4 * C)

    fwd = build_fused_forward(conv_params, linear_params, (C, H, W), batch_block=8)
    out = jax.block_until_ready(fwd(x))
    assert out.shape == (N, 1)

    ref = jax.block_until_ready(ref_forward(x, conv_params, linear_params))
    assert jnp.allclose(out, ref, rtol=1e-3, atol=1e-3), (out, ref)

    print("KERNEL_OK")
</pallas_src>

<mosaic_0001>
module attributes {stable_mosaic.version = 11 : i64} {
  func.func @kernel(%arg0: i32, %arg1: memref<8x16x64xf32, #tpu.memory_space<vmem>>, %arg2: memref<3x72x128xf32, #tpu.memory_space<vmem>>, %arg3: memref<1x64xf32, #tpu.memory_space<vmem>>, %arg4: memref<3x80x128xf32, #tpu.memory_space<vmem>>, %arg5: memref<1x64xf32, #tpu.memory_space<vmem>>, %arg6: memref<4x64xf32, #tpu.memory_space<vmem>>, %arg7: memref<1x1xf32, #tpu.memory_space<vmem>>, %arg8: memref<1x1x8xf32, #tpu.memory_space<vmem>>, %arg9: memref<18x72xf32, #tpu.memory_space<vmem>>, %arg10: memref<10x80xf32, #tpu.memory_space<vmem>>) attributes {dimension_semantics = [#tpu.dimension_semantics<parallel>], iteration_bounds = array<i64: 2>, scalar_prefetch = 0 : i64, scratch_operands = 2 : i64, tpu.core_type = #tpu.core_type<tc>, window_params = [{transform_indices = @transform_0, window_bounds = array<i64: 8, 16, 64>}, {pipeline_mode = #tpu.pipeline_mode<synchronous>, transform_indices = @transform_1, window_bounds = array<i64: 3, 72, 128>}, {pipeline_mode = #tpu.pipeline_mode<synchronous>, transform_indices = @transform_2, window_bounds = array<i64: 1, 64>}, {pipeline_mode = #tpu.pipeline_mode<synchronous>, transform_indices = @transform_3, window_bounds = array<i64: 3, 80, 128>}, {pipeline_mode = #tpu.pipeline_mode<synchronous>, transform_indices = @transform_4, window_bounds = array<i64: 1, 64>}, {pipeline_mode = #tpu.pipeline_mode<synchronous>, transform_indices = @transform_5, window_bounds = array<i64: 4, 64>}, {pipeline_mode = #tpu.pipeline_mode<synchronous>, transform_indices = @transform_6, window_bounds = array<i64: 1, 1>}, {transform_indices = @transform_7, window_bounds = array<i64: 1, 1, 8>}]} {
    %cst = arith.constant 0.000000e+00 : f32
    %0 = vector.broadcast %cst : f32 to vector<1x72xf32>
    %c0 = arith.constant 0 : index
    %c0_0 = arith.constant 0 : index
    %1 = vector.load %arg9[%c0, %c0_0] : memref<18x72xf32, #tpu.memory_space<vmem>>, vector<1x72xf32>
    tpu.vector_store %arg9[%c0, %c0_0], %0 {strides = array<i32>} : memref<18x72xf32, #tpu.memory_space<vmem>>, vector<1x72xf32>,
    %cst_1 = arith.constant 0.000000e+00 : f32
    %2 = vector.broadcast %cst_1 : f32 to vector<1x72xf32>
    %c17 = arith.constant 17 : index
    %c0_2 = arith.constant 0 : index
    %3 = vector.load %arg9[%c17, %c0_2] : memref<18x72xf32, #tpu.memory_space<vmem>>, vector<1x72xf32>
    tpu.vector_store %arg9[%c17, %c0_2], %2 {strides = array<i32>} : memref<18x72xf32, #tpu.memory_space<vmem>>, vector<1x72xf32>,
    %cst_3 = arith.constant 0.000000e+00 : f32
    %4 = vector.broadcast %cst_3 : f32 to vector<16x4xf32>
    %c1 = arith.constant 1 : index
    %c0_4 = arith.constant 0 : index
    %5 = vector.load %arg9[%c1, %c0_4] : memref<18x72xf32, #tpu.memory_space<vmem>>, vector<16x4xf32>
    tpu.vector_store %arg9[%c1, %c0_4], %4 {strides = array<i32>} : memref<18x72xf32, #tpu.memory_space<vmem>>, vector<16x4xf32>,
    %cst_5 = arith.constant 0.000000e+00 : f32
    %6 = vector.broadcast %cst_5 : f32 to vector<16x4xf32>
    %c1_6 = arith.constant 1 : index
    %c68 = arith.constant 68 : index
    %7 = vector.load %arg9[%c1_6, %c68] : memref<18x72xf32, #tpu.memory_space<vmem>>, vector<16x4xf32>
    tpu.vector_store %arg9[%c1_6, %c68], %6 {strides = array<i32>} : memref<18x72xf32, #tpu.memory_space<vmem>>, vector<16x4xf32>,
    %cst_7 = arith.constant 0.000000e+00 : f32
    %8 = vector.broadcast %cst_7 : f32 to vector<1x80xf32>
    %c0_8 = arith.constant 0 : index
    %c0_9 = arith.constant 0 : index
    %9 = vector.load %arg10[%c0_8, %c0_9] : memref<10x80xf32, #tpu.memory_space<vmem>>, vector<1x80xf32>
    tpu.vector_store %arg10[%c0_8, %c0_9], %8 {strides = array<i32>} : memref<10x80xf32, #tpu.memory_space<vmem>>, vector<1x80xf32>,
    %cst_10 = arith.constant 0.000000e+00 : f32
    %10 = vector.broadcast %cst_10 : f32 to vector<1x80xf32>
    %c9 = arith.constant 9 : index
    %c0_11 = arith.constant 0 : index
    %11 = vector.load %arg10[%c9, %c0_11] : memref<10x80xf32, #tpu.memory_space<vmem>>, vector<1x80xf32>
    tpu.vector_store %arg10[%c9, %c0_11], %10 {strides = array<i32>} : memref<10x80xf32, #tpu.memory_space<vmem>>, vector<1x80xf32>,
    %cst_12 = arith.constant 0.000000e+00 : f32
    %12 = vector.broadcast %cst_12 : f32 to vector<8x8xf32>
    %c1_13 = arith.constant 1 : index
    %c0_14 = arith.constant 0 : index
    %13 = vector.load %arg10[%c1_13, %c0_14] : memref<10x80xf32, #tpu.memory_space<vmem>>, vector<8x8xf32>
    tpu.vector_store %arg10[%c1_13, %c0_14], %12 {strides = array<i32>} : memref<10x80xf32, #tpu.memory_space<vmem>>, vector<8x8xf32>,
    %cst_15 = arith.constant 0.000000e+00 : f32
    %14 = vector.broadcast %cst_15 : f32 to vector<8x8xf32>
    %c1_16 = arith.constant 1 : index
    %c72 = arith.constant 72 : index
    %15 = vector.load %arg10[%c1_16, %c72] : memref<10x80xf32, #tpu.memory_space<vmem>>, vector<8x8xf32>
    tpu.vector_store %arg10[%c1_16, %c72], %14 {strides = array<i32>} : memref<10x80xf32, #tpu.memory_space<vmem>>, vector<8x8xf32>,
    %c0_17 = arith.constant 0 : index
    %c0_18 = arith.constant 0 : index
    %16 = vector.load %arg6[%c0_17, %c0_18] : memref<4x64xf32, #tpu.memory_space<vmem>>, vector<4x64xf32>
    %c0_19 = arith.constant 0 : index
    %c0_20 = arith.constant 0 : index
    %17 = vector.load %arg3[%c0_19, %c0_20] : memref<1x64xf32, #tpu.memory_space<vmem>>, vector<1x64xf32>
    %c0_21 = arith.constant 0 : index
    %c0_22 = arith.constant 0 : index
    %18 = vector.load %arg5[%c0_21, %c0_22] : memref<1x64xf32, #tpu.memory_space<vmem>>, vector<1x64xf32>
    %c0_23 = arith.constant 0 : index
    %c0_24 = arith.constant 0 : index
    %c0_25 = arith.constant 0 : index
    %19 = vector.load %arg1[%c0_23, %c0_24, %c0_25] : memref<8x16x64xf32, #tpu.memory_space<vmem>>, vector<1x16x64xf32>
    %20 = vector.shape_cast %19 : vector<1x16x64xf32> to vector<16x64xf32>
    %c1_26 = arith.constant 1 : index
    %c4 = arith.constant 4 : index
    %21 = vector.load %arg9[%c1_26, %c4] : memref<18x72xf32, #tpu.memory_space<vmem>>, vector<16x64xf32>
    tpu.vector_store %arg9[%c1_26, %c4], %20 {strides = array<i32>} : memref<18x72xf32, #tpu.memory_space<vmem>>, vector<16x64xf32>,
    %c0_27 = arith.constant 0 : index
    %c0_28 = arith.constant 0 : index
    %c0_29 = arith.constant 0 : index
    %22 = vector.load %arg2[%c0_27, %c0_28, %c0_29] : memref<3x72x128xf32, #tpu.memory_space<vmem>>, vector<1x72x128xf32>
    %23 = vector.shape_cast %22 : vector<1x72x128xf32> to vector<72x128xf32>
    %c0_30 = arith.constant 0 : index
    %c0_31 = arith.constant 0 : index
    %24 = tpu.strided_load %arg9[%c0_30, %c0_31] {strides = array<i32: 2, 1>} : memref<18x72xf32, #tpu.memory_space<vmem>>, vector<8x72xf32>
    %cst_32 = arith.constant dense<0.000000e+00> : vector<8x128xf32>
    %25 = tpu.matmul %24, %23, %cst_32 {dimension_numbers = #tpu.dot_dimension_numbers<[1], [0], [0], [1], [0, 0, 1, 1], [], []>} : vector<8x72xf32>, vector<72x128xf32>, vector<8x128xf32> -> vector<8x128xf32>
    %c1_33 = arith.constant 1 : index
    %c0_34 = arith.constant 0 : index
    %26 = tpu.strided_load %arg9[%c1_33, %c0_34] {strides = array<i32: 2, 1>} : memref<18x72xf32, #tpu.memory_space<vmem>>, vector<8x72xf32>
    %cst_35 = arith.constant dense<0.000000e+00> : vector<8x128xf32>
    %27 = tpu.matmul %26, %23, %cst_35 {dimension_numbers = #tpu.dot_dimension_numbers<[1], [0], [0], [1], [0, 0, 1, 1], [], []>} : vector<8x72xf32>, vector<72x128xf32>, vector<8x128xf32> -> vector<8x128xf32>
    %c1_36 = arith.constant 1 : index
    %c0_37 = arith.constant 0 : index
    %c0_38 = arith.constant 0 : index
    %28 = vector.load %arg2[%c1_36, %c0_37, %c0_38] : memref<3x72x128xf32, #tpu.memory_space<vmem>>, vector<1x72x128xf32>
    %29 = vector.shape_cast %28 : vector<1x72x128xf32> to vector<72x128xf32>
    %c1_39 = arith.constant 1 : index
    %c0_40 = arith.constant 0 : index
    %30 = tpu.strided_load %arg9[%c1_39, %c0_40] {strides = array<i32: 2, 1>} : memref<18x72xf32, #tpu.memory_space<vmem>>, vector<8x72xf32>
    %cst_41 = arith.constant dense<0.000000e+00> : vector<8x128xf32>
    %31 = tpu.matmul %30, %29, %cst_41 {dimension_numbers = #tpu.dot_dimension_numbers<[1], [0], [0], [1], [0, 0, 1, 1], [], []>} : vector<8x72xf32>, vector<72x128xf32>, vector<8x128xf32> -> vector<8x128xf32>
    %c2 = arith.constant 2 : index
    %c0_42 = arith.constant 0 : index
    %32 = tpu.strided_load %arg9[%c2, %c0_42] {strides = array<i32: 2, 1>} : memref<18x72xf32, #tpu.memory_space<vmem>>, vector<8x72xf32>
    %cst_43 = arith.constant dense<0.000000e+00> : vector<8x128xf32>
    %33 = tpu.matmul %32, %29, %cst_43 {dimension_numbers = #tpu.dot_dimension_numbers<[1], [0], [0], [1], [0, 0, 1, 1], [], []>} : vector<8x72xf32>, vector<72x128xf32>, vector<8x128xf32> -> vector<8x128xf32>
    %34 = arith.addf %25, %31 : vector<8x128xf32>
    %35 = arith.addf %27, %33 : vector<8x128xf32>
    %c2_44 = arith.constant 2 : index
    %c0_45 = arith.constant 0 : index
    %c0_46 = arith.constant 0 : index
    %36 = vector.load %arg2[%c2_44, %c0_45, %c0_46] : memref<3x72x128xf32, #tpu.memory_space<vmem>>, vector<1x72x128xf32>
    %37 = vector.shape_cast %36 : vector<1x72x128xf32> to vector<72x128xf32>
    %c2_47 = arith.constant 2 : index
    %c0_48 = arith.constant 0 : index
    %38 = tpu.strided_load %arg9[%c2_47, %c0_48] {strides = array<i32: 2, 1>} : memref<18x72xf32, #tpu.memory_space<vmem>>, vector<8x72xf32>
    %cst_49 = arith.constant dense<0.000000e+00> : vector<8x128xf32>
    %39 = tpu.matmul %38, %37, %cst_49 {dimension_numbers = #tpu.dot_dimension_numbers<[1], [0], [0], [1], [0, 0, 1, 1], [], []>} : vector<8x72xf32>, vector<72x128xf32>, vector<8x128xf32> -> vector<8x128xf32>
    %c3 = arith.constant 3 : index
    %c0_50 = arith.constant 0 : index
    %40 = tpu.strided_load %arg9[%c3, %c0_50] {strides = array<i32: 2, 1>} : memref<18x72xf32, #tpu.memory_space<vmem>>, vector<8x72xf32>
    %cst_51 = arith.constant dense<0.000000e+00> : vector<8x128xf32>
    %41 = tpu.matmul %40, %37, %cst_51 {dimension_numbers = #tpu.dot_dimension_numbers<[1], [0], [0], [1], [0, 0, 1, 1], [], []>} : vector<8x72xf32>, vector<72x128xf32>, vector<8x128xf32> -> vector<8x128xf32>
    %42 = arith.addf %34, %39 : vector<8x128xf32>
    %43 = arith.addf %35, %41 : vector<8x128xf32>
    %44 = arith.maximumf %42, %43 : vector<8x128xf32>
    %45 = vector.extract_strided_slice %44 {offsets = [0, 0], sizes = [8, 64], strides = [1, 1]} : vector<8x128xf32> to vector<8x64xf32>
    %46 = vector.extract_strided_slice %44 {offsets = [0, 64], sizes = [8, 64], strides = [1, 1]} : vector<8x128xf32> to vector<8x64xf32>
    %47 = arith.maximumf %45, %46 : vector<8x64xf32>
    %48 = vector.broadcast %17 : vector<1x64xf32> to vector<8x64xf32>
    %49 = arith.addf %47, %48 : vector<8x64xf32>
    %cst_52 = arith.constant 0.000000e+00 : f32
    %50 = vector.broadcast %cst_52 : f32 to vector<8x64xf32>
    %51 = arith.maximumf %49, %50 : vector<8x64xf32>
    %c1_53 = arith.constant 1 : index
    %c8 = arith.constant 8 : index
    %52 = vector.load %arg10[%c1_53, %c8] : memref<10x80xf32, #tpu.memory_space<vmem>>, vector<8x64xf32>
    tpu.vector_store %arg10[%c1_53, %c8], %51 {strides = array<i32>} : memref<10x80xf32, #tpu.memory_space<vmem>>, vector<8x64xf32>,
    %c0_54 = arith.constant 0 : index
    %c0_55 = arith.constant 0 : index
    %c0_56 = arith.constant 0 : index
    %53 = vector.load %arg4[%c0_54, %c0_55, %c0_56] : memref<3x80x128xf32, #tpu.memory_space<vmem>>, vector<1x80x128xf32>
    %54 = vector.shape_cast %53 : vector<1x80x128xf32> to vector<80x128xf32>
    %c0_57 = arith.constant 0 : index
    %c0_58 = arith.constant 0 : index
    %55 = tpu.strided_load %arg10[%c0_57, %c0_58] {strides = array<i32: 2, 1>} : memref<10x80xf32, #tpu.memory_space<vmem>>, vector<4x80xf32>
    %cst_59 = arith.constant dense<0.000000e+00> : vector<4x128xf32>
    %56 = tpu.matmul %55, %54, %cst_59 {dimension_numbers = #tpu.dot_dimension_numbers<[1], [0], [0], [1], [0, 0, 1, 1], [], []>} : vector<4x80xf32>, vector<80x128xf32>, vector<4x128xf32> -> vector<4x128xf32>
    %c1_60 = arith.constant 1 : index
    %c0_61 = arith.constant 0 : index
    %57 = tpu.strided_load %arg10[%c1_60, %c0_61] {strides = array<i32: 2, 1>} : memref<10x80xf32, #tpu.memory_space<vmem>>, vector<4x80xf32>
    %cst_62 = arith.constant dense<0.000000e+00> : vector<4x128xf32>
    %58 = tpu.matmul %57, %54, %cst_62 {dimension_numbers = #tpu.dot_dimension_numbers<[1], [0], [0], [1], [0, 0, 1, 1], [], []>} : vector<4x80xf32>, vector<80x128xf32>, vector<4x128xf32> -> vector<4x128xf32>
    %c1_63 = arith.constant 1 : index
    %c0_64 = arith.constant 0 : index
    %c0_65 = arith.constant 0 : index
    %59 = vector.load %arg4[%c1_63, %c0_64, %c0_65] : memref<3x80x128xf32, #tpu.memory_space<vmem>>, vector<1x80x128xf32>
    %60 = vector.shape_cast %59 : vector<1x80x128xf32> to vector<80x128xf32>
    %c1_66 = arith.constant 1 : index
    %c0_67 = arith.constant 0 : index
    %61 = tpu.strided_load %arg10[%c1_66, %c0_67] {strides = array<i32: 2, 1>} : memref<10x80xf32, #tpu.memory_space<vmem>>, vector<4x80xf32>
    %cst_68 = arith.constant dense<0.000000e+00> : vector<4x128xf32>
    %62 = tpu.matmul %61, %60, %cst_68 {dimension_numbers = #tpu.dot_dimension_numbers<[1], [0], [0], [1], [0, 0, 1, 1], [], []>} : vector<4x80xf32>, vector<80x128xf32>, vector<4x128xf32> -> vector<4x128xf32>
    %c2_69 = arith.constant 2 : index
    %c0_70 = arith.constant 0 : index
    %63 = tpu.strided_load %arg10[%c2_69, %c0_70] {strides = array<i32: 2, 1>} : memref<10x80xf32, #tpu.memory_space<vmem>>, vector<4x80xf32>
    %cst_71 = arith.constant dense<0.000000e+00> : vector<4x128xf32>
    %64 = tpu.matmul %63, %60, %cst_71 {dimension_numbers = #tpu.dot_dimension_numbers<[1], [0], [0], [1], [0, 0, 1, 1], [], []>} : vector<4x80xf32>, vector<80x128xf32>, vector<4x128xf32> -> vector<4x128xf32>
    %65 = arith.addf %56, %62 : vector<4x128xf32>
    %66 = arith.addf %58, %64 : vector<4x128xf32>
    %c2_72 = arith.constant 2 : index
    %c0_73 = arith.constant 0 : index
    %c0_74 = arith.constant 0 : index
    %67 = vector.load %arg4[%c2_72, %c0_73, %c0_74] : memref<3x80x128xf32, #tpu.memory_space<vmem>>, vector<1x80x128xf32>
    %68 = vector.shape_cast %67 : vector<1x80x128xf32> to vector<80x128xf32>
    %c2_75 = arith.constant 2 : index
    %c0_76 = arith.constant 0 : index
    %69 = tpu.strided_load %arg10[%c2_75, %c0_76] {strides = array<i32: 2, 1>} : memref<10x80xf32, #tpu.memory_space<vmem>>, vector<4x80xf32>
    %cst_77 = arith.constant dense<0.000000e+00> : vector<4x128xf32>
    %70 = tpu.matmul %69, %68, %cst_77 {dimension_numbers = #tpu.dot_dimension_numbers<[1], [0], [0], [1], [0, 0, 1, 1], [], []>} : vector<4x80xf32>, vector<80x128xf32>, vector<4x128xf32> -> vector<4x128xf32>
    %c3_78 = arith.constant 3 : index
    %c0_79 = arith.constant 0 : index
    %71 = tpu.strided_load %arg10[%c3_78, %c0_79] {strides = array<i32: 2, 1>} : memref<10x80xf32, #tpu.memory_space<vmem>>, vector<4x80xf32>
    %cst_80 = arith.constant dense<0.000000e+00> : vector<4x128xf32>
    %72 = tpu.matmul %71, %68, %cst_80 {dimension_numbers = #tpu.dot_dimension_numbers<[1], [0], [0], [1], [0, 0, 1, 1], [], []>} : vector<4x80xf32>, vector<80x128xf32>, vector<4x128xf32> -> vector<4x128xf32>
    %73 = arith.addf %65, %70 : vector<4x128xf32>
    %74 = arith.addf %66, %72 : vector<4x128xf32>
    %75 = arith.maximumf %73, %74 : vector<4x128xf32>
    %76 = vector.extract_strided_slice %75 {offsets = [0, 0], sizes = [4, 64], strides = [1, 1]} : vector<4x128xf32> to vector<4x64xf32>
    %77 = vector.extract_strided_slice %75 {offsets = [0, 64], sizes = [4, 64], strides = [1, 1]} : vector<4x128xf32> to vector<4x64xf32>
    %78 = arith.maximumf %76, %77 : vector<4x64xf32>
    %79 = vector.broadcast %18 : vector<1x64xf32> to vector<4x64xf32>
    %80 = arith.addf %78, %79 : vector<4x64xf32>
    %cst_81 = arith.constant 0.000000e+00 : f32
    %81 = vector.broadcast %cst_81 : f32 to vector<4x64xf32>
    %82 = arith.maximumf %80, %81 : vector<4x64xf32>
    %83 = arith.mulf %82, %16 : vector<4x64xf32>
    %84 = vector.shape_cast %83 : vector<4x64xf32> to vector<1x4x64xf32>
    %cst_82 = arith.constant dense<0.000000e+00> : vector<1xf32>
    %85 = vector.multi_reduction <add>, %84, %cst_82 [1, 2] : vector<1x4x64xf32> to vector<1xf32>
    %86 = vector.shape_cast %85 : vector<1xf32> to vector<1x1x1xf32>
    %87 = vector.extract %86[0, 0, 0] : f32 from vector<1x1x1xf32>
    %88 = vector.broadcast %87 : f32 to vector<1x1xf32>
    %c1_83 = arith.constant 1 : index
    %c0_84 = arith.constant 0 : index
    %c0_85 = arith.constant 0 : index
    %89 = vector.load %arg1[%c1_83, %c0_84, %c0_85] : memref<8x16x64xf32, #tpu.memory_space<vmem>>, vector<1x16x64xf32>
    %90 = vector.shape_cast %89 : vector<1x16x64xf32> to vector<16x64xf32>
    %c1_86 = arith.constant 1 : index
    %c4_87 = arith.constant 4 : index
    %91 = vector.load %arg9[%c1_86, %c4_87] : memref<18x72xf32, #tpu.memory_space<vmem>>, vector<16x64xf32>
    tpu.vector_store %arg9[%c1_86, %c4_87], %90 {strides = array<i32>} : memref<18x72xf32, #tpu.memory_space<vmem>>, vector<16x64xf32>,
    %c0_88 = arith.constant 0 : index
    %c0_89 = arith.constant 0 : index
    %c0_90 = arith.constant 0 : index
    %92 = vector.load %arg2[%c0_88, %c0_89, %c0_90] : memref<3x72x128xf32, #tpu.memory_space<vmem>>, vector<1x72x128xf32>
    %93 = vector.shape_cast %92 : vector<1x72x128xf32> to vector<72x128xf32>
    %c0_91 = arith.constant 0 : index
    %c0_92 = arith.constant 0 : index
    %94 = tpu.strided_load %arg9[%c0_91, %c0_92] {strides = array<i32: 2, 1>} : memref<18x72xf32, #tpu.memory_space<vmem>>, vector<8x72xf32>
    %cst_93 = arith.constant dense<0.000000e+00> : vector<8x128xf32>
    %95 = tpu.matmul %94, %93, %cst_93 {dimension_numbers = #tpu.dot_dimension_numbers<[1], [0], [0], [1], [0, 0, 1, 1], [], []>} : vector<8x72xf32>, vector<72x128xf32>, vector<8x128xf32> -> vector<8x128xf32>
    %c1_94 = arith.constant 1 : index
    %c0_95 = arith.constant 0 : index
    %96 = tpu.strided_load %arg9[%c1_94, %c0_95] {strides = array<i32: 2, 1>} : memref<18x72xf32, #tpu.memory_space<vmem>>, vector<8x72xf32>
    %cst_96 = arith.constant dense<0.000000e+00> : vector<8x128xf32>
    %97 = tpu.matmul %96, %93, %cst_96 {dimension_numbers = #tpu.dot_dimension_numbers<[1], [0], [0], [1], [0, 0, 1, 1], [], []>} : vector<8x72xf32>, vector<72x128xf32>, vector<8x128xf32> -> vector<8x128xf32>
    %c1_97 = arith.constant 1 : index
    %c0_98 = arith.constant 0 : index
    %c0_99 = arith.constant 0 : index
    %98 = vector.load %arg2[%c1_97, %c0_98, %c0_99] : memref<3x72x128xf32, #tpu.memory_space<vmem>>, vector<1x72x128xf32>
    %99 = vector.shape_cast %98 : vector<1x72x128xf32> to vector<72x128xf32>
    %c1_100 = arith.constant 1 : index
    %c0_101 = arith.constant 0 : index
    %100 = tpu.strided_load %arg9[%c1_100, %c0_101] {strides = array<i32: 2, 1>} : memref<18x72xf32, #tpu.memory_space<vmem>>, vector<8x72xf32>
    %cst_102 = arith.constant dense<0.000000e+00> : vector<8x128xf32>
    %101 = tpu.matmul %100, %99, %cst_102 {dimension_numbers = #tpu.dot_dimension_numbers<[1], [0], [0], [1], [0, 0, 1, 1], [], []>} : vector<8x72xf32>, vector<72x128xf32>, vector<8x128xf32> -> vector<8x128xf32>
    %c2_103 = arith.constant 2 : index
    %c0_104 = arith.constant 0 : index
    %102 = tpu.strided_load %arg9[%c2_103, %c0_104] {strides = array<i32: 2, 1>} : memref<18x72xf32, #tpu.memory_space<vmem>>, vector<8x72xf32>
    %cst_105 = arith.constant dense<0.000000e+00> : vector<8x128xf32>
    %103 = tpu.matmul %102, %99, %cst_105 {dimension_numbers = #tpu.dot_dimension_numbers<[1], [0], [0], [1], [0, 0, 1, 1], [], []>} : vector<8x72xf32>, vector<72x128xf32>, vector<8x128xf32> -> vector<8x128xf32>
    %104 = arith.addf %95, %101 : vector<8x128xf32>
    %105 = arith.addf %97, %103 : vector<8x128xf32>
    %c2_106 = arith.constant 2 : index
    %c0_107 = arith.constant 0 : index
    %c0_108 = arith.constant 0 : index
    %106 = vector.load %arg2[%c2_106, %c0_107, %c0_108] : memref<3x72x128xf32, #tpu.memory_space<vmem>>, vector<1x72x128xf32>
    %107 = vector.shape_cast %106 : vector<1x72x128xf32> to vector<72x128xf32>
    %c2_109 = arith.constant 2 : index
    %c0_110 = arith.constant 0 : index
    %108 = tpu.strided_load %arg9[%c2_109, %c0_110] {strides = array<i32: 2, 1>} : memref<18x72xf32, #tpu.memory_space<vmem>>, vector<8x72xf32>
    %cst_111 = arith.constant dense<0.000000e+00> : vector<8x128xf32>
    %109 = tpu.matmul %108, %107, %cst_111 {dimension_numbers = #tpu.dot_dimension_numbers<[1], [0], [0], [1], [0, 0, 1, 1], [], []>} : vector<8x72xf32>, vector<72x128xf32>, vector<8x128xf32> -> vector<8x128xf32>
    %c3_112 = arith.constant 3 : index
    %c0_113 = arith.constant 0 : index
    %110 = tpu.strided_load %arg9[%c3_112, %c0_113] {strides = array<i32: 2, 1>} : memref<18x72xf32, #tpu.memory_space<vmem>>, vector<8x72xf32>
    %cst_114 = arith.constant dense<0.000000e+00> : vector<8x128xf32>
    %111 = tpu.matmul %110, %107, %cst_114 {dimension_numbers = #tpu.dot_dimension_numbers<[1], [0], [0], [1], [0, 0, 1, 1], [], []>} : vector<8x72xf32>, vector<72x128xf32>, vector<8x128xf32> -> vector<8x128xf32>
    %112 = arith.addf %104, %109 : vector<8x128xf32>
    %113 = arith.addf %105, %111 : vector<8x128xf32>
    %114 = arith.maximumf %112, %113 : vector<8x128xf32>
    %115 = vector.extract_strided_slice %114 {offsets = [0, 0], sizes = [8, 64], strides = [1, 1]} : vector<8x128xf32> to vector<8x64xf32>
    %116 = vector.extract_strided_slice %114 {offsets = [0, 64], sizes = [8, 64], strides = [1, 1]} : vector<8x128xf32> to vector<8x64xf32>
    %117 = arith.maximumf %115, %116 : vector<8x64xf32>
    %118 = vector.broadcast %17 : vector<1x64xf32> to vector<8x64xf32>
    %119 = arith.addf %117, %118 : vector<8x64xf32>
    %cst_115 = arith.constant 0.000000e+00 : f32
    %120 = vector.broadcast %cst_115 : f32 to vector<8x64xf32>
    %121 = arith.maximumf %119, %120 : vector<8x64xf32>
    %c1_116 = arith.constant 1 : index
    %c8_117 = arith.constant 8 : index
    %122 = vector.load %arg10[%c1_116, %c8_117] : memref<10x80xf32, #tpu.memory_space<vmem>>, vector<8x64xf32>
    tpu.vector_store %arg10[%c1_116, %c8_117], %121 {strides = array<i32>} : memref<10x80xf32, #tpu.memory_space<vmem>>, vector<8x64xf32>,
    %c0_118 = arith.constant 0 : index
    %c0_119 = arith.constant 0 : index
    %c0_120 = arith.constant 0 : index
    %123 = vector.load %arg4[%c0_118, %c0_119, %c0_120] : memref<3x80x128xf32, #tpu.memory_space<vmem>>, vector<1x80x128xf32>
    %124 = vector.shape_cast %123 : vector<1x80x128xf32> to vector<80x128xf32>
    %c0_121 = arith.constant 0 : index
    %c0_122 = arith.constant 0 : index
    %125 = tpu.strided_load %arg10[%c0_121, %c0_122] {strides = array<i32: 2, 1>} : memref<10x80xf32, #tpu.memory_space<vmem>>, vector<4x80xf32>
    %cst_123 = arith.constant dense<0.000000e+00> : vector<4x128xf32>
    %126 = tpu.matmul %125, %124, %cst_123 {dimension_numbers = #tpu.dot_dimension_numbers<[1], [0], [0], [1], [0, 0, 1, 1], [], []>} : vector<4x80xf32>, vector<80x128xf32>, vector<4x128xf32> -> vector<4x128xf32>
    %c1_124 = arith.constant 1 : index
    %c0_125 = arith.constant 0 : index
    %127 = tpu.strided_load %arg10[%c1_124, %c0_125] {strides = array<i32: 2, 1>} : memref<10x80xf32, #tpu.memory_space<vmem>>, vector<4x80xf32>
    %cst_126 = arith.constant dense<0.000000e+00> : vector<4x128xf32>
    %128 = tpu.matmul %127, %124, %cst_126 {dimension_numbers = #tpu.dot_dimension_numbers<[1], [0], [0], [1], [0, 0, 1, 1], [], []>} : vector<4x80xf32>, vector<80x128xf32>, vector<4x128xf32> -> vector<4x128xf32>
    %c1_127 = arith.constant 1 : index
    %c0_128 = arith.constant 0 : index
    %c0_129 = arith.constant 0 : index
    %129 = vector.load %arg4[%c1_127, %c0_128, %c0_129] : memref<3x80x128xf32, #tpu.memory_space<vmem>>, vector<1x80x128xf32>
    %130 = vector.shape_cast %129 : vector<1x80x128xf32> to vector<80x128xf32>
    %c1_130 = arith.constant 1 : index
    %c0_131 = arith.constant 0 : index
    %131 = tpu.strided_load %arg10[%c1_130, %c0_131] {strides = array<i32: 2, 1>} : memref<10x80xf32, #tpu.memory_space<vmem>>, vector<4x80xf32>
    %cst_132 = arith.constant dense<0.000000e+00> : vector<4x128xf32>
    %132 = tpu.matmul %131, %130, %cst_132 {dimension_numbers = #tpu.dot_dimension_numbers<[1], [0], [0], [1], [0, 0, 1, 1], [], []>} : vector<4x80xf32>, vector<80x128xf32>, vector<4x128xf32> -> vector<4x128xf32>
    %c2_133 = arith.constant 2 : index
    %c0_134 = arith.constant 0 : index
    %133 = tpu.strided_load %arg10[%c2_133, %c0_134] {strides = array<i32: 2, 1>} : memref<10x80xf32, #tpu.memory_space<vmem>>, vector<4x80xf32>
    %cst_135 = arith.constant dense<0.000000e+00> : vector<4x128xf32>
    %134 = tpu.matmul %133, %130, %cst_135 {dimension_numbers = #tpu.dot_dimension_numbers<[1], [0], [0], [1], [0, 0, 1, 1], [], []>} : vector<4x80xf32>, vector<80x128xf32>, vector<4x128xf32> -> vector<4x128xf32>
    %135 = arith.addf %126, %132 : vector<4x128xf32>
    %136 = arith.addf %128, %134 : vector<4x128xf32>
    %c2_136 = arith.constant 2 : index
    %c0_137 = arith.constant 0 : index
    %c0_138 = arith.constant 0 : index
    %137 = vector.load %arg4[%c2_136, %c0_137, %c0_138] : memref<3x80x128xf32, #tpu.memory_space<vmem>>, vector<1x80x128xf32>
    %138 = vector.shape_cast %137 : vector<1x80x128xf32> to vector<80x128xf32>
    %c2_139 = arith.constant 2 : index
    %c0_140 = arith.constant 0 : index
    %139 = tpu.strided_load %arg10[%c2_139, %c0_140] {strides = array<i32: 2, 1>} : memref<10x80xf32, #tpu.memory_space<vmem>>, vector<4x80xf32>
    %cst_141 = arith.constant dense<0.000000e+00> : vector<4x128xf32>
    %140 = tpu.matmul %139, %138, %cst_141 {dimension_numbers = #tpu.dot_dimension_numbers<[1], [0], [0], [1], [0, 0, 1, 1], [], []>} : vector<4x80xf32>, vector<80x128xf32>, vector<4x128xf32> -> vector<4x128xf32>
    %c3_142 = arith.constant 3 : index
    %c0_143 = arith.constant 0 : index
    %141 = tpu.strided_load %arg10[%c3_142, %c0_143] {strides = array<i32: 2, 1>} : memref<10x80xf32, #tpu.memory_space<vmem>>, vector<4x80xf32>
    %cst_144 = arith.constant dense<0.000000e+00> : vector<4x128xf32>
    %142 = tpu.matmul %141, %138, %cst_144 {dimension_numbers = #tpu.dot_dimension_numbers<[1], [0], [0], [1], [0, 0, 1, 1], [], []>} : vector<4x80xf32>, vector<80x128xf32>, vector<4x128xf32> -> vector<4x128xf32>
    %143 = arith.addf %135, %140 : vector<4x128xf32>
    %144 = arith.addf %136, %142 : vector<4x128xf32>
    %145 = arith.maximumf %143, %144 : vector<4x128xf32>
    %146 = vector.extract_strided_slice %145 {offsets = [0, 0], sizes = [4, 64], strides = [1, 1]} : vector<4x128xf32> to vector<4x64xf32>
    %147 = vector.extract_strided_slice %145 {offsets = [0, 64], sizes = [4, 64], strides = [1, 1]} : vector<4x128xf32> to vector<4x64xf32>
    %148 = arith.maximumf %146, %147 : vector<4x64xf32>
    %149 = vector.broadcast %18 : vector<1x64xf32> to vector<4x64xf32>
    %150 = arith.addf %148, %149 : vector<4x64xf32>
    %cst_145 = arith.constant 0.000000e+00 : f32
    %151 = vector.broadcast %cst_145 : f32 to vector<4x64xf32>
    %152 = arith.maximumf %150, %151 : vector<4x64xf32>
    %153 = arith.mulf %152, %16 : vector<4x64xf32>
    %154 = vector.shape_cast %153 : vector<4x64xf32> to vector<1x4x64xf32>
    %cst_146 = arith.constant dense<0.000000e+00> : vector<1xf32>
    %155 = vector.multi_reduction <add>, %154, %cst_146 [1, 2] : vector<1x4x64xf32> to vector<1xf32>
    %156 = vector.shape_cast %155 : vector<1xf32> to vector<1x1x1xf32>
    %157 = vector.extract %156[0, 0, 0] : f32 from vector<1x1x1xf32>
    %158 = vector.broadcast %157 : f32 to vector<1x1xf32>
    %c2_147 = arith.constant 2 : index
    %c0_148 = arith.constant 0 : index
    %c0_149 = arith.constant 0 : index
    %159 = vector.load %arg1[%c2_147, %c0_148, %c0_149] : memref<8x16x64xf32, #tpu.memory_space<vmem>>, vector<1x16x64xf32>
    %160 = vector.shape_cast %159 : vector<1x16x64xf32> to vector<16x64xf32>
    %c1_150 = arith.constant 1 : index
    %c4_151 = arith.constant 4 : index
    %161 = vector.load %arg9[%c1_150, %c4_151] : memref<18x72xf32, #tpu.memory_space<vmem>>, vector<16x64xf32>
    tpu.vector_store %arg9[%c1_150, %c4_151], %160 {strides = array<i32>} : memref<18x72xf32, #tpu.memory_space<vmem>>, vector<16x64xf32>,
    %c0_152 = arith.constant 0 : index
    %c0_153 = arith.constant 0 : index
    %c0_154 = arith.constant 0 : index
    %162 = vector.load %arg2[%c0_152, %c0_153, %c0_154] : memref<3x72x128xf32, #tpu.memory_space<vmem>>, vector<1x72x128xf32>
    %163 = vector.shape_cast %162 : vector<1x72x128xf32> to vector<72x128xf32>
    %c0_155 = arith.constant 0 : index
    %c0_156 = arith.constant 0 : index
    %164 = tpu.strided_load %arg9[%c0_155, %c0_156] {strides = array<i32: 2, 1>} : memref<18x72xf32, #tpu.memory_space<vmem>>, vector<8x72xf32>
    %cst_157 = arith.constant dense<0.000000e+00> : vector<8x128xf32>
    %165 = tpu.matmul %164, %163, %cst_157 {dimension_numbers = #tpu.dot_dimension_numbers<[1], [0], [0], [1], [0, 0, 1, 1], [], []>} : vector<8x72xf32>, vector<72x128xf32>, vector<8x128xf32> -> vector<8x128xf32>
    %c1_158 = arith.constant 1 : index
    %c0_159 = arith.constant 0 : index
    %166 = tpu.strided_load %arg9[%c1_158, %c0_159] {strides = array<i32: 2, 1>} : memref<18x72xf32, #tpu.memory_space<vmem>>, vector<8x72xf32>
    %cst_160 = arith.constant dense<0.000000e+00> : vector<8x128xf32>
    %167 = tpu.matmul %166, %163, %cst_160 {dimension_numbers = #tpu.dot_dimension_numbers<[1], [0], [0], [1], [0, 0, 1, 1], [], []>} : vector<8x72xf32>, vector<72x128xf32>, vector<8x128xf32> -> vector<8x128xf32>
    %c1_161 = arith.constant 1 : index
    %c0_162 = arith.constant 0 : index
    %c0_163 = arith.constant 0 : index
    %168 = vector.load %arg2[%c1_161, %c0_162, %c0_163] : memref<3x72x128xf32, #tpu.memory_space<vmem>>, vector<1x72x128xf32>
    %169 = vector.shape_cast %168 : vector<1x72x128xf32> to vector<72x128xf32>
    %c1_164 = arith.constant 1 : index
    %c0_165 = arith.constant 0 : index
    %170 = tpu.strided_load %arg9[%c1_164, %c0_165] {strides = array<i32: 2, 1>} : memref<18x72xf32, #tpu.memory_space<vmem>>, vector<8x72xf32>
    %cst_166 = arith.constant dense<0.000000e+00> : vector<8x128xf32>
    %171 = tpu.matmul %170, %169, %cst_166 {dimension_numbers = #tpu.dot_dimension_numbers<[1], [0], [0], [1], [0, 0, 1, 1], [], []>} : vector<8x72xf32>, vector<72x128xf32>, vector<8x128xf32> -> vector<8x128xf32>
    %c2_167 = arith.constant 2 : index
    %c0_168 = arith.constant 0 : index
    %172 = tpu.strided_load %arg9[%c2_167, %c0_168] {strides = array<i32: 2, 1>} : memref<18x72xf32, #tpu.memory_space<vmem>>, vector<8x72xf32>
    %cst_169 = arith.constant dense<0.000000e+00> : vector<8x128xf32>
    %173 = tpu.matmul %172, %169, %cst_169 {dimension_numbers = #tpu.dot_dimension_numbers<[1], [0], [0], [1], [0, 0, 1, 1], [], []>} : vector<8x72xf32>, vector<72x128xf32>, vector<8x128xf32> -> vector<8x128xf32>
    %174 = arith.addf %165, %171 : vector<8x128xf32>
    %175 = arith.addf %167, %173 : vector<8x128xf32>
    %c2_170 = arith.constant 2 : index
    %c0_171 = arith.constant 0 : index
    %c0_172 = arith.constant 0 : index
    %176 = vector.load %arg2[%c2_170, %c0_171, %c0_172] : memref<3x72x128xf32, #tpu.memory_space<vmem>>, vector<1x72x128xf32>
    %177 = vector.shape_cast %176 : vector<1x72x128xf32> to vector<72x128xf32>
    %c2_173 = arith.constant 2 : index
    %c0_174 = arith.constant 0 : index
    %178 = tpu.strided_load %arg9[%c2_173, %c0_174] {strides = array<i32: 2, 1>} : memref<18x72xf32, #tpu.memory_space<vmem>>, vector<8x72xf32>
    %cst_175 = arith.constant dense<0.000000e+00> : vector<8x128xf32>
    %179 = tpu.matmul %178, %177, %cst_175 {dimension_numbers = #tpu.dot_dimension_numbers<[1], [0], [0], [1], [0, 0, 1, 1], [], []>} : vector<8x72xf32>, vector<72x128xf32>, vector<8x128xf32> -> vector<8x128xf32>
    %c3_176 = arith.constant 3 : index
    %c0_177 = arith.constant 0 : index
    %180 = tpu.strided_load %arg9[%c3_176, %c0_177] {strides = array<i32: 2, 1>} : memref<18x72xf32, #tpu.memory_space<vmem>>, vector<8x72xf32>
    %cst_178 = arith.constant dense<0.000000e+00> : vector<8x128xf32>
    %181 = tpu.matmul %180, %177, %cst_178 {dimension_numbers = #tpu.dot_dimension_numbers<[1], [0], [0], [1], [0, 0, 1, 1], [], []>} : vector<8x72xf32>, vector<72x128xf32>, vector<8x128xf32> -> vector<8x128xf32>
    %182 = arith.addf %174, %179 : vector<8x128xf32>
    %183 = arith.addf %175, %181 : vector<8x128xf32>
    %184 = arith.maximumf %182, %183 : vector<8x128xf32>
    %185 = vector.extract_strided_slice %184 {offsets = [0, 0], sizes = [8, 64], strides = [1, 1]} : vector<8x128xf32> to vector<8x64xf32>
    %186 = vector.extract_strided_slice %184 {offsets = [0, 64], sizes = [8, 64], strides = [1, 1]} : vector<8x128xf32> to vector<8x64xf32>
    %187 = arith.maximumf %185, %186 : vector<8x64xf32>
    %188 = vector.broadcast %17 : vector<1x64xf32> to vector<8x64xf32>
    %189 = arith.addf %187, %188 : vector<8x64xf32>
    %cst_179 = arith.constant 0.000000e+00 : f32
    %190 = vector.broadcast %cst_179 : f32 to vector<8x64xf32>
    %191 = arith.maximumf %189, %190 : vector<8x64xf32>
    %c1_180 = arith.constant 1 : index
    %c8_181 = arith.constant 8 : index
    %192 = vector.load %arg10[%c1_180, %c8_181] : memref<10x80xf32, #tpu.memory_space<vmem>>, vector<8x64xf32>
    tpu.vector_store %arg10[%c1_180, %c8_181], %191 {strides = array<i32>} : memref<10x80xf32, #tpu.memory_space<vmem>>, vector<8x64xf32>,
    %c0_182 = arith.constant 0 : index
    %c0_183 = arith.constant 0 : index
    %c0_184 = arith.constant 0 : index
    %193 = vector.load %arg4[%c0_182, %c0_183, %c0_184] : memref<3x80x128xf32, #tpu.memory_space<vmem>>, vector<1x80x128xf32>
    %194 = vector.shape_cast %193 : vector<1x80x128xf32> to vector<80x128xf32>
    %c0_185 = arith.constant 0 : index
    %c0_186 = arith.constant 0 : index
    %195 = tpu.strided_load %arg10[%c0_185, %c0_186] {strides = array<i32: 2, 1>} : memref<10x80xf32, #tpu.memory_space<vmem>>, vector<4x80xf32>
    %cst_187 = arith.constant dense<0.000000e+00> : vector<4x128xf32>
    %196 = tpu.matmul %195, %194, %cst_187 {dimension_numbers = #tpu.dot_dimension_numbers<[1], [0], [0], [1], [0, 0, 1, 1], [], []>} : vector<4x80xf32>, vector<80x128xf32>, vector<4x128xf32> -> vector<4x128xf32>
    %c1_188 = arith.constant 1 : index
    %c0_189 = arith.constant 0 : index
    %197 = tpu.strided_load %arg10[%c1_188, %c0_189] {strides = array<i32: 2, 1>} : memref<10x80xf32, #tpu.memory_space<vmem>>, vector<4x80xf32>
    %cst_190 = arith.constant dense<0.000000e+00> : vector<4x128xf32>
    %198 = tpu.matmul %197, %194, %cst_190 {dimension_numbers = #tpu.dot_dimension_numbers<[1], [0], [0], [1], [0, 0, 1, 1], [], []>} : vector<4x80xf32>, vector<80x128xf32>, vector<4x128xf32> -> vector<4x128xf32>
    %c1_191 = arith.constant 1 : index
    %c0_192 = arith.constant 0 : index
    %c0_193 = arith.constant 0 : index
    %199 = vector.load %arg4[%c1_191, %c0_192, %c0_193] : memref<3x80x128xf32, #tpu.memory_space<vmem>>, vector<1x80x128xf32>
    %200 = vector.shape_cast %199 : vector<1x80x128xf32> to vector<80x128xf32>
    %c1_194 = arith.constant 1 : index
    %c0_195 = arith.constant 0 : index
    %201 = tpu.strided_load %arg10[%c1_194, %c0_195] {strides = array<i32: 2, 1>} : memref<10x80xf32, #tpu.memory_space<vmem>>, vector<4x80xf32>
    %cst_196 = arith.constant dense<0.000000e+00> : vector<4x128xf32>
    %202 = tpu.matmul %201, %200, %cst_196 {dimension_numbers = #tpu.dot_dimension_numbers<[1], [0], [0], [1], [0, 0, 1, 1], [], []>} : vector<4x80xf32>, vector<80x128xf32>, vector<4x128xf32> -> vector<4x128xf32>
    %c2_197 = arith.constant 2 : index
    %c0_198 = arith.constant 0 : index
    %203 = tpu.strided_load %arg10[%c2_197, %c0_198] {strides = array<i32: 2, 1>} : memref<10x80xf32, #tpu.memory_space<vmem>>, vector<4x80xf32>
    %cst_199 = arith.constant dense<0.000000e+00> : vector<4x128xf32>
    %204 = tpu.matmul %203, %200, %cst_199 {dimension_numbers = #tpu.dot_dimension_numbers<[1], [0], [0], [1], [0, 0, 1, 1], [], []>} : vector<4x80xf32>, vector<80x128xf32>, vector<4x128xf32> -> vector<4x128xf32>
    %205 = arith.addf %196, %202 : vector<4x128xf32>
    %206 = arith.addf %198, %204 : vector<4x128xf32>
    %c2_200 = arith.constant 2 : index
    %c0_201 = arith.constant 0 : index
    %c0_202 = arith.constant 0 : index
    %207 = vector.load %arg4[%c2_200, %c0_201, %c0_202] : memref<3x80x128xf32, #tpu.memory_space<vmem>>, vector<1x80x128xf32>
    %208 = vector.shape_cast %207 : vector<1x80x128xf32> to vector<80x128xf32>
    %c2_203 = arith.constant 2 : index
    %c0_204 = arith.constant 0 : index
    %209 = tpu.strided_load %arg10[%c2_203, %c0_204] {strides = array<i32: 2, 1>} : memref<10x80xf32, #tpu.memory_space<vmem>>, vector<4x80xf32>
    %cst_205 = arith.constant dense<0.000000e+00> : vector<4x128xf32>
    %210 = tpu.matmul %209, %208, %cst_205 {dimension_numbers = #tpu.dot_dimension_numbers<[1], [0], [0], [1], [0, 0, 1, 1], [], []>} : vector<4x80xf32>, vector<80x128xf32>, vector<4x128xf32> -> vector<4x128xf32>
    %c3_206 = arith.constant 3 : index
    %c0_207 = arith.constant 0 : index
    %211 = tpu.strided_load %arg10[%c3_206, %c0_207] {strides = array<i32: 2, 1>} : memref<10x80xf32, #tpu.memory_space<vmem>>, vector<4x80xf32>
    %cst_208 = arith.constant dense<0.000000e+00> : vector<4x128xf32>
    %212 = tpu.matmul %211, %208, %cst_208 {dimension_numbers = #tpu.dot_dimension_numbers<[1], [0], [0], [1], [0, 0, 1, 1], [], []>} : vector<4x80xf32>, vector<80x128xf32>, vector<4x128xf32> -> vector<4x128xf32>
    %213 = arith.addf %205, %210 : vector<4x128xf32>
    %214 = arith.addf %206, %212 : vector<4x128xf32>
    %215 = arith.maximumf %213, %214 : vector<4x128xf32>
    %216 = vector.extract_strided_slice %215 {offsets = [0, 0], sizes = [4, 64], strides = [1, 1]} : vector<4x128xf32> to vector<4x64xf32>
    %217 = vector.extract_strided_slice %215 {offsets = [0, 64], sizes = [4, 64], strides = [1, 1]} : vector<4x128xf32> to vector<4x64xf32>
    %218 = arith.maximumf %216, %217 : vector<4x64xf32>
    %219 = vector.broadcast %18 : vector<1x64xf32> to vector<4x64xf32>
    %220 = arith.addf %218, %219 : vector<4x64xf32>
    %cst_209 = arith.constant 0.000000e+00 : f32
    %221 = vector.broadcast %cst_209 : f32 to vector<4x64xf32>
    %222 = arith.maximumf %220, %221 : vector<4x64xf32>
    %223 = arith.mulf %222, %16 : vector<4x64xf32>
    %224 = vector.shape_cast %223 : vector<4x64xf32> to vector<1x4x64xf32>
    %cst_210 = arith.constant dense<0.000000e+00> : vector<1xf32>
    %225 = vector.multi_reduction <add>, %224, %cst_210 [1, 2] : vector<1x4x64xf32> to vector<1xf32>
    %226 = vector.shape_cast %225 : vector<1xf32> to vector<1x1x1xf32>
    %227 = vector.extract %226[0, 0, 0] : f32 from vector<1x1x1xf32>
    %228 = vector.broadcast %227 : f32 to vector<1x1xf32>
    %c3_211 = arith.constant 3 : index
    %c0_212 = arith.constant 0 : index
    %c0_213 = arith.constant 0 : index
    %229 = vector.load %arg1[%c3_211, %c0_212, %c0_213] : memref<8x16x64xf32, #tpu.memory_space<vmem>>, vector<1x16x64xf32>
    %230 = vector.shape_cast %229 : vector<1x16x64xf32> to vector<16x64xf32>
    %c1_214 = arith.constant 1 : index
    %c4_215 = arith.constant 4 : index
    %231 = vector.load %arg9[%c1_214, %c4_215] : memref<18x72xf32, #tpu.memory_space<vmem>>, vector<16x64xf32>
    tpu.vector_store %arg9[%c1_214, %c4_215], %230 {strides = array<i32>} : memref<18x72xf32, #tpu.memory_space<vmem>>, vector<16x64xf32>,
    %c0_216 = arith.constant 0 : index
    %c0_217 = arith.constant 0 : index
    %c0_218 = arith.constant 0 : index
    %232 = vector.load %arg2[%c0_216, %c0_217, %c0_218] : memref<3x72x128xf32, #tpu.memory_space<vmem>>, vector<1x72x128xf32>
    %233 = vector.shape_cast %232 : vector<1x72x128xf32> to vector<72x128xf32>
    %c0_219 = arith.constant 0 : index
    %c0_220 = arith.constant 0 : index
    %234 = tpu.strided_load %arg9[%c0_219, %c0_220] {strides = array<i32: 2, 1>} : memref<18x72xf32, #tpu.memory_space<vmem>>, vector<8x72xf32>
    %cst_221 = arith.constant dense<0.000000e+00> : vector<8x128xf32>
    %235 = tpu.matmul %234, %233, %cst_221 {dimension_numbers = #tpu.dot_dimension_numbers<[1], [0], [0], [1], [0, 0, 1, 1], [], []>} : vector<8x72xf32>, vector<72x128xf32>, vector<8x128xf32> -> vector<8x128xf32>
    %c1_222 = arith.constant 1 : index
    %c0_223 = arith.constant 0 : index
    %236 = tpu.strided_load %arg9[%c1_222, %c0_223] {strides = array<i32: 2, 1>} : memref<18x72xf32, #tpu.memory_space<vmem>>, vector<8x72xf32>
    %cst_224 = arith.constant dense<0.000000e+00> : vector<8x128xf32>
    %237 = tpu.matmul %236, %233, %cst_224 {dimension_numbers = #tpu.dot_dimension_numbers<[1], [0], [0], [1], [0, 0, 1, 1], [], []>} : vector<8x72xf32>, vector<72x128xf32>, vector<8x128xf32> -> vector<8x128xf32>
    %c1_225 = arith.constant 1 : index
    %c0_226 = arith.constant 0 : index
    %c0_227 = arith.constant 0 : index
    %238 = vector.load %arg2[%c1_225, %c0_226, %c0_227] : memref<3x72x128xf32, #tpu.memory_space<vmem>>, vector<1x72x128xf32>
    %239 = vector.shape_cast %238 : vector<1x72x128xf32> to vector<72x128xf32>
    %c1_228 = arith.constant 1 : index
    %c0_229 = arith.constant 0 : index
    %240 = tpu.strided_load %arg9[%c1_228, %c0_229] {strides = array<i32: 2, 1>} : memref<18x72xf32, #tpu.memory_space<vmem>>, vector<8x72xf32>
    %cst_230 = arith.constant dense<0.000000e+00> : vector<8x128xf32>
    %241 = tpu.matmul %240, %239, %cst_230 {dimension_numbers = #tpu.dot_dimension_numbers<[1], [0], [0], [1], [0, 0, 1, 1], [], []>} : vector<8x72xf32>, vector<72x128xf32>, vector<8x128xf32> -> vector<8x128xf32>
    %c2_231 = arith.constant 2 : index
    %c0_232 = arith.constant 0 : index
    %242 = tpu.strided_load %arg9[%c2_231, %c0_232] {strides = array<i32: 2, 1>} : memref<18x72xf32, #tpu.memory_space<vmem>>, vector<8x72xf32>
    %cst_233 = arith.constant dense<0.000000e+00> : vector<8x128xf32>
    %243 = tpu.matmul %242, %239, %cst_233 {dimension_numbers = #tpu.dot_dimension_numbers<[1], [0], [0], [1], [0, 0, 1, 1], [], []>} : vector<8x72xf32>, vector<72x128xf32>, vector<8x128xf32> -> vector<8x128xf32>
    %244 = arith.addf %235, %241 : vector<8x128xf32>
    %245 = arith.addf %237, %243 : vector<8x128xf32>
    %c2_234 = arith.constant 2 : index
    %c0_235 = arith.constant 0 : index
    %c0_236 = arith.constant 0 : index
    %246 = vector.load %arg2[%c2_234, %c0_235, %c0_236] : memref<3x72x128xf32, #tpu.memory_space<vmem>>, vector<1x72x128xf32>
    %247 = vector.shape_cast %246 : vector<1x72x128xf32> to vector<72x128xf32>
    %c2_237 = arith.constant 2 : index
    %c0_238 = arith.constant 0 : index
    %248 = tpu.strided_load %arg9[%c2_237, %c0_238] {strides = array<i32: 2, 1>} : memref<18x72xf32, #tpu.memory_space<vmem>>, vector<8x72xf32>
    %cst_239 = arith.constant dense<0.000000e+00> : vector<8x128xf32>
    %249 = tpu.matmul %248, %247, %cst_239 {dimension_numbers = #tpu.dot_dimension_numbers<[1], [0], [0], [1], [0, 0, 1, 1], [], []>} : vector<8x72xf32>, vector<72x128xf32>, vector<8x128xf32> -> vector<8x128xf32>
    %c3_240 = arith.constant 3 : index
    %c0_241 = arith.constant 0 : index
    %250 = tpu.strided_load %arg9[%c3_240, %c0_241] {strides = array<i32: 2, 1>} : memref<18x72xf32, #tpu.memory_space<vmem>>, vector<8x72xf32>
    %cst_242 = arith.constant dense<0.000000e+00> : vector<8x128xf32>
    %251 = tpu.matmul %250, %247, %cst_242 {dimension_numbers = #tpu.dot_dimension_numbers<[1], [0], [0], [1], [0, 0, 1, 1], [], []>} : vector<8x72xf32>, vector<72x128xf32>, vector<8x128xf32> -> vector<8x128xf32>
    %252 = arith.addf %244, %249 : vector<8x128xf32>
    %253 = arith.addf %245, %251 : vector<8x128xf32>
    %254 = arith.maximumf %252, %253 : vector<8x128xf32>
    %255 = vector.extract_strided_slice %254 {offsets = [0, 0], sizes = [8, 64], strides = [1, 1]} : vector<8x128xf32> to vector<8x64xf32>
    %256 = vector.extract_strided_slice %254 {offsets = [0, 64], sizes = [8, 64], strides = [1, 1]} : vector<8x128xf32> to vector<8x64xf32>
    %257 = arith.maximumf %255, %256 : vector<8x64xf32>
    %258 = vector.broadcast %17 : vector<1x64xf32> to vector<8x64xf32>
    %259 = arith.addf %257, %258 : vector<8x64xf32>
    %cst_243 = arith.constant 0.000000e+00 : f32
    %260 = vector.broadcast %cst_243 : f32 to vector<8x64xf32>
    %261 = arith.maximumf %259, %260 : vector<8x64xf32>
    %c1_244 = arith.constant 1 : index
    %c8_245 = arith.constant 8 : index
    %262 = vector.load %arg10[%c1_244, %c8_245] : memref<10x80xf32, #tpu.memory_space<vmem>>, vector<8x64xf32>
    tpu.vector_store %arg10[%c1_244, %c8_245], %261 {strides = array<i32>} : memref<10x80xf32, #tpu.memory_space<vmem>>, vector<8x64xf32>,
    %c0_246 = arith.constant 0 : index
    %c0_247 = arith.constant 0 : index
    %c0_248 = arith.constant 0 : index
    %263 = vector.load %arg4[%c0_246, %c0_247, %c0_248] : memref<3x80x128xf32, #tpu.memory_space<vmem>>, vector<1x80x128xf32>
    %264 = vector.shape_cast %263 : vector<1x80x128xf32> to vector<80x128xf32>
    %c0_249 = arith.constant 0 : index
    %c0_250 = arith.constant 0 : index
    %265 = tpu.strided_load %arg10[%c0_249, %c0_250] {strides = array<i32: 2, 1>} : memref<10x80xf32, #tpu.memory_space<vmem>>, vector<4x80xf32>
    %cst_251 = arith.constant dense<0.000000e+00> : vector<4x128xf32>
    %266 = tpu.matmul %265, %264, %cst_251 {dimension_numbers = #tpu.dot_dimension_numbers<[1], [0], [0], [1], [0, 0, 1, 1], [], []>} : vector<4x80xf32>, vector<80x128xf32>, vector<4x128xf32> -> vector<4x128xf32>
    %c1_252 = arith.constant 1 : index
    %c0_253 = arith.constant 0 : index
    %267 = tpu.strided_load %arg10[%c1_252, %c0_253] {strides = array<i32: 2, 1>} : memref<10x80xf32, #tpu.memory_space<vmem>>, vector<4x80xf32>
    %cst_254 = arith.constant dense<0.000000e+00> : vector<4x128xf32>
    %268 = tpu.matmul %267, %264, %cst_254 {dimension_numbers = #tpu.dot_dimension_numbers<[1], [0], [0], [1], [0, 0, 1, 1], [], []>} : vector<4x80xf32>, vector<80x128xf32>, vector<4x128xf32> -> vector<4x128xf32>
    %c1_255 = arith.constant 1 : index
    %c0_256 = arith.constant 0 : index
    %c0_257 = arith.constant 0 : index
    %269 = vector.load %arg4[%c1_255, %c0_256, %c0_257] : memref<3x80x128xf32, #tpu.memory_space<vmem>>, vector<1x80x128xf32>
    %270 = vector.shape_cast %269 : vector<1x80x128xf32> to vector<80x128xf32>
    %c1_258 = arith.constant 1 : index
    %c0_259 = arith.constant 0 : index
    %271 = tpu.strided_load %arg10[%c1_258, %c0_259] {strides = array<i32: 2, 1>} : memref<10x80xf32, #tpu.memory_space<vmem>>, vector<4x80xf32>
    %cst_260 = arith.constant dense<0.000000e+00> : vector<4x128xf32>
    %272 = tpu.matmul %271, %270, %cst_260 {dimension_numbers = #tpu.dot_dimension_numbers<[1], [0], [0], [1], [0, 0, 1, 1], [], []>} : vector<4x80xf32>, vector<80x128xf32>, vector<4x128xf32> -> vector<4x128xf32>
    %c2_261 = arith.constant 2 : index
    %c0_262 = arith.constant 0 : index
    %273 = tpu.strided_load %arg10[%c2_261, %c0_262] {strides = array<i32: 2, 1>} : memref<10x80xf32, #tpu.memory_space<vmem>>, vector<4x80xf32>
    %cst_263 = arith.constant dense<0.000000e+00> : vector<4x128xf32>
    %274 = tpu.matmul %273, %270, %cst_263 {dimension_numbers = #tpu.dot_dimension_numbers<[1], [0], [0], [1], [0, 0, 1, 1], [], []>} : vector<4x80xf32>, vector<80x128xf32>, vector<4x128xf32> -> vector<4x128xf32>
    %275 = arith.addf %266, %272 : vector<4x128xf32>
    %276 = arith.addf %268, %274 : vector<4x128xf32>
    %c2_264 = arith.constant 2 : index
    %c0_265 = arith.constant 0 : index
    %c0_266 = arith.constant 0 : index
    %277 = vector.load %arg4[%c2_264, %c0_265, %c0_266] : memref<3x80x128xf32, #tpu.memory_space<vmem>>, vector<1x80x128xf32>
    %278 = vector.shape_cast %277 : vector<1x80x128xf32> to vector<80x128xf32>
    %c2_267 = arith.constant 2 : index
    %c0_268 = arith.constant 0 : index
    %279 = tpu.strided_load %arg10[%c2_267, %c0_268] {strides = array<i32: 2, 1>} : memref<10x80xf32, #tpu.memory_space<vmem>>, vector<4x80xf32>
    %cst_269 = arith.constant dense<0.000000e+00> : vector<4x128xf32>
    %280 = tpu.matmul %279, %278, %cst_269 {dimension_numbers = #tpu.dot_dimension_numbers<[1], [0], [0], [1], [0, 0, 1, 1], [], []>} : vector<4x80xf32>, vector<80x128xf32>, vector<4x128xf32> -> vector<4x128xf32>
    %c3_270 = arith.constant 3 : index
    %c0_271 = arith.constant 0 : index
    %281 = tpu.strided_load %arg10[%c3_270, %c0_271] {strides = array<i32: 2, 1>} : memref<10x80xf32, #tpu.memory_space<vmem>>, vector<4x80xf32>
    %cst_272 = arith.constant dense<0.000000e+00> : vector<4x128xf32>
    %282 = tpu.matmul %281, %278, %cst_272 {dimension_numbers = #tpu.dot_dimension_numbers<[1], [0], [0], [1], [0, 0, 1, 1], [], []>} : vector<4x80xf32>, vector<80x128xf32>, vector<4x128xf32> -> vector<4x128xf32>
    %283 = arith.addf %275, %280 : vector<4x128xf32>
    %284 = arith.addf %276, %282 : vector<4x128xf32>
    %285 = arith.maximumf %283, %284 : vector<4x128xf32>
    %286 = vector.extract_strided_slice %285 {offsets = [0, 0], sizes = [4, 64], strides = [1, 1]} : vector<4x128xf32> to vector<4x64xf32>
    %287 = vector.extract_strided_slice %285 {offsets = [0, 64], sizes = [4, 64], strides = [1, 1]} : vector<4x128xf32> to vector<4x64xf32>
    %288 = arith.maximumf %286, %287 : vector<4x64xf32>
    %289 = vector.broadcast %18 : vector<1x64xf32> to vector<4x64xf32>
    %290 = arith.addf %288, %289 : vector<4x64xf32>
    %cst_273 = arith.constant 0.000000e+00 : f32
    %291 = vector.broadcast %cst_273 : f32 to vector<4x64xf32>
    %292 = arith.maximumf %290, %291 : vector<4x64xf32>
    %293 = arith.mulf %292, %16 : vector<4x64xf32>
    %294 = vector.shape_cast %293 : vector<4x64xf32> to vector<1x4x64xf32>
    %cst_274 = arith.constant dense<0.000000e+00> : vector<1xf32>
    %295 = vector.multi_reduction <add>, %294, %cst_274 [1, 2] : vector<1x4x64xf32> to vector<1xf32>
    %296 = vector.shape_cast %295 : vector<1xf32> to vector<1x1x1xf32>
    %297 = vector.extract %296[0, 0, 0] : f32 from vector<1x1x1xf32>
    %298 = vector.broadcast %297 : f32 to vector<1x1xf32>
    %c4_275 = arith.constant 4 : index
    %c0_276 = arith.constant 0 : index
    %c0_277 = arith.constant 0 : index
    %299 = vector.load %arg1[%c4_275, %c0_276, %c0_277] : memref<8x16x64xf32, #tpu.memory_space<vmem>>, vector<1x16x64xf32>
    %300 = vector.shape_cast %299 : vector<1x16x64xf32> to vector<16x64xf32>
    %c1_278 = arith.constant 1 : index
    %c4_279 = arith.constant 4 : index
    %301 = vector.load %arg9[%c1_278, %c4_279] : memref<18x72xf32, #tpu.memory_space<vmem>>, vector<16x64xf32>
    tpu.vector_store %arg9[%c1_278, %c4_279], %300 {strides = array<i32>} : memref<18x72xf32, #tpu.memory_space<vmem>>, vector<16x64xf32>,
    %c0_280 = arith.constant 0 : index
    %c0_281 = arith.constant 0 : index
    %c0_282 = arith.constant 0 : index
    %302 = vector.load %arg2[%c0_280, %c0_281, %c0_282] : memref<3x72x128xf32, #tpu.memory_space<vmem>>, vector<1x72x128xf32>
    %303 = vector.shape_cast %302 : vector<1x72x128xf32> to vector<72x128xf32>
    %c0_283 = arith.constant 0 : index
    %c0_284 = arith.constant 0 : index
    %304 = tpu.strided_load %arg9[%c0_283, %c0_284] {strides = array<i32: 2, 1>} : memref<18x72xf32, #tpu.memory_space<vmem>>, vector<8x72xf32>
    %cst_285 = arith.constant dense<0.000000e+00> : vector<8x128xf32>
    %305 = tpu.matmul %304, %303, %cst_285 {dimension_numbers = #tpu.dot_dimension_numbers<[1], [0], [0], [1], [0, 0, 1, 1], [], []>} : vector<8x72xf32>, vector<72x128xf32>, vector<8x128xf32> -> vector<8x128xf32>
    %c1_286 = arith.constant 1 : index
    %c0_287 = arith.constant 0 : index
    %306 = tpu.strided_load %arg9[%c1_286, %c0_287] {strides = array<i32: 2, 1>} : memref<18x72xf32, #tpu.memory_space<vmem>>, vector<8x72xf32>
    %cst_288 = arith.constant dense<0.000000e+00> : vector<8x128xf32>
    %307 = tpu.matmul %306, %303, %cst_288 {dimension_numbers = #tpu.dot_dimension_numbers<[1], [0], [0], [1], [0, 0, 1, 1], [], []>} : vector<8x72xf32>, vector<72x128xf32>, vector<8x128xf32> -> vector<8x128xf32>
    %c1_289 = arith.constant 1 : index
    %c0_290 = arith.constant 0 : index
    %c0_291 = arith.constant 0 : index
    %308 = vector.load %arg2[%c1_289, %c0_290, %c0_291] : memref<3x72x128xf32, #tpu.memory_space<vmem>>, vector<1x72x128xf32>
    %309 = vector.shape_cast %308 : vector<1x72x128xf32> to vector<72x128xf32>
    %c1_292 = arith.constant 1 : index
    %c0_293 = arith.constant 0 : index
    %310 = tpu.strided_load %arg9[%c1_292, %c0_293] {strides = array<i32: 2, 1>} : memref<18x72xf32, #tpu.memory_space<vmem>>, vector<8x72xf32>
    %cst_294 = arith.constant dense<0.000000e+00> : vector<8x128xf32>
    %311 = tpu.matmul %310, %309, %cst_294 {dimension_numbers = #tpu.dot_dimension_numbers<[1], [0], [0], [1], [0, 0, 1, 1], [], []>} : vector<8x72xf32>, vector<72x128xf32>, vector<8x128xf32> -> vector<8x128xf32>
    %c2_295 = arith.constant 2 : index
    %c0_296 = arith.constant 0 : index
    %312 = tpu.strided_load %arg9[%c2_295, %c0_296] {strides = array<i32: 2, 1>} : memref<18x72xf32, #tpu.memory_space<vmem>>, vector<8x72xf32>
    %cst_297 = arith.constant dense<0.000000e+00> : vector<8x128xf32>
    %313 = tpu.matmul %312, %309, %cst_297 {dimension_numbers = #tpu.dot_dimension_numbers<[1], [0], [0], [1], [0, 0, 1, 1], [], []>} : vector<8x72xf32>, vector<72x128xf32>, vector<8x128xf32> -> vector<8x128xf32>
    %314 = arith.addf %305, %311 : vector<8x128xf32>
    %315 = arith.addf %307, %313 : vector<8x128xf32>
    %c2_298 = arith.constant 2 : index
    %c0_299 = arith.constant 0 : index
    %c0_300 = arith.constant 0 : index
    %316 = vector.load %arg2[%c2_298, %c0_299, %c0_300] : memref<3x72x128xf32, #tpu.memory_space<vmem>>, vector<1x72x128xf32>
    %317 = vector.shape_cast %316 : vector<1x72x128xf32> to vector<72x128xf32>
    %c2_301 = arith.constant 2 : index
    %c0_302 = arith.constant 0 : index
    %318 = tpu.strided_load %arg9[%c2_301, %c0_302] {strides = array<i32: 2, 1>} : memref<18x72xf32, #tpu.memory_space<vmem>>, vector<8x72xf32>
    %cst_303 = arith.constant dense<0.000000e+00> : vector<8x128xf32>
    %319 = tpu.matmul %318, %317, %cst_303 {dimension_numbers = #tpu.dot_dimension_numbers<[1], [0], [0], [1], [0, 0, 1, 1], [], []>} : vector<8x72xf32>, vector<72x128xf32>, vector<8x128xf32> -> vector<8x128xf32>
    %c3_304 = arith.constant 3 : index
    %c0_305 = arith.constant 0 : index
    %320 = tpu.strided_load %arg9[%c3_304, %c0_305] {strides = array<i32: 2, 1>} : memref<18x72xf32, #tpu.memory_space<vmem>>, vector<8x72xf32>
    %cst_306 = arith.constant dense<0.000000e+00> : vector<8x128xf32>
    %321 = tpu.matmul %320, %317, %cst_306 {dimension_numbers = #tpu.dot_dimension_numbers<[1], [0], [0], [1], [0, 0, 1, 1], [], []>} : vector<8x72xf32>, vector<72x128xf32>, vector<8x128xf32> -> vector<8x128xf32>
    %322 = arith.addf %314, %319 : vector<8x128xf32>
    %323 = arith.addf %315, %321 : vector<8x128xf32>
    %324 = arith.maximumf %322, %323 : vector<8x128xf32>
    %325 = vector.extract_strided_slice %324 {offsets = [0, 0], sizes = [8, 64], strides = [1, 1]} : vector<8x128xf32> to vector<8x64xf32>
    %326 = vector.extract_strided_slice %324 {offsets = [0, 64], sizes = [8, 64], strides = [1, 1]} : vector<8x128xf32> to vector<8x64xf32>
    %327 = arith.maximumf %325, %326 : vector<8x64xf32>
    %328 = vector.broadcast %17 : vector<1x64xf32> to vector<8x64xf32>
    %329 = arith.addf %327, %328 : vector<8x64xf32>
    %cst_307 = arith.constant 0.000000e+00 : f32
    %330 = vector.broadcast %cst_307 : f32 to vector<8x64xf32>
    %331 = arith.maximumf %329, %330 : vector<8x64xf32>
    %c1_308 = arith.constant 1 : index
    %c8_309 = arith.constant 8 : index
    %332 = vector.load %arg10[%c1_308, %c8_309] : memref<10x80xf32, #tpu.memory_space<vmem>>, vector<8x64xf32>
    tpu.vector_store %arg10[%c1_308, %c8_309], %331 {strides = array<i32>} : memref<10x80xf32, #tpu.memory_space<vmem>>, vector<8x64xf32>,
    %c0_310 = arith.constant 0 : index
    %c0_311 = arith.constant 0 : index
    %c0_312 = arith.constant 0 : index
    %333 = vector.load %arg4[%c0_310, %c0_311, %c0_312] : memref<3x80x128xf32, #tpu.memory_space<vmem>>, vector<1x80x128xf32>
    %334 = vector.shape_cast %333 : vector<1x80x128xf32> to vector<80x128xf32>
    %c0_313 = arith.constant 0 : index
    %c0_314 = arith.constant 0 : index
    %335 = tpu.strided_load %arg10[%c0_313, %c0_314] {strides = array<i32: 2, 1>} : memref<10x80xf32, #tpu.memory_space<vmem>>, vector<4x80xf32>
    %cst_315 = arith.constant dense<0.000000e+00> : vector<4x128xf32>
    %336 = tpu.matmul %335, %334, %cst_315 {dimension_numbers = #tpu.dot_dimension_numbers<[1], [0], [0], [1], [0, 0, 1, 1], [], []>} : vector<4x80xf32>, vector<80x128xf32>, vector<4x128xf32> -> vector<4x128xf32>
    %c1_316 = arith.constant 1 : index
    %c0_317 = arith.constant 0 : index
    %337 = tpu.strided_load %arg10[%c1_316, %c0_317] {strides = array<i32: 2, 1>} : memref<10x80xf32, #tpu.memory_space<vmem>>, vector<4x80xf32>
    %cst_318 = arith.constant dense<0.000000e+00> : vector<4x128xf32>
    %338 = tpu.matmul %337, %334, %cst_318 {dimension_numbers = #tpu.dot_dimension_numbers<[1], [0], [0], [1], [0, 0, 1, 1], [], []>} : vector<4x80xf32>, vector<80x128xf32>, vector<4x128xf32> -> vector<4x128xf32>
    %c1_319 = arith.constant 1 : index
    %c0_320 = arith.constant 0 : index
    %c0_321 = arith.constant 0 : index
    %339 = vector.load %arg4[%c1_319, %c0_320, %c0_321] : memref<3x80x128xf32, #tpu.memory_space<vmem>>, vector<1x80x128xf32>
    %340 = vector.shape_cast %339 : vector<1x80x128xf32> to vector<80x128xf32>
    %c1_322 = arith.constant 1 : index
    %c0_323 = arith.constant 0 : index
    %341 = tpu.strided_load %arg10[%c1_322, %c0_323] {strides = array<i32: 2, 1>} : memref<10x80xf32, #tpu.memory_space<vmem>>, vector<4x80xf32>
    %cst_324 = arith.constant dense<0.000000e+00> : vector<4x128xf32>
    %342 = tpu.matmul %341, %340, %cst_324 {dimension_numbers = #tpu.dot_dimension_numbers<[1], [0], [0], [1], [0, 0, 1, 1], [], []>} : vector<4x80xf32>, vector<80x128xf32>, vector<4x128xf32> -> vector<4x128xf32>
    %c2_325 = arith.constant 2 : index
    %c0_326 = arith.constant 0 : index
    %343 = tpu.strided_load %arg10[%c2_325, %c0_326] {strides = array<i32: 2, 1>} : memref<10x80xf32, #tpu.memory_space<vmem>>, vector<4x80xf32>
    %cst_327 = arith.constant dense<0.000000e+00> : vector<4x128xf32>
    %344 = tpu.matmul %343, %340, %cst_327 {dimension_numbers = #tpu.dot_dimension_numbers<[1], [0], [0], [1], [0, 0, 1, 1], [], []>} : vector<4x80xf32>, vector<80x128xf32>, vector<4x128xf32> -> vector<4x128xf32>
    %345 = arith.addf %336, %342 : vector<4x128xf32>
    %346 = arith.addf %338, %344 : vector<4x128xf32>
    %c2_328 = arith.constant 2 : index
    %c0_329 = arith.constant 0 : index
    %c0_330 = arith.constant 0 : index
    %347 = vector.load %arg4[%c2_328, %c0_329, %c0_330] : memref<3x80x128xf32, #tpu.memory_space<vmem>>, vector<1x80x128xf32>
    %348 = vector.shape_cast %347 : vector<1x80x128xf32> to vector<80x128xf32>
    %c2_331 = arith.constant 2 : index
    %c0_332 = arith.constant 0 : index
    %349 = tpu.strided_load %arg10[%c2_331, %c0_332] {strides = array<i32: 2, 1>} : memref<10x80xf32, #tpu.memory_space<vmem>>, vector<4x80xf32>
    %cst_333 = arith.constant dense<0.000000e+00> : vector<4x128xf32>
    %350 = tpu.matmul %349, %348, %cst_333 {dimension_numbers = #tpu.dot_dimension_numbers<[1], [0], [0], [1], [0, 0, 1, 1], [], []>} : vector<4x80xf32>, vector<80x128xf32>, vector<4x128xf32> -> vector<4x128xf32>
    %c3_334 = arith.constant 3 : index
    %c0_335 = arith.constant 0 : index
    %351 = tpu.strided_load %arg10[%c3_334, %c0_335] {strides = array<i32: 2, 1>} : memref<10x80xf32, #tpu.memory_space<vmem>>, vector<4x80xf32>
    %cst_336 = arith.constant dense<0.000000e+00> : vector<4x128xf32>
    %352 = tpu.matmul %351, %348, %cst_336 {dimension_numbers = #tpu.dot_dimension_numbers<[1], [0], [0], [1], [0, 0, 1, 1], [], []>} : vector<4x80xf32>, vector<80x128xf32>, vector<4x128xf32> -> vector<4x128xf32>
    %353 = arith.addf %345, %350 : vector<4x128xf32>
    %354 = arith.addf %346, %352 : vector<4x128xf32>
    %355 = arith.maximumf %353, %354 : vector<4x128xf32>
    %356 = vector.extract_strided_slice %355 {offsets = [0, 0], sizes = [4, 64], strides = [1, 1]} : vector<4x128xf32> to vector<4x64xf32>
    %357 = vector.extract_strided_slice %355 {offsets = [0, 64], sizes = [4, 64], strides = [1, 1]} : vector<4x128xf32> to vector<4x64xf32>
    %358 = arith.maximumf %356, %357 : vector<4x64xf32>
    %359 = vector.broadcast %18 : vector<1x64xf32> to vector<4x64xf32>
    %360 = arith.addf %358, %359 : vector<4x64xf32>
    %cst_337 = arith.constant 0.000000e+00 : f32
    %361 = vector.broadcast %cst_337 : f32 to vector<4x64xf32>
    %362 = arith.maximumf %360, %361 : vector<4x64xf32>
    %363 = arith.mulf %362, %16 : vector<4x64xf32>
    %364 = vector.shape_cast %363 : vector<4x64xf32> to vector<1x4x64xf32>
    %cst_338 = arith.constant dense<0.000000e+00> : vector<1xf32>
    %365 = vector.multi_reduction <add>, %364, %cst_338 [1, 2] : vector<1x4x64xf32> to vector<1xf32>
    %366 = vector.shape_cast %365 : vector<1xf32> to vector<1x1x1xf32>
    %367 = vector.extract %366[0, 0, 0] : f32 from vector<1x1x1xf32>
    %368 = vector.broadcast %367 : f32 to vector<1x1xf32>
    %c5 = arith.constant 5 : index
    %c0_339 = arith.constant 0 : index
    %c0_340 = arith.constant 0 : index
    %369 = vector.load %arg1[%c5, %c0_339, %c0_340] : memref<8x16x64xf32, #tpu.memory_space<vmem>>, vector<1x16x64xf32>
    %370 = vector.shape_cast %369 : vector<1x16x64xf32> to vector<16x64xf32>
    %c1_341 = arith.constant 1 : index
    %c4_342 = arith.constant 4 : index
    %371 = vector.load %arg9[%c1_341, %c4_342] : memref<18x72xf32, #tpu.memory_space<vmem>>, vector<16x64xf32>
    tpu.vector_store %arg9[%c1_341, %c4_342], %370 {strides = array<i32>} : memref<18x72xf32, #tpu.memory_space<vmem>>, vector<16x64xf32>,
    %c0_343 = arith.constant 0 : index
    %c0_344 = arith.constant 0 : index
    %c0_345 = arith.constant 0 : index
    %372 = vector.load %arg2[%c0_343, %c0_344, %c0_345] : memref<3x72x128xf32, #tpu.memory_space<vmem>>, vector<1x72x128xf32>
    %373 = vector.shape_cast %372 : vector<1x72x128xf32> to vector<72x128xf32>
    %c0_346 = arith.constant 0 : index
    %c0_347 = arith.constant 0 : index
    %374 = tpu.strided_load %arg9[%c0_346, %c0_347] {strides = array<i32: 2, 1>} : memref<18x72xf32, #tpu.memory_space<vmem>>, vector<8x72xf32>
    %cst_348 = arith.constant dense<0.000000e+00> : vector<8x128xf32>
    %375 = tpu.matmul %374, %373, %cst_348 {dimension_numbers = #tpu.dot_dimension_numbers<[1], [0], [0], [1], [0, 0, 1, 1], [], []>} : vector<8x72xf32>, vector<72x128xf32>, vector<8x128xf32> -> vector<8x128xf32>
    %c1_349 = arith.constant 1 : index
    %c0_350 = arith.constant 0 : index
    %376 = tpu.strided_load %arg9[%c1_349, %c0_350] {strides = array<i32: 2, 1>} : memref<18x72xf32, #tpu.memory_space<vmem>>, vector<8x72xf32>
    %cst_351 = arith.constant dense<0.000000e+00> : vector<8x128xf32>
    %377 = tpu.matmul %376, %373, %cst_351 {dimension_numbers = #tpu.dot_dimension_numbers<[1], [0], [0], [1], [0, 0, 1, 1], [], []>} : vector<8x72xf32>, vector<72x128xf32>, vector<8x128xf32> -> vector<8x128xf32>
    %c1_352 = arith.constant 1 : index
    %c0_353 = arith.constant 0 : index
    %c0_354 = arith.constant 0 : index
    %378 = vector.load %arg2[%c1_352, %c0_353, %c0_354] : memref<3x72x128xf32, #tpu.memory_space<vmem>>, vector<1x72x128xf32>
    %379 = vector.shape_cast %378 : vector<1x72x128xf32> to vector<72x128xf32>
    %c1_355 = arith.constant 1 : index
    %c0_356 = arith.constant 0 : index
    %380 = tpu.strided_load %arg9[%c1_355, %c0_356] {strides = array<i32: 2, 1>} : memref<18x72xf32, #tpu.memory_space<vmem>>, vector<8x72xf32>
    %cst_357 = arith.constant dense<0.000000e+00> : vector<8x128xf32>
    %381 = tpu.matmul %380, %379, %cst_357 {dimension_numbers = #tpu.dot_dimension_numbers<[1], [0], [0], [1], [0, 0, 1, 1], [], []>} : vector<8x72xf32>, vector<72x128xf32>, vector<8x128xf32> -> vector<8x128xf32>
    %c2_358 = arith.constant 2 : index
    %c0_359 = arith.constant 0 : index
    %382 = tpu.strided_load %arg9[%c2_358, %c0_359] {strides = array<i32: 2, 1>} : memref<18x72xf32, #tpu.memory_space<vmem>>, vector<8x72xf32>
    %cst_360 = arith.constant dense<0.000000e+00> : vector<8x128xf32>
    %383 = tpu.matmul %382, %379, %cst_360 {dimension_numbers = #tpu.dot_dimension_numbers<[1], [0], [0], [1], [0, 0, 1, 1], [], []>} : vector<8x72xf32>, vector<72x128xf32>, vector<8x128xf32> -> vector<8x128xf32>
    %384 = arith.addf %375, %381 : vector<8x128xf32>
    %385 = arith.addf %377, %383 : vector<8x128xf32>
    %c2_361 = arith.constant 2 : index
    %c0_362 = arith.constant 0 : index
    %c0_363 = arith.constant 0 : index
    %386 = vector.load %arg2[%c2_361, %c0_362, %c0_363] : memref<3x72x128xf32, #tpu.memory_space<vmem>>, vector<1x72x128xf32>
    %387 = vector.shape_cast %386 : vector<1x72x128xf32> to vector<72x128xf32>
    %c2_364 = arith.constant 2 : index
    %c0_365 = arith.constant 0 : index
    %388 = tpu.strided_load %arg9[%c2_364, %c0_365] {strides = array<i32: 2, 1>} : memref<18x72xf32, #tpu.memory_space<vmem>>, vector<8x72xf32>
    %cst_366 = arith.constant dense<0.000000e+00> : vector<8x128xf32>
    %389 = tpu.matmul %388, %387, %cst_366 {dimension_numbers = #tpu.dot_dimension_numbers<[1], [0], [0], [1], [0, 0, 1, 1], [], []>} : vector<8x72xf32>, vector<72x128xf32>, vector<8x128xf32> -> vector<8x128xf32>
    %c3_367 = arith.constant 3 : index
    %c0_368 = arith.constant 0 : index
    %390 = tpu.strided_load %arg9[%c3_367, %c0_368] {strides = array<i32: 2, 1>} : memref<18x72xf32, #tpu.memory_space<vmem>>, vector<8x72xf32>
    %cst_369 = arith.constant dense<0.000000e+00> : vector<8x128xf32>
    %391 = tpu.matmul %390, %387, %cst_369 {dimension_numbers = #tpu.dot_dimension_numbers<[1], [0], [0], [1], [0, 0, 1, 1], [], []>} : vector<8x72xf32>, vector<72x128xf32>, vector<8x128xf32> -> vector<8x128xf32>
    %392 = arith.addf %384, %389 : vector<8x128xf32>
    %393 = arith.addf %385, %391 : vector<8x128xf32>
    %394 = arith.maximumf %392, %393 : vector<8x128xf32>
    %395 = vector.extract_strided_slice %394 {offsets = [0, 0], sizes = [8, 64], strides = [1, 1]} : vector<8x128xf32> to vector<8x64xf32>
    %396 = vector.extract_strided_slice %394 {offsets = [0, 64], sizes = [8, 64], strides = [1, 1]} : vector<8x128xf32> to vector<8x64xf32>
    %397 = arith.maximumf %395, %396 : vector<8x64xf32>
    %398 = vector.broadcast %17 : vector<1x64xf32> to vector<8x64xf32>
    %399 = arith.addf %397, %398 : vector<8x64xf32>
    %cst_370 = arith.constant 0.000000e+00 : f32
    %400 = vector.broadcast %cst_370 : f32 to vector<8x64xf32>
    %401 = arith.maximumf %399, %400 : vector<8x64xf32>
    %c1_371 = arith.constant 1 : index
    %c8_372 = arith.constant 8 : index
    %402 = vector.load %arg10[%c1_371, %c8_372] : memref<10x80xf32, #tpu.memory_space<vmem>>, vector<8x64xf32>
    tpu.vector_store %arg10[%c1_371, %c8_372], %401 {strides = array<i32>} : memref<10x80xf32, #tpu.memory_space<vmem>>, vector<8x64xf32>,
    %c0_373 = arith.constant 0 : index
    %c0_374 = arith.constant 0 : index
    %c0_375 = arith.constant 0 : index
    %403 = vector.load %arg4[%c0_373, %c0_374, %c0_375] : memref<3x80x128xf32, #tpu.memory_space<vmem>>, vector<1x80x128xf32>
    %404 = vector.shape_cast %403 : vector<1x80x128xf32> to vector<80x128xf32>
    %c0_376 = arith.constant 0 : index
    %c0_377 = arith.constant 0 : index
    %405 = tpu.strided_load %arg10[%c0_376, %c0_377] {strides = array<i32: 2, 1>} : memref<10x80xf32, #tpu.memory_space<vmem>>, vector<4x80xf32>
    %cst_378 = arith.constant dense<0.000000e+00> : vector<4x128xf32>
    %406 = tpu.matmul %405, %404, %cst_378 {dimension_numbers = #tpu.dot_dimension_numbers<[1], [0], [0], [1], [0, 0, 1, 1], [], []>} : vector<4x80xf32>, vector<80x128xf32>, vector<4x128xf32> -> vector<4x128xf32>
    %c1_379 = arith.constant 1 : index
    %c0_380 = arith.constant 0 : index
    %407 = tpu.strided_load %arg10[%c1_379, %c0_380] {strides = array<i32: 2, 1>} : memref<10x80xf32, #tpu.memory_space<vmem>>, vector<4x80xf32>
    %cst_381 = arith.constant dense<0.000000e+00> : vector<4x128xf32>
    %408 = tpu.matmul %407, %404, %cst_381 {dimension_numbers = #tpu.dot_dimension_numbers<[1], [0], [0], [1], [0, 0, 1, 1], [], []>} : vector<4x80xf32>, vector<80x128xf32>, vector<4x128xf32> -> vector<4x128xf32>
    %c1_382 = arith.constant 1 : index
    %c0_383 = arith.constant 0 : index
    %c0_384 = arith.constant 0 : index
    %409 = vector.load %arg4[%c1_382, %c0_383, %c0_384] : memref<3x80x128xf32, #tpu.memory_space<vmem>>, vector<1x80x128xf32>
    %410 = vector.shape_cast %409 : vector<1x80x128xf32> to vector<80x128xf32>
    %c1_385 = arith.constant 1 : index
    %c0_386 = arith.constant 0 : index
    %411 = tpu.strided_load %arg10[%c1_385, %c0_386] {strides = array<i32: 2, 1>} : memref<10x80xf32, #tpu.memory_space<vmem>>, vector<4x80xf32>
    %cst_387 = arith.constant dense<0.000000e+00> : vector<4x128xf32>
    %412 = tpu.matmul %411, %410, %cst_387 {dimension_numbers = #tpu.dot_dimension_numbers<[1], [0], [0], [1], [0, 0, 1, 1], [], []>} : vector<4x80xf32>, vector<80x128xf32>, vector<4x128xf32> -> vector<4x128xf32>
    %c2_388 = arith.constant 2 : index
    %c0_389 = arith.constant 0 : index
    %413 = tpu.strided_load %arg10[%c2_388, %c0_389] {strides = array<i32: 2, 1>} : memref<10x80xf32, #tpu.memory_space<vmem>>, vector<4x80xf32>
    %cst_390 = arith.constant dense<0.000000e+00> : vector<4x128xf32>
    %414 = tpu.matmul %413, %410, %cst_390 {dimension_numbers = #tpu.dot_dimension_numbers<[1], [0], [0], [1], [0, 0, 1, 1], [], []>} : vector<4x80xf32>, vector<80x128xf32>, vector<4x128xf32> -> vector<4x128xf32>
    %415 = arith.addf %406, %412 : vector<4x128xf32>
    %416 = arith.addf %408, %414 : vector<4x128xf32>
    %c2_391 = arith.constant 2 : index
    %c0_392 = arith.constant 0 : index
    %c0_393 = arith.constant 0 : index
    %417 = vector.load %arg4[%c2_391, %c0_392, %c0_393] : memref<3x80x128xf32, #tpu.memory_space<vmem>>, vector<1x80x128xf32>
    %418 = vector.shape_cast %417 : vector<1x80x128xf32> to vector<80x128xf32>
    %c2_394 = arith.constant 2 : index
    %c0_395 = arith.constant 0 : index
    %419 = tpu.strided_load %arg10[%c2_394, %c0_395] {strides = array<i32: 2, 1>} : memref<10x80xf32, #tpu.memory_space<vmem>>, vector<4x80xf32>
    %cst_396 = arith.constant dense<0.000000e+00> : vector<4x128xf32>
    %420 = tpu.matmul %419, %418, %cst_396 {dimension_numbers = #tpu.dot_dimension_numbers<[1], [0], [0], [1], [0, 0, 1, 1], [], []>} : vector<4x80xf32>, vector<80x128xf32>, vector<4x128xf32> -> vector<4x128xf32>
    %c3_397 = arith.constant 3 : index
    %c0_398 = arith.constant 0 : index
    %421 = tpu.strided_load %arg10[%c3_397, %c0_398] {strides = array<i32: 2, 1>} : memref<10x80xf32, #tpu.memory_space<vmem>>, vector<4x80xf32>
    %cst_399 = arith.constant dense<0.000000e+00> : vector<4x128xf32>
    %422 = tpu.matmul %421, %418, %cst_399 {dimension_numbers = #tpu.dot_dimension_numbers<[1], [0], [0], [1], [0, 0, 1, 1], [], []>} : vector<4x80xf32>, vector<80x128xf32>, vector<4x128xf32> -> vector<4x128xf32>
    %423 = arith.addf %415, %420 : vector<4x128xf32>
    %424 = arith.addf %416, %422 : vector<4x128xf32>
    %425 = arith.maximumf %423, %424 : vector<4x128xf32>
    %426 = vector.extract_strided_slice %425 {offsets = [0, 0], sizes = [4, 64], strides = [1, 1]} : vector<4x128xf32> to vector<4x64xf32>
    %427 = vector.extract_strided_slice %425 {offsets = [0, 64], sizes = [4, 64], strides = [1, 1]} : vector<4x128xf32> to vector<4x64xf32>
    %428 = arith.maximumf %426, %427 : vector<4x64xf32>
    %429 = vector.broadcast %18 : vector<1x64xf32> to vector<4x64xf32>
    %430 = arith.addf %428, %429 : vector<4x64xf32>
    %cst_400 = arith.constant 0.000000e+00 : f32
    %431 = vector.broadcast %cst_400 : f32 to vector<4x64xf32>
    %432 = arith.maximumf %430, %431 : vector<4x64xf32>
    %433 = arith.mulf %432, %16 : vector<4x64xf32>
    %434 = vector.shape_cast %433 : vector<4x64xf32> to vector<1x4x64xf32>
    %cst_401 = arith.constant dense<0.000000e+00> : vector<1xf32>
    %435 = vector.multi_reduction <add>, %434, %cst_401 [1, 2] : vector<1x4x64xf32> to vector<1xf32>
    %436 = vector.shape_cast %435 : vector<1xf32> to vector<1x1x1xf32>
    %437 = vector.extract %436[0, 0, 0] : f32 from vector<1x1x1xf32>
    %438 = vector.broadcast %437 : f32 to vector<1x1xf32>
    %c6 = arith.constant 6 : index
    %c0_402 = arith.constant 0 : index
    %c0_403 = arith.constant 0 : index
    %439 = vector.load %arg1[%c6, %c0_402, %c0_403] : memref<8x16x64xf32, #tpu.memory_space<vmem>>, vector<1x16x64xf32>
    %440 = vector.shape_cast %439 : vector<1x16x64xf32> to vector<16x64xf32>
    %c1_404 = arith.constant 1 : index
    %c4_405 = arith.constant 4 : index
    %441 = vector.load %arg9[%c1_404, %c4_405] : memref<18x72xf32, #tpu.memory_space<vmem>>, vector<16x64xf32>
    tpu.vector_store %arg9[%c1_404, %c4_405], %440 {strides = array<i32>} : memref<18x72xf32, #tpu.memory_space<vmem>>, vector<16x64xf32>,
    %c0_406 = arith.constant 0 : index
    %c0_407 = arith.constant 0 : index
    %c0_408 = arith.constant 0 : index
    %442 = vector.load %arg2[%c0_406, %c0_407, %c0_408] : memref<3x72x128xf32, #tpu.memory_space<vmem>>, vector<1x72x128xf32>
    %443 = vector.shape_cast %442 : vector<1x72x128xf32> to vector<72x128xf32>
    %c0_409 = arith.constant 0 : index
    %c0_410 = arith.constant 0 : index
    %444 = tpu.strided_load %arg9[%c0_409, %c0_410] {strides = array<i32: 2, 1>} : memref<18x72xf32, #tpu.memory_space<vmem>>, vector<8x72xf32>
    %cst_411 = arith.constant dense<0.000000e+00> : vector<8x128xf32>
    %445 = tpu.matmul %444, %443, %cst_411 {dimension_numbers = #tpu.dot_dimension_numbers<[1], [0], [0], [1], [0, 0, 1, 1], [], []>} : vector<8x72xf32>, vector<72x128xf32>, vector<8x128xf32> -> vector<8x128xf32>
    %c1_412 = arith.constant 1 : index
    %c0_413 = arith.constant 0 : index
    %446 = tpu.strided_load %arg9[%c1_412, %c0_413] {strides = array<i32: 2, 1>} : memref<18x72xf32, #tpu.memory_space<vmem>>, vector<8x72xf32>
    %cst_414 = arith.constant dense<0.000000e+00> : vector<8x128xf32>
    %447 = tpu.matmul %446, %443, %cst_414 {dimension_numbers = #tpu.dot_dimension_numbers<[1], [0], [0], [1], [0, 0, 1, 1], [], []>} : vector<8x72xf32>, vector<72x128xf32>, vector<8x128xf32> -> vector<8x128xf32>
    %c1_415 = arith.constant 1 : index
    %c0_416 = arith.constant 0 : index
    %c0_417 = arith.constant 0 : index
    %448 = vector.load %arg2[%c1_415, %c0_416, %c0_417] : memref<3x72x128xf32, #tpu.memory_space<vmem>>, vector<1x72x128xf32>
    %449 = vector.shape_cast %448 : vector<1x72x128xf32> to vector<72x128xf32>
    %c1_418 = arith.constant 1 : index
    %c0_419 = arith.constant 0 : index
    %450 = tpu.strided_load %arg9[%c1_418, %c0_419] {strides = array<i32: 2, 1>} : memref<18x72xf32, #tpu.memory_space<vmem>>, vector<8x72xf32>
    %cst_420 = arith.constant dense<0.000000e+00> : vector<8x128xf32>
    %451 = tpu.matmul %450, %449, %cst_420 {dimension_numbers = #tpu.dot_dimension_numbers<[1], [0], [0], [1], [0, 0, 1, 1], [], []>} : vector<8x72xf32>, vector<72x128xf32>, vector<8x128xf32> -> vector<8x128xf32>
    %c2_421 = arith.constant 2 : index
    %c0_422 = arith.constant 0 : index
    %452 = tpu.strided_load %arg9[%c2_421, %c0_422] {strides = array<i32: 2, 1>} : memref<18x72xf32, #tpu.memory_space<vmem>>, vector<8x72xf32>
    %cst_423 = arith.constant dense<0.000000e+00> : vector<8x128xf32>
    %453 = tpu.matmul %452, %449, %cst_423 {dimension_numbers = #tpu.dot_dimension_numbers<[1], [0], [0], [1], [0, 0, 1, 1], [], []>} : vector<8x72xf32>, vector<72x128xf32>, vector<8x128xf32> -> vector<8x128xf32>
    %454 = arith.addf %445, %451 : vector<8x128xf32>
    %455 = arith.addf %447, %453 : vector<8x128xf32>
    %c2_424 = arith.constant 2 : index
    %c0_425 = arith.constant 0 : index
    %c0_426 = arith.constant 0 : index
    %456 = vector.load %arg2[%c2_424, %c0_425, %c0_426] : memref<3x72x128xf32, #tpu.memory_space<vmem>>, vector<1x72x128xf32>
    %457 = vector.shape_cast %456 : vector<1x72x128xf32> to vector<72x128xf32>
    %c2_427 = arith.constant 2 : index
    %c0_428 = arith.constant 0 : index
    %458 = tpu.strided_load %arg9[%c2_427, %c0_428] {strides = array<i32: 2, 1>} : memref<18x72xf32, #tpu.memory_space<vmem>>, vector<8x72xf32>
    %cst_429 = arith.constant dense<0.000000e+00> : vector<8x128xf32>
    %459 = tpu.matmul %458, %457, %cst_429 {dimension_numbers = #tpu.dot_dimension_numbers<[1], [0], [0], [1], [0, 0, 1, 1], [], []>} : vector<8x72xf32>, vector<72x128xf32>, vector<8x128xf32> -> vector<8x128xf32>
    %c3_430 = arith.constant 3 : index
    %c0_431 = arith.constant 0 : index
    %460 = tpu.strided_load %arg9[%c3_430, %c0_431] {strides = array<i32: 2, 1>} : memref<18x72xf32, #tpu.memory_space<vmem>>, vector<8x72xf32>
    %cst_432 = arith.constant dense<0.000000e+00> : vector<8x128xf32>
    %461 = tpu.matmul %460, %457, %cst_432 {dimension_numbers = #tpu.dot_dimension_numbers<[1], [0], [0], [1], [0, 0, 1, 1], [], []>} : vector<8x72xf32>, vector<72x128xf32>, vector<8x128xf32> -> vector<8x128xf32>
    %462 = arith.addf %454, %459 : vector<8x128xf32>
    %463 = arith.addf %455, %461 : vector<8x128xf32>
    %464 = arith.maximumf %462, %463 : vector<8x128xf32>
    %465 = vector.extract_strided_slice %464 {offsets = [0, 0], sizes = [8, 64], strides = [1, 1]} : vector<8x128xf32> to vector<8x64xf32>
    %466 = vector.extract_strided_slice %464 {offsets = [0, 64], sizes = [8, 64], strides = [1, 1]} : vector<8x128xf32> to vector<8x64xf32>
    %467 = arith.maximumf %465, %466 : vector<8x64xf32>
    %468 = vector.broadcast %17 : vector<1x64xf32> to vector<8x64xf32>
    %469 = arith.addf %467, %468 : vector<8x64xf32>
    %cst_433 = arith.constant 0.000000e+00 : f32
    %470 = vector.broadcast %cst_433 : f32 to vector<8x64xf32>
    %471 = arith.maximumf %469, %470 : vector<8x64xf32>
    %c1_434 = arith.constant 1 : index
    %c8_435 = arith.constant 8 : index
    %472 = vector.load %arg10[%c1_434, %c8_435] : memref<10x80xf32, #tpu.memory_space<vmem>>, vector<8x64xf32>
    tpu.vector_store %arg10[%c1_434, %c8_435], %471 {strides = array<i32>} : memref<10x80xf32, #tpu.memory_space<vmem>>, vector<8x64xf32>,
    %c0_436 = arith.constant 0 : index
    %c0_437 = arith.constant 0 : index
    %c0_438 = arith.constant 0 : index
    %473 = vector.load %arg4[%c0_436, %c0_437, %c0_438] : memref<3x80x128xf32, #tpu.memory_space<vmem>>, vector<1x80x128xf32>
    %474 = vector.shape_cast %473 : vector<1x80x128xf32> to vector<80x128xf32>
    %c0_439 = arith.constant 0 : index
    %c0_440 = arith.constant 0 : index
    %475 = tpu.strided_load %arg10[%c0_439, %c0_440] {strides = array<i32: 2, 1>} : memref<10x80xf32, #tpu.memory_space<vmem>>, vector<4x80xf32>
    %cst_441 = arith.constant dense<0.000000e+00> : vector<4x128xf32>
    %476 = tpu.matmul %475, %474, %cst_441 {dimension_numbers = #tpu.dot_dimension_numbers<[1], [0], [0], [1], [0, 0, 1, 1], [], []>} : vector<4x80xf32>, vector<80x128xf32>, vector<4x128xf32> -> vector<4x128xf32>
    %c1_442 = arith.constant 1 : index
    %c0_443 = arith.constant 0 : index
    %477 = tpu.strided_load %arg10[%c1_442, %c0_443] {strides = array<i32: 2, 1>} : memref<10x80xf32, #tpu.memory_space<vmem>>, vector<4x80xf32>
    %cst_444 = arith.constant dense<0.000000e+00> : vector<4x128xf32>
    %478 = tpu.matmul %477, %474, %cst_444 {dimension_numbers = #tpu.dot_dimension_numbers<[1], [0], [0], [1], [0, 0, 1, 1], [], []>} : vector<4x80xf32>, vector<80x128xf32>, vector<4x128xf32> -> vector<4x128xf32>
    %c1_445 = arith.constant 1 : index
    %c0_446 = arith.constant 0 : index
    %c0_447 = arith.constant 0 : index
    %479 = vector.load %arg4[%c1_445, %c0_446, %c0_447] : memref<3x80x128xf32, #tpu.memory_space<vmem>>, vector<1x80x128xf32>
    %480 = vector.shape_cast %479 : vector<1x80x128xf32> to vector<80x128xf32>
    %c1_448 = arith.constant 1 : index
    %c0_449 = arith.constant 0 : index
    %481 = tpu.strided_load %arg10[%c1_448, %c0_449] {strides = array<i32: 2, 1>} : memref<10x80xf32, #tpu.memory_space<vmem>>, vector<4x80xf32>
    %cst_450 = arith.constant dense<0.000000e+00> : vector<4x128xf32>
    %482 = tpu.matmul %481, %480, %cst_450 {dimension_numbers = #tpu.dot_dimension_numbers<[1], [0], [0], [1], [0, 0, 1, 1], [], []>} : vector<4x80xf32>, vector<80x128xf32>, vector<4x128xf32> -> vector<4x128xf32>
    %c2_451 = arith.constant 2 : index
    %c0_452 = arith.constant 0 : index
    %483 = tpu.strided_load %arg10[%c2_451, %c0_452] {strides = array<i32: 2, 1>} : memref<10x80xf32, #tpu.memory_space<vmem>>, vector<4x80xf32>
    %cst_453 = arith.constant dense<0.000000e+00> : vector<4x128xf32>
    %484 = tpu.matmul %483, %480, %cst_453 {dimension_numbers = #tpu.dot_dimension_numbers<[1], [0], [0], [1], [0, 0, 1, 1], [], []>} : vector<4x80xf32>, vector<80x128xf32>, vector<4x128xf32> -> vector<4x128xf32>
    %485 = arith.addf %476, %482 : vector<4x128xf32>
    %486 = arith.addf %478, %484 : vector<4x128xf32>
    %c2_454 = arith.constant 2 : index
    %c0_455 = arith.constant 0 : index
    %c0_456 = arith.constant 0 : index
    %487 = vector.load %arg4[%c2_454, %c0_455, %c0_456] : memref<3x80x128xf32, #tpu.memory_space<vmem>>, vector<1x80x128xf32>
    %488 = vector.shape_cast %487 : vector<1x80x128xf32> to vector<80x128xf32>
    %c2_457 = arith.constant 2 : index
    %c0_458 = arith.constant 0 : index
    %489 = tpu.strided_load %arg10[%c2_457, %c0_458] {strides = array<i32: 2, 1>} : memref<10x80xf32, #tpu.memory_space<vmem>>, vector<4x80xf32>
    %cst_459 = arith.constant dense<0.000000e+00> : vector<4x128xf32>
    %490 = tpu.matmul %489, %488, %cst_459 {dimension_numbers = #tpu.dot_dimension_numbers<[1], [0], [0], [1], [0, 0, 1, 1], [], []>} : vector<4x80xf32>, vector<80x128xf32>, vector<4x128xf32> -> vector<4x128xf32>
    %c3_460 = arith.constant 3 : index
    %c0_461 = arith.constant 0 : index
    %491 = tpu.strided_load %arg10[%c3_460, %c0_461] {strides = array<i32: 2, 1>} : memref<10x80xf32, #tpu.memory_space<vmem>>, vector<4x80xf32>
    %cst_462 = arith.constant dense<0.000000e+00> : vector<4x128xf32>
    %492 = tpu.matmul %491, %488, %cst_462 {dimension_numbers = #tpu.dot_dimension_numbers<[1], [0], [0], [1], [0, 0, 1, 1], [], []>} : vector<4x80xf32>, vector<80x128xf32>, vector<4x128xf32> -> vector<4x128xf32>
    %493 = arith.addf %485, %490 : vector<4x128xf32>
    %494 = arith.addf %486, %492 : vector<4x128xf32>
    %495 = arith.maximumf %493, %494 : vector<4x128xf32>
    %496 = vector.extract_strided_slice %495 {offsets = [0, 0], sizes = [4, 64], strides = [1, 1]} : vector<4x128xf32> to vector<4x64xf32>
    %497 = vector.extract_strided_slice %495 {offsets = [0, 64], sizes = [4, 64], strides = [1, 1]} : vector<4x128xf32> to vector<4x64xf32>
    %498 = arith.maximumf %496, %497 : vector<4x64xf32>
    %499 = vector.broadcast %18 : vector<1x64xf32> to vector<4x64xf32>
    %500 = arith.addf %498, %499 : vector<4x64xf32>
    %cst_463 = arith.constant 0.000000e+00 : f32
    %501 = vector.broadcast %cst_463 : f32 to vector<4x64xf32>
    %502 = arith.maximumf %500, %501 : vector<4x64xf32>
    %503 = arith.mulf %502, %16 : vector<4x64xf32>
    %504 = vector.shape_cast %503 : vector<4x64xf32> to vector<1x4x64xf32>
    %cst_464 = arith.constant dense<0.000000e+00> : vector<1xf32>
    %505 = vector.multi_reduction <add>, %504, %cst_464 [1, 2] : vector<1x4x64xf32> to vector<1xf32>
    %506 = vector.shape_cast %505 : vector<1xf32> to vector<1x1x1xf32>
    %507 = vector.extract %506[0, 0, 0] : f32 from vector<1x1x1xf32>
    %508 = vector.broadcast %507 : f32 to vector<1x1xf32>
    %c7 = arith.constant 7 : index
    %c0_465 = arith.constant 0 : index
    %c0_466 = arith.constant 0 : index
    %509 = vector.load %arg1[%c7, %c0_465, %c0_466] : memref<8x16x64xf32, #tpu.memory_space<vmem>>, vector<1x16x64xf32>
    %510 = vector.shape_cast %509 : vector<1x16x64xf32> to vector<16x64xf32>
    %c1_467 = arith.constant 1 : index
    %c4_468 = arith.constant 4 : index
    %511 = vector.load %arg9[%c1_467, %c4_468] : memref<18x72xf32, #tpu.memory_space<vmem>>, vector<16x64xf32>
    tpu.vector_store %arg9[%c1_467, %c4_468], %510 {strides = array<i32>} : memref<18x72xf32, #tpu.memory_space<vmem>>, vector<16x64xf32>,
    %c0_469 = arith.constant 0 : index
    %c0_470 = arith.constant 0 : index
    %c0_471 = arith.constant 0 : index
    %512 = vector.load %arg2[%c0_469, %c0_470, %c0_471] : memref<3x72x128xf32, #tpu.memory_space<vmem>>, vector<1x72x128xf32>
    %513 = vector.shape_cast %512 : vector<1x72x128xf32> to vector<72x128xf32>
    %c0_472 = arith.constant 0 : index
    %c0_473 = arith.constant 0 : index
    %514 = tpu.strided_load %arg9[%c0_472, %c0_473] {strides = array<i32: 2, 1>} : memref<18x72xf32, #tpu.memory_space<vmem>>, vector<8x72xf32>
    %cst_474 = arith.constant dense<0.000000e+00> : vector<8x128xf32>
    %515 = tpu.matmul %514, %513, %cst_474 {dimension_numbers = #tpu.dot_dimension_numbers<[1], [0], [0], [1], [0, 0, 1, 1], [], []>} : vector<8x72xf32>, vector<72x128xf32>, vector<8x128xf32> -> vector<8x128xf32>
    %c1_475 = arith.constant 1 : index
    %c0_476 = arith.constant 0 : index
    %516 = tpu.strided_load %arg9[%c1_475, %c0_476] {strides = array<i32: 2, 1>} : memref<18x72xf32, #tpu.memory_space<vmem>>, vector<8x72xf32>
    %cst_477 = arith.constant dense<0.000000e+00> : vector<8x128xf32>
    %517 = tpu.matmul %516, %513, %cst_477 {dimension_numbers = #tpu.dot_dimension_numbers<[1], [0], [0], [1], [0, 0, 1, 1], [], []>} : vector<8x72xf32>, vector<72x128xf32>, vector<8x128xf32> -> vector<8x128xf32>
    %c1_478 = arith.constant 1 : index
    %c0_479 = arith.constant 0 : index
    %c0_480 = arith.constant 0 : index
    %518 = vector.load %arg2[%c1_478, %c0_479, %c0_480] : memref<3x72x128xf32, #tpu.memory_space<vmem>>, vector<1x72x128xf32>
    %519 = vector.shape_cast %518 : vector<1x72x128xf32> to vector<72x128xf32>
    %c1_481 = arith.constant 1 : index
    %c0_482 = arith.constant 0 : index
    %520 = tpu.strided_load %arg9[%c1_481, %c0_482] {strides = array<i32: 2, 1>} : memref<18x72xf32, #tpu.memory_space<vmem>>, vector<8x72xf32>
    %cst_483 = arith.constant dense<0.000000e+00> : vector<8x128xf32>
    %521 = tpu.matmul %520, %519, %cst_483 {dimension_numbers = #tpu.dot_dimension_numbers<[1], [0], [0], [1], [0, 0, 1, 1], [], []>} : vector<8x72xf32>, vector<72x128xf32>, vector<8x128xf32> -> vector<8x128xf32>
    %c2_484 = arith.constant 2 : index
    %c0_485 = arith.constant 0 : index
    %522 = tpu.strided_load %arg9[%c2_484, %c0_485] {strides = array<i32: 2, 1>} : memref<18x72xf32, #tpu.memory_space<vmem>>, vector<8x72xf32>
    %cst_486 = arith.constant dense<0.000000e+00> : vector<8x128xf32>
    %523 = tpu.matmul %522, %519, %cst_486 {dimension_numbers = #tpu.dot_dimension_numbers<[1], [0], [0], [1], [0, 0, 1, 1], [], []>} : vector<8x72xf32>, vector<72x128xf32>, vector<8x128xf32> -> vector<8x128xf32>
    %524 = arith.addf %515, %521 : vector<8x128xf32>
    %525 = arith.addf %517, %523 : vector<8x128xf32>
    %c2_487 = arith.constant 2 : index
    %c0_488 = arith.constant 0 : index
    %c0_489 = arith.constant 0 : index
    %526 = vector.load %arg2[%c2_487, %c0_488, %c0_489] : memref<3x72x128xf32, #tpu.memory_space<vmem>>, vector<1x72x128xf32>
    %527 = vector.shape_cast %526 : vector<1x72x128xf32> to vector<72x128xf32>
    %c2_490 = arith.constant 2 : index
    %c0_491 = arith.constant 0 : index
    %528 = tpu.strided_load %arg9[%c2_490, %c0_491] {strides = array<i32: 2, 1>} : memref<18x72xf32, #tpu.memory_space<vmem>>, vector<8x72xf32>
    %cst_492 = arith.constant dense<0.000000e+00> : vector<8x128xf32>
    %529 = tpu.matmul %528, %527, %cst_492 {dimension_numbers = #tpu.dot_dimension_numbers<[1], [0], [0], [1], [0, 0, 1, 1], [], []>} : vector<8x72xf32>, vector<72x128xf32>, vector<8x128xf32> -> vector<8x128xf32>
    %c3_493 = arith.constant 3 : index
    %c0_494 = arith.constant 0 : index
    %530 = tpu.strided_load %arg9[%c3_493, %c0_494] {strides = array<i32: 2, 1>} : memref<18x72xf32, #tpu.memory_space<vmem>>, vector<8x72xf32>
    %cst_495 = arith.constant dense<0.000000e+00> : vector<8x128xf32>
    %531 = tpu.matmul %530, %527, %cst_495 {dimension_numbers = #tpu.dot_dimension_numbers<[1], [0], [0], [1], [0, 0, 1, 1], [], []>} : vector<8x72xf32>, vector<72x128xf32>, vector<8x128xf32> -> vector<8x128xf32>
    %532 = arith.addf %524, %529 : vector<8x128xf32>
    %533 = arith.addf %525, %531 : vector<8x128xf32>
    %534 = arith.maximumf %532, %533 : vector<8x128xf32>
    %535 = vector.extract_strided_slice %534 {offsets = [0, 0], sizes = [8, 64], strides = [1, 1]} : vector<8x128xf32> to vector<8x64xf32>
    %536 = vector.extract_strided_slice %534 {offsets = [0, 64], sizes = [8, 64], strides = [1, 1]} : vector<8x128xf32> to vector<8x64xf32>
    %537 = arith.maximumf %535, %536 : vector<8x64xf32>
    %538 = vector.broadcast %17 : vector<1x64xf32> to vector<8x64xf32>
    %539 = arith.addf %537, %538 : vector<8x64xf32>
    %cst_496 = arith.constant 0.000000e+00 : f32
    %540 = vector.broadcast %cst_496 : f32 to vector<8x64xf32>
    %541 = arith.maximumf %539, %540 : vector<8x64xf32>
    %c1_497 = arith.constant 1 : index
    %c8_498 = arith.constant 8 : index
    %542 = vector.load %arg10[%c1_497, %c8_498] : memref<10x80xf32, #tpu.memory_space<vmem>>, vector<8x64xf32>
    tpu.vector_store %arg10[%c1_497, %c8_498], %541 {strides = array<i32>} : memref<10x80xf32, #tpu.memory_space<vmem>>, vector<8x64xf32>,
    %c0_499 = arith.constant 0 : index
    %c0_500 = arith.constant 0 : index
    %c0_501 = arith.constant 0 : index
    %543 = vector.load %arg4[%c0_499, %c0_500, %c0_501] : memref<3x80x128xf32, #tpu.memory_space<vmem>>, vector<1x80x128xf32>
    %544 = vector.shape_cast %543 : vector<1x80x128xf32> to vector<80x128xf32>
    %c0_502 = arith.constant 0 : index
    %c0_503 = arith.constant 0 : index
    %545 = tpu.strided_load %arg10[%c0_502, %c0_503] {strides = array<i32: 2, 1>} : memref<10x80xf32, #tpu.memory_space<vmem>>, vector<4x80xf32>
    %cst_504 = arith.constant dense<0.000000e+00> : vector<4x128xf32>
    %546 = tpu.matmul %545, %544, %cst_504 {dimension_numbers = #tpu.dot_dimension_numbers<[1], [0], [0], [1], [0, 0, 1, 1], [], []>} : vector<4x80xf32>, vector<80x128xf32>, vector<4x128xf32> -> vector<4x128xf32>
    %c1_505 = arith.constant 1 : index
    %c0_506 = arith.constant 0 : index
    %547 = tpu.strided_load %arg10[%c1_505, %c0_506] {strides = array<i32: 2, 1>} : memref<10x80xf32, #tpu.memory_space<vmem>>, vector<4x80xf32>
    %cst_507 = arith.constant dense<0.000000e+00> : vector<4x128xf32>
    %548 = tpu.matmul %547, %544, %cst_507 {dimension_numbers = #tpu.dot_dimension_numbers<[1], [0], [0], [1], [0, 0, 1, 1], [], []>} : vector<4x80xf32>, vector<80x128xf32>, vector<4x128xf32> -> vector<4x128xf32>
    %c1_508 = arith.constant 1 : index
    %c0_509 = arith.constant 0 : index
    %c0_510 = arith.constant 0 : index
    %549 = vector.load %arg4[%c1_508, %c0_509, %c0_510] : memref<3x80x128xf32, #tpu.memory_space<vmem>>, vector<1x80x128xf32>
    %550 = vector.shape_cast %549 : vector<1x80x128xf32> to vector<80x128xf32>
    %c1_511 = arith.constant 1 : index
    %c0_512 = arith.constant 0 : index
    %551 = tpu.strided_load %arg10[%c1_511, %c0_512] {strides = array<i32: 2, 1>} : memref<10x80xf32, #tpu.memory_space<vmem>>, vector<4x80xf32>
    %cst_513 = arith.constant dense<0.000000e+00> : vector<4x128xf32>
    %552 = tpu.matmul %551, %550, %cst_513 {dimension_numbers = #tpu.dot_dimension_numbers<[1], [0], [0], [1], [0, 0, 1, 1], [], []>} : vector<4x80xf32>, vector<80x128xf32>, vector<4x128xf32> -> vector<4x128xf32>
    %c2_514 = arith.constant 2 : index
    %c0_515 = arith.constant 0 : index
    %553 = tpu.strided_load %arg10[%c2_514, %c0_515] {strides = array<i32: 2, 1>} : memref<10x80xf32, #tpu.memory_space<vmem>>, vector<4x80xf32>
    %cst_516 = arith.constant dense<0.000000e+00> : vector<4x128xf32>
    %554 = tpu.matmul %553, %550, %cst_516 {dimension_numbers = #tpu.dot_dimension_numbers<[1], [0], [0], [1], [0, 0, 1, 1], [], []>} : vector<4x80xf32>, vector<80x128xf32>, vector<4x128xf32> -> vector<4x128xf32>
    %555 = arith.addf %546, %552 : vector<4x128xf32>
    %556 = arith.addf %548, %554 : vector<4x128xf32>
    %c2_517 = arith.constant 2 : index
    %c0_518 = arith.constant 0 : index
    %c0_519 = arith.constant 0 : index
    %557 = vector.load %arg4[%c2_517, %c0_518, %c0_519] : memref<3x80x128xf32, #tpu.memory_space<vmem>>, vector<1x80x128xf32>
    %558 = vector.shape_cast %557 : vector<1x80x128xf32> to vector<80x128xf32>
    %c2_520 = arith.constant 2 : index
    %c0_521 = arith.constant 0 : index
    %559 = tpu.strided_load %arg10[%c2_520, %c0_521] {strides = array<i32: 2, 1>} : memref<10x80xf32, #tpu.memory_space<vmem>>, vector<4x80xf32>
    %cst_522 = arith.constant dense<0.000000e+00> : vector<4x128xf32>
    %560 = tpu.matmul %559, %558, %cst_522 {dimension_numbers = #tpu.dot_dimension_numbers<[1], [0], [0], [1], [0, 0, 1, 1], [], []>} : vector<4x80xf32>, vector<80x128xf32>, vector<4x128xf32> -> vector<4x128xf32>
    %c3_523 = arith.constant 3 : index
    %c0_524 = arith.constant 0 : index
    %561 = tpu.strided_load %arg10[%c3_523, %c0_524] {strides = array<i32: 2, 1>} : memref<10x80xf32, #tpu.memory_space<vmem>>, vector<4x80xf32>
    %cst_525 = arith.constant dense<0.000000e+00> : vector<4x128xf32>
    %562 = tpu.matmul %561, %558, %cst_525 {dimension_numbers = #tpu.dot_dimension_numbers<[1], [0], [0], [1], [0, 0, 1, 1], [], []>} : vector<4x80xf32>, vector<80x128xf32>, vector<4x128xf32> -> vector<4x128xf32>
    %563 = arith.addf %555, %560 : vector<4x128xf32>
    %564 = arith.addf %556, %562 : vector<4x128xf32>
    %565 = arith.maximumf %563, %564 : vector<4x128xf32>
    %566 = vector.extract_strided_slice %565 {offsets = [0, 0], sizes = [4, 64], strides = [1, 1]} : vector<4x128xf32> to vector<4x64xf32>
    %567 = vector.extract_strided_slice %565 {offsets = [0, 64], sizes = [4, 64], strides = [1, 1]} : vector<4x128xf32> to vector<4x64xf32>
    %568 = arith.maximumf %566, %567 : vector<4x64xf32>
    %569 = vector.broadcast %18 : vector<1x64xf32> to vector<4x64xf32>
    %570 = arith.addf %568, %569 : vector<4x64xf32>
    %cst_526 = arith.constant 0.000000e+00 : f32
    %571 = vector.broadcast %cst_526 : f32 to vector<4x64xf32>
    %572 = arith.maximumf %570, %571 : vector<4x64xf32>
    %573 = arith.mulf %572, %16 : vector<4x64xf32>
    %574 = vector.shape_cast %573 : vector<4x64xf32> to vector<1x4x64xf32>
    %cst_527 = arith.constant dense<0.000000e+00> : vector<1xf32>
    %575 = vector.multi_reduction <add>, %574, %cst_527 [1, 2] : vector<1x4x64xf32> to vector<1xf32>
    %576 = vector.shape_cast %575 : vector<1xf32> to vector<1x1x1xf32>
    %577 = vector.extract %576[0, 0, 0] : f32 from vector<1x1x1xf32>
    %578 = vector.broadcast %577 : f32 to vector<1x1xf32>
    %579 = tpu.concatenate %88, %158, %228, %298, %368, %438, %508, %578 in 1 : vector<1x1xf32>, vector<1x1xf32>, vector<1x1xf32>, vector<1x1xf32>, vector<1x1xf32>, vector<1x1xf32>, vector<1x1xf32>, vector<1x1xf32> -> vector<1x8xf32>
    %c0_528 = arith.constant 0 : index
    %c0_529 = arith.constant 0 : index
    %580 = vector.load %arg7[%c0_528, %c0_529] : memref<1x1xf32, #tpu.memory_space<vmem>>, vector<1x1xf32>
    %581 = vector.broadcast %580 : vector<1x1xf32> to vector<1x8xf32>
    %582 = arith.addf %579, %581 : vector<1x8xf32>
    %c0_530 = arith.constant 0 : index
    %c0_531 = arith.constant 0 : index
    %c0_532 = arith.constant 0 : index
    %583 = vector.load %arg8[%c0_530, %c0_531, %c0_532] : memref<1x1x8xf32, #tpu.memory_space<vmem>>, vector<1x1x8xf32>
    %584 = vector.shape_cast %583 : vector<1x1x8xf32> to vector<1x8xf32>
    %585 = vector.shape_cast %582 : vector<1x8xf32> to vector<1x1x8xf32>
    tpu.vector_store %arg8[%c0_530, %c0_531, %c0_532], %585 {strides = array<i32>} : memref<1x1x8xf32, #tpu.memory_space<vmem>>, vector<1x1x8xf32>,
    return
  }
  func.func @transform_0(%arg0: i32) -> (i32, i32, i32) {
    %c0_i32 = arith.constant 0 : i32
    %c0_i32_0 = arith.constant 0 : i32
    %c0_i32_1 = arith.constant 0 : i32
    return %arg0, %c0_i32, %c0_i32_0 : i32, i32, i32
  }
  func.func @transform_1(%arg0: i32) -> (i32, i32, i32) {
    %c0_i32 = arith.constant 0 : i32
    %c0_i32_0 = arith.constant 0 : i32
    %c0_i32_1 = arith.constant 0 : i32
    %c0_i32_2 = arith.constant 0 : i32
    return %c0_i32, %c0_i32_0, %c0_i32_1 : i32, i32, i32
  }
  func.func @transform_2(%arg0: i32) -> (i32, i32) {
    %c0_i32 = arith.constant 0 : i32
    %c0_i32_0 = arith.constant 0 : i32
    %c0_i32_1 = arith.constant 0 : i32
    return %c0_i32, %c0_i32_0 : i32, i32
  }
  func.func @transform_3(%arg0: i32) -> (i32, i32, i32) {
    %c0_i32 = arith.constant 0 : i32
    %c0_i32_0 = arith.constant 0 : i32
    %c0_i32_1 = arith.constant 0 : i32
    %c0_i32_2 = arith.constant 0 : i32
    return %c0_i32, %c0_i32_0, %c0_i32_1 : i32, i32, i32
  }
  func.func @transform_4(%arg0: i32) -> (i32, i32) {
    %c0_i32 = arith.constant 0 : i32
    %c0_i32_0 = arith.constant 0 : i32
    %c0_i32_1 = arith.constant 0 : i32
    return %c0_i32, %c0_i32_0 : i32, i32
  }
  func.func @transform_5(%arg0: i32) -> (i32, i32) {
    %c0_i32 = arith.constant 0 : i32
    %c0_i32_0 = arith.constant 0 : i32
    %c0_i32_1 = arith.constant 0 : i32
    return %c0_i32, %c0_i32_0 : i32, i32
  }
  func.func @transform_6(%arg0: i32) -> (i32, i32) {
    %c0_i32 = arith.constant 0 : i32
    %c0_i32_0 = arith.constant 0 : i32
    %c0_i32_1 = arith.constant 0 : i32
    return %c0_i32, %c0_i32_0 : i32, i32
  }
  func.func @transform_7(%arg0: i32) -> (i32, i32, i32) {
    %c0_i32 = arith.constant 0 : i32
    %c0_i32_0 = arith.constant 0 : i32
    %c0_i32_1 = arith.constant 0 : i32
    return %arg0, %c0_i32, %c0_i32_0 : i32, i32, i32
  }
}

</mosaic_0001>

<llo_original>
// kernel: forward.1
$region0: #{forward.1}
  #allocation0 [shape = 'u32[]', space=smem, size = 0x4, offset = 0x4, fixed_abs, tag = 'smem constant byte address 0x4 - core index']
  #allocation1 [shape = 'u32[72,128]{1,0:T(1,128)}', space=vmem, size = 0x9000, scoped, tag = 'internal scratch']
  #allocation2 [shape = 'f32[18,72]{1,0:T(8,128)}', space=vmem, size = 0x3000, scoped, tag = 'scratch operand']
  #allocation3 [shape = 'f32[10,80]{1,0:T(8,128)}', space=vmem, size = 0x2000, scoped, tag = 'scratch operand']
  #allocation4 [shape = 'f32[1,1]{1,0:T(1,128)S(1)}', space=vmem, size = 0x200, scoped, tag = 'scoped memory for forward.1']
  %s0 = inlined_call_operand.vmem [shape: f32[16,16,64], index: 0, kind: input, shape index: {}]
  %s1 = inlined_call_operand.vmem [shape: f32[3,72,128], index: 1, kind: input, shape index: {}]
  %s2 = inlined_call_operand.vmem [shape: f32[1,64], index: 2, kind: input, shape index: {}, may-alias: {2,4}]
  %s3 = inlined_call_operand.vmem [shape: f32[3,80,128], index: 3, kind: input, shape index: {}]
  %s4 = inlined_call_operand.vmem [shape: f32[1,64], index: 4, kind: input, shape index: {}, may-alias: {2,4}]
  %s5 = inlined_call_operand.vmem [shape: f32[4,64], index: 5, kind: input, shape index: {}]
  %s6 = inlined_call_operand.<no memory space> [shape: f32[1,1], index: 6, kind: input, shape index: {}]
  %s7 = inlined_call_operand.vmem [shape: f32[2,1,8], index: 7, kind: output, shape index: {}]
  %s8 = sld [smem:[#allocation0]]
  $region61: #{forward.1} parent=0
    _
  %s10 = ssub.s32 1, %s8
  %s11 = scalar_select 0, %s10, %s8
  %v12 = vstv %s6
  %13 = vst [vmem:[#allocation4] sm:$0x1] %v12
  loop: start=0, step=1, limit=4
  $region2: #{forward.1} parent=0 // loop_pre_header
    _
  $region3: #{forward.1} parent=0 // loop_header
    %s15 = sphi 0, %s19
    %p16 = scmp.ge.s32.totalorder %s15, 4
    %s25 = sphi 0, %s27
    %s28 = sphi 0, %s25
    %s29 = sphi 0, %s28
    %s45 = sphi 0, %s29
    %s49 = sphi 0, %s49
    %s51 = sphi 0, %s49
    %s52 = sphi 0, %s51
    %s66 = sphi 0, %s52
    %s70 = sphi 0, %s70
    %s72 = sphi 0, %s70
    %s73 = sphi 0, %s72
    %s87 = sphi 0, %s73
    %s91 = sphi 0, %s91
    %s93 = sphi 0, %s91
    %s94 = sphi 0, %s93
    %s108 = sphi 0, %s94
    %s112 = sphi 0, %s112
    %s114 = sphi 0, %s112
    %s115 = sphi 0, %s114
    %s129 = sphi 0, %s115
    %s133 = sphi 0, %s133
    %s135 = sphi 0, %s133
    %s136 = sphi 0, %s135
    %s150 = sphi 0, %s136
    %s154 = sphi 0, %s154
    %s156 = sphi 0, %s154
    %s157 = sphi 0, %s156
    %s171 = sphi 0, %s157
    %s177 = sphi 0, %s179
    %s180 = sphi 0, %s177
    %s181 = sphi 0, %s180
    %s197 = sphi 0, %s181
  $region4: #{forward.1} parent=0 // loop_header_branch
    %18 = sbr.rel (%p16) target = $region8
  $region5: #{forward.1} parent=0 // loop_body
    %s20 = ssub.s32 %s15, 1
    %s21 = ssub.s32 %s15, 2
    %s22 = sadd.s32 %s15, 1
    %s23 = ssub.s32 %s15, %s22
    %p24 = scmp.eq.s32.totalorder %s23, 0
    %s26 = sadd.s32 %s25, 1
    %s27 = scalar_select %p24, %s25, %s26
    %p30 = pneg %p24
    %p31 = scmp.eq.s32.totalorder %s15, 1
    %p32 = por %p30, %p31
    %p33 = scmp.ne.s32.totalorder %s25, %s28
    %p34 = scmp.eq.s32.totalorder %s15, 0
    %p35 = por %p33, %p34
    %p36 = scmp.ne.s32.totalorder %s25, %s28
    %p37 = scmp.eq.s32.totalorder %s20, 1
    %p38 = por %p36, %p37
    %p39 = scmp.ne.s32.totalorder %s28, %s29
    %p40 = scmp.eq.s32.totalorder %s20, 0
    %p41 = por %p39, %p40
    %p42 = scmp.ne.s32.totalorder %s28, %s29
    %p43 = scmp.eq.s32.totalorder %s21, 1
    %p44 = por %p42, %p43
    %p46 = scmp.ne.s32.totalorder %s29, %s45
    %p47 = scmp.eq.s32.totalorder %s21, 0
    %p48 = por %p46, %p47
    %s50 = sadd.s32 %s49, 1
    %p53 = scmp.eq.s32.totalorder %s15, 1
    %p54 = scmp.ne.s32.totalorder %s49, %s51
    %p55 = scmp.eq.s32.totalorder %s15, 0
    %p56 = por %p54, %p55
    %p57 = scmp.ne.s32.totalorder %s49, %s51
    %p58 = scmp.eq.s32.totalorder %s20, 1
    %p59 = por %p57, %p58
    %p60 = scmp.ne.s32.totalorder %s51, %s52
    %p61 = scmp.eq.s32.totalorder %s20, 0
    %p62 = por %p60, %p61
    %p63 = scmp.ne.s32.totalorder %s51, %s52
    %p64 = scmp.eq.s32.totalorder %s21, 1
    %p65 = por %p63, %p64
    %p67 = scmp.ne.s32.totalorder %s52, %s66
    %p68 = scmp.eq.s32.totalorder %s21, 0
    %p69 = por %p67, %p68
    %s71 = sadd.s32 %s70, 1
    %p74 = scmp.eq.s32.totalorder %s15, 1
    %p75 = scmp.ne.s32.totalorder %s70, %s72
    %p76 = scmp.eq.s32.totalorder %s15, 0
    %p77 = por %p75, %p76
    %p78 = scmp.ne.s32.totalorder %s70, %s72
    %p79 = scmp.eq.s32.totalorder %s20, 1
    %p80 = por %p78, %p79
    %p81 = scmp.ne.s32.totalorder %s72, %s73
    %p82 = scmp.eq.s32.totalorder %s20, 0
    %p83 = por %p81, %p82
    %p84 = scmp.ne.s32.totalorder %s72, %s73
    %p85 = scmp.eq.s32.totalorder %s21, 1
    %p86 = por %p84, %p85
    %p88 = scmp.ne.s32.totalorder %s73, %s87
    %p89 = scmp.eq.s32.totalorder %s21, 0
    %p90 = por %p88, %p89
    %s92 = sadd.s32 %s91, 1
    %p95 = scmp.eq.s32.totalorder %s15, 1
    %p96 = scmp.ne.s32.totalorder %s91, %s93
    %p97 = scmp.eq.s32.totalorder %s15, 0
    %p98 = por %p96, %p97
    %p99 = scmp.ne.s32.totalorder %s91, %s93
    %p100 = scmp.eq.s32.totalorder %s20, 1
    %p101 = por %p99, %p100
    %p102 = scmp.ne.s32.totalorder %s93, %s94
    %p103 = scmp.eq.s32.totalorder %s20, 0
    %p104 = por %p102, %p103
    %p105 = scmp.ne.s32.totalorder %s93, %s94
    %p106 = scmp.eq.s32.totalorder %s21, 1
    %p107 = por %p105, %p106
    %p109 = scmp.ne.s32.totalorder %s94, %s108
    %p110 = scmp.eq.s32.totalorder %s21, 0
    %p111 = por %p109, %p110
    %s113 = sadd.s32 %s112, 1
    %p116 = scmp.eq.s32.totalorder %s15, 1
    %p117 = scmp.ne.s32.totalorder %s112, %s114
    %p118 = scmp.eq.s32.totalorder %s15, 0
    %p119 = por %p117, %p118
    %p120 = scmp.ne.s32.totalorder %s112, %s114
    %p121 = scmp.eq.s32.totalorder %s20, 1
    %p122 = por %p120, %p121
    %p123 = scmp.ne.s32.totalorder %s114, %s115
    %p124 = scmp.eq.s32.totalorder %s20, 0
    %p125 = por %p123, %p124
    %p126 = scmp.ne.s32.totalorder %s114, %s115
    %p127 = scmp.eq.s32.totalorder %s21, 1
    %p128 = por %p126, %p127
    %p130 = scmp.ne.s32.totalorder %s115, %s129
    %p131 = scmp.eq.s32.totalorder %s21, 0
    %p132 = por %p130, %p131
    %s134 = sadd.s32 %s133, 1
    %p137 = scmp.eq.s32.totalorder %s15, 1
    %p138 = scmp.ne.s32.totalorder %s133, %s135
    %p139 = scmp.eq.s32.totalorder %s15, 0
    %p140 = por %p138, %p139
    %p141 = scmp.ne.s32.totalorder %s133, %s135
    %p142 = scmp.eq.s32.totalorder %s20, 1
    %p143 = por %p141, %p142
    %p144 = scmp.ne.s32.totalorder %s135, %s136
    %p145 = scmp.eq.s32.totalorder %s20, 0
    %p146 = por %p144, %p145
    %p147 = scmp.ne.s32.totalorder %s135, %s136
    %p148 = scmp.eq.s32.totalorder %s21, 1
    %p149 = por %p147, %p148
    %p151 = scmp.ne.s32.totalorder %s136, %s150
    %p152 = scmp.eq.s32.totalorder %s21, 0
    %p153 = por %p151, %p152
    %s155 = sadd.s32 %s154, 1
    %p158 = scmp.eq.s32.totalorder %s15, 1
    %p159 = scmp.ne.s32.totalorder %s154, %s156
    %p160 = scmp.eq.s32.totalorder %s15, 0
    %p161 = por %p159, %p160
    %p162 = scmp.ne.s32.totalorder %s154, %s156
    %p163 = scmp.eq.s32.totalorder %s20, 1
    %p164 = por %p162, %p163
    %p165 = scmp.ne.s32.totalorder %s156, %s157
    %p166 = scmp.eq.s32.totalorder %s20, 0
    %p167 = por %p165, %p166
    %p168 = scmp.ne.s32.totalorder %s156, %s157
    %p169 = scmp.eq.s32.totalorder %s21, 1
    %p170 = por %p168, %p169
    %p172 = scmp.ne.s32.totalorder %s157, %s171
    %p173 = scmp.eq.s32.totalorder %s21, 0
    %p174 = por %p172, %p173
    %s175 = ssub.s32 %s15, %s22
    %p176 = scmp.eq.s32.totalorder %s175, 0
    %s178 = sadd.s32 %s177, 1
    %s179 = scalar_select %p176, %s177, %s178
    %p182 = pneg %p176
    %p183 = scmp.eq.s32.totalorder %s15, 1
    %p184 = por %p182, %p183
    %p185 = scmp.ne.s32.totalorder %s177, %s180
    %p186 = scmp.eq.s32.totalorder %s15, 0
    %p187 = por %p185, %p186
    %p188 = scmp.ne.s32.totalorder %s177, %s180
    %p189 = scmp.eq.s32.totalorder %s20, 1
    %p190 = por %p188, %p189
    %p191 = scmp.ne.s32.totalorder %s180, %s181
    %p192 = scmp.eq.s32.totalorder %s20, 0
    %p193 = por %p191, %p192
    %p194 = scmp.ne.s32.totalorder %s180, %s181
    %p195 = scmp.eq.s32.totalorder %s21, 1
    %p196 = por %p194, %p195
    %p198 = scmp.ne.s32.totalorder %s181, %s197
    %p199 = scmp.eq.s32.totalorder %s21, 0
    %p200 = por %p198, %p199
    %p201 = scmp.le.s32.totalorder 1, %s15
    %p202 = scmp.lt.s32.totalorder %s15, 3
    %p203 = pnand %p201, %p202
    %p204 = pneg %p203
    // Predicated region
    $region9: #{forward.1} parent=5 // pred_check
      _
    $region10: #{forward.1} parent=5 // pred_check_branch
      %206 = sbr.rel (%p203) target = $region12
    $region11: #{forward.1} parent=5 // pred_region
      %s207 = ssub.s32 %s15, 1
      // Predicated region
      $region13: #{forward.1} parent=11 // pred_check
        %p208 = pneg %p62
      $region14: #{forward.1} parent=11 // pred_check_branch
        %210 = sbr.rel (%p208) target = $region16
      $region15: #{forward.1} parent=11 // pred_region
        _
      $region16: #{forward.1} parent=11 // pred_fallthru
        _
      // Predicated region
      $region17: #{forward.1} parent=11 // pred_check
        %p211 = pneg %p83
      $region18: #{forward.1} parent=11 // pred_check_branch
        %213 = sbr.rel (%p211) target = $region20
      $region19: #{forward.1} parent=11 // pred_region
        _
      $region20: #{forward.1} parent=11 // pred_fallthru
        _
      // Predicated region
      $region21: #{forward.1} parent=11 // pred_check
        %p214 = pneg %p104
      $region22: #{forward.1} parent=11 // pred_check_branch
        %216 = sbr.rel (%p214) target = $region24
      $region23: #{forward.1} parent=11 // pred_region
        _
      $region24: #{forward.1} parent=11 // pred_fallthru
        _
      // Predicated region
      $region25: #{forward.1} parent=11 // pred_check
        %p217 = pneg %p125
      $region26: #{forward.1} parent=11 // pred_check_branch
        %219 = sbr.rel (%p217) target = $region28
      $region27: #{forward.1} parent=11 // pred_region
        _
      $region28: #{forward.1} parent=11 // pred_fallthru
        _
      // Predicated region
      $region29: #{forward.1} parent=11 // pred_check
        %p220 = pneg %p146
      $region30: #{forward.1} parent=11 // pred_check_branch
        %222 = sbr.rel (%p220) target = $region32
      $region31: #{forward.1} parent=11 // pred_region
        _
      $region32: #{forward.1} parent=11 // pred_fallthru
        _
      // Predicated region
      $region33: #{forward.1} parent=11 // pred_check
        %p223 = pneg %p167
      $region34: #{forward.1} parent=11 // pred_check_branch
        %225 = sbr.rel (%p223) target = $region36
      $region35: #{forward.1} parent=11 // pred_region
        _
      $region36: #{forward.1} parent=11 // pred_fallthru
        _
    $region12: #{forward.1} parent=5 // pred_fallthru
      _
    %p226 = scmp.lt.s32.totalorder %s15, 2
    // Predicated region
    $region37: #{forward.1} parent=5 // pred_check
      %p227 = pneg %p226
    $region38: #{forward.1} parent=5 // pred_check_branch
      %229 = sbr.rel (%p227) target = $region40
    $region39: #{forward.1} parent=5 // pred_region
      // Predicated region
      $region41: #{forward.1} parent=39 // pred_check
        %p230 = pneg %p35
      $region42: #{forward.1} parent=39 // pred_check_branch
        %232 = sbr.rel (%p230) target = $region44
      $region43: #{forward.1} parent=39 // pred_region
        %s233 = smul.u32 8, %s15
        %p234 = scmp.lt.s32.totalorder %s233, 15
        %s235 = scalar_select %p234, %s233, 15
        %s236 = smul.addr %s235, 2
        %s237 = smul.addr %s236, 8
        %s238 = scalar_lea.vmem %s0, %s237
        %s239 = smul.u32 8, %s15
      $region44: #{forward.1} parent=39 // pred_fallthru
        _
    $region40: #{forward.1} parent=5 // pred_fallthru
      _
    %p240 = scmp.le.s32.totalorder 1, %s15
    %p241 = scmp.lt.s32.totalorder %s15, 3
    %p242 = pnand %p240, %p241
    %p243 = pneg %p242
    // Predicated region
    $region45: #{forward.1} parent=5 // pred_check
      _
    $region46: #{forward.1} parent=5 // pred_check_branch
      %245 = sbr.rel (%p242) target = $region48
    $region47: #{forward.1} parent=5 // pred_region
      %s246 = ssub.s32 %s15, 1
      %s247 = smul.u32 8, %s20
      %p248 = scmp.lt.s32.totalorder %s247, 15
      %s249 = scalar_select %p248, %s247, 15
      %s250 = smul.addr %s249, 2
      %s251 = smul.addr %s250, 8
      %s252 = scalar_lea.vmem %s0, %s251
      %p253 = pneg %p41
      %p254 = pneg %p38
      %p255 = pneg %p62
      %p256 = pneg %p59
      %p257 = pneg %p83
      %p258 = pneg %p80
      %p259 = pneg %p104
      %p260 = pneg %p101
      %p261 = pneg %p125
      %p262 = pneg %p122
      %p263 = pneg %p146
      %p264 = pneg %p143
      %p265 = pneg %p167
      %p266 = pneg %p164
      %p267 = pneg %p193
      %p268 = pneg %p190
      %p269 = scmp.lt.s32.totalorder %s20, 1
      %s270 = scalar_select %p269, %s20, 1
      %s271 = scalar_lea.vmem %s7, %s270
      %s272 = smul.u32 8, %s20
      %p273 = scmp.lt.s32.totalorder %s272, 15
      %s274 = scalar_select %p273, %s272, 15
      %s275 = smul.addr %s274, 2
      %s276 = smul.addr %s275, 8
      %s277 = scalar_lea.vmem %s0, %s276
      %s278 = smul.u32 8, %s20
      %p279 = scmp.lt.s32.totalorder %s20, 1
      %s280 = scalar_select %p279, %s20, 1
      %s281 = scalar_lea.vmem %s7, %s280
      %vm282 = vcmask 581632
      %283 = vst.msk [vmem:[#allocation2] sm:$0x1] %vm282, 0.0
      %284 = vst.msk [vmem:[#allocation2 + $0x11] sm:$0x1] %vm282, 0.0
      %vm285 = vcmask 31744
      %286 = vst.msk [vmem:[#allocation2 + $0x1] sm:$0xff] %vm285, 0.0
      %287 = vst.msk [vmem:[#allocation2 + $0x9] sm:$0xff] %vm285, 0.0
      %vm288 = vcmask 589344
      %289 = vst.msk [vmem:[#allocation2 + $0x1] sm:$0xff] %vm288, 0.0
      %290 = vst.msk [vmem:[#allocation2 + $0x9] sm:$0xff] %vm288, 0.0
      %vm291 = vcmask 647168
      %292 = vst.msk [vmem:[#allocation3] sm:$0x1] %vm291, 0.0
      %293 = vst.msk [vmem:[#allocation3 + $0x9] sm:$0x1] %vm291, 0.0
      %vm294 = vcmask 64512
      %295 = vst.msk [vmem:[#allocation3 + $0x1] sm:$0xff] %vm294, 0.0
      %vm296 = vcmask 654912
      %297 = vst.msk [vmem:[#allocation3 + $0x1] sm:$0xff] %vm296, 0.0
      %v298 = vld [vmem:[%s5] sm:$0xf]
      %v299 = vld [vmem:[%s2] sm:$0x1]
      %v300 = vld [vmem:[%s4] sm:$0x1]
      %v301 = vld [vmem:[%s277] sm:$0xff]
      %v302 = vld [vmem:[%s277 + $0x8] sm:$0xff]
      %305 = vrot.lane.b32.xlu0 %v301, 4
      %v306 = vpop.permute.xlu0 %305
      %307 = vrot.lane.b32.xlu0 %v302, 4
      %v308 = vpop.permute.xlu0 %307
      %vm311 = vcmask 556064
      %312 = vst.msk [vmem:[#allocation2 + $0x1] sm:$0xff] %vm311, %v306
      %313 = vst.msk [vmem:[#allocation2 + $0x9] sm:$0xff] %vm311, %v308
      %v314 = vld [vmem:[%s1] sm:$0xff]
      %v315 = vld [vmem:[%s1 + $0x8] sm:$0xff]
      %v316 = vld [vmem:[%s1 + $0x10] sm:$0xff]
      %v317 = vld [vmem:[%s1 + $0x18] sm:$0xff]
      %v318 = vld [vmem:[%s1 + $0x20] sm:$0xff]
      %v319 = vld [vmem:[%s1 + $0x28] sm:$0xff]
      %v320 = vld [vmem:[%s1 + $0x30] sm:$0xff]
      %v321 = vld [vmem:[%s1 + $0x38] sm:$0xff]
      %v322 = vld [vmem:[%s1 + $0x40] sm:$0xff]
      %v323 = vld [vmem:[#allocation2] ss:$2 sm:$0xff]
      %s324 = scalar_lea.vmem [#allocation2], 1
      %v325 = vld [vmem:[%s324] ss:$2 sm:$0xff]
      %s326 = scalar_lea.vmem %s1, 72
      %v327 = vld [vmem:[%s326] sm:$0xff]
      %v328 = vld [vmem:[%s326 + $0x8] sm:$0xff]
      %v329 = vld [vmem:[%s326 + $0x10] sm:$0xff]
      %v330 = vld [vmem:[%s326 + $0x18] sm:$0xff]
      %v331 = vld [vmem:[%s326 + $0x20] sm:$0xff]
      %v332 = vld [vmem:[%s326 + $0x28] sm:$0xff]
      %v333 = vld [vmem:[%s326 + $0x30] sm:$0xff]
      %v334 = vld [vmem:[%s326 + $0x38] sm:$0xff]
      %v335 = vld [vmem:[%s326 + $0x40] sm:$0xff]
      %vm336 = vcmask 588800
      %v338 = vsel %vm336, %v325, 0
      %340 = vmatpush.msra.mxu0 0.0
      %341 = vmatpush.msra.mxu0 0.0
      %342 = vmatpush.msra.mxu0 0.0
      %343 = vmatpush.msra.mxu0 0.0
      %344 = vmatpush.msra.mxu0 0.0
      %345 = vmatpush.msra.mxu0 0.0
      %346 = vmatpush.msra.mxu0 0.0
      %347 = vmatpush.msra.mxu0 %v335
      %348 = vmatpush.msra.mxu0 %v334
      %349 = vmatpush.msra.mxu0 %v333
      %350 = vmatpush.msra.mxu0 %v332
      %351 = vmatpush.msra.mxu0 %v331
      %352 = vmatpush.msra.mxu0 %v330
      %353 = vmatpush.msra.mxu0 %v329
      %354 = vmatpush.msra.mxu0 %v328
      %355 = vmatpush.msra.mxu0 %v327
      %356 = vmatmul.f32.gmra.mxu0 %v338
      %v357 = vpop.f32.mrf.mxu0
      %v358 = vadd.f32 0.0, %v357
      %359 = vdwg.mxu0
      %s360 = scalar_lea.vmem [#allocation2], 2
      %v361 = vld [vmem:[%s360] ss:$2 sm:$0xff]
      %v363 = vsel %vm336, %v361, 0
      %365 = vmatpush.msra.mxu0 0.0
      %366 = vmatpush.msra.mxu0 0.0
      %367 = vmatpush.msra.mxu0 0.0
      %368 = vmatpush.msra.mxu0 0.0
      %369 = vmatpush.msra.mxu0 0.0
      %370 = vmatpush.msra.mxu0 0.0
      %371 = vmatpush.msra.mxu0 0.0
      %372 = vmatpush.msra.mxu0 %v335
      %373 = vmatpush.msra.mxu0 %v334
      %374 = vmatpush.msra.mxu0 %v333
      %375 = vmatpush.msra.mxu0 %v332
      %376 = vmatpush.msra.mxu0 %v331
      %377 = vmatpush.msra.mxu0 %v330
      %378 = vmatpush.msra.mxu0 %v329
      %379 = vmatpush.msra.mxu0 %v328
      %380 = vmatpush.msra.mxu0 %v327
      %381 = vmatmul.f32.gmra.mxu0 %v363
      %v382 = vpop.f32.mrf.mxu0
      %v383 = vadd.f32 0.0, %v382
      %384 = vdwg.mxu0
      %v386 = vsel %vm336, %v323, 0
      %388 = vmatpush.msra.mxu0 0.0
      %389 = vmatpush.msra.mxu0 0.0
      %390 = vmatpush.msra.mxu0 0.0
      %391 = vmatpush.msra.mxu0 0.0
      %392 = vmatpush.msra.mxu0 0.0
      %393 = vmatpush.msra.mxu0 0.0
      %394 = vmatpush.msra.mxu0 0.0
      %395 = vmatpush.msra.mxu0 %v322
      %396 = vmatpush.msra.mxu0 %v321
      %397 = vmatpush.msra.mxu0 %v320
      %398 = vmatpush.msra.mxu0 %v319
      %399 = vmatpush.msra.mxu0 %v318
      %400 = vmatpush.msra.mxu0 %v317
      %401 = vmatpush.msra.mxu0 %v316
      %402 = vmatpush.msra.mxu0 %v315
      %403 = vmatpush.msra.mxu0 %v314
      %404 = vmatmul.f32.gmra.mxu0 %v386
      %v405 = vpop.f32.mrf.mxu0
      %v406 = vadd.f32 %v358, %v405
      %407 = vdwg.mxu0
      %408 = vmatpush.msra.mxu0 0.0
      %409 = vmatpush.msra.mxu0 0.0
      %410 = vmatpush.msra.mxu0 0.0
      %411 = vmatpush.msra.mxu0 0.0
      %412 = vmatpush.msra.mxu0 0.0
      %413 = vmatpush.msra.mxu0 0.0
      %414 = vmatpush.msra.mxu0 0.0
      %415 = vmatpush.msra.mxu0 %v322
      %416 = vmatpush.msra.mxu0 %v321
      %417 = vmatpush.msra.mxu0 %v320
      %418 = vmatpush.msra.mxu0 %v319
      %419 = vmatpush.msra.mxu0 %v318
      %420 = vmatpush.msra.mxu0 %v317
      %421 = vmatpush.msra.mxu0 %v316
      %422 = vmatpush.msra.mxu0 %v315
      %423 = vmatpush.msra.mxu0 %v314
      %424 = vmatmul.f32.gmra.mxu0 %v338
      %v425 = vpop.f32.mrf.mxu0
      %v426 = vadd.f32 %v383, %v425
      %427 = vdwg.mxu0
      %s428 = scalar_lea.vmem %s1, 144
      %v429 = vld [vmem:[%s428] sm:$0xff]
      %v430 = vld [vmem:[%s428 + $0x8] sm:$0xff]
      %v431 = vld [vmem:[%s428 + $0x10] sm:$0xff]
      %v432 = vld [vmem:[%s428 + $0x18] sm:$0xff]
      %v433 = vld [vmem:[%s428 + $0x20] sm:$0xff]
      %v434 = vld [vmem:[%s428 + $0x28] sm:$0xff]
      %v435 = vld [vmem:[%s428 + $0x30] sm:$0xff]
      %v436 = vld [vmem:[%s428 + $0x38] sm:$0xff]
      %v437 = vld [vmem:[%s428 + $0x40] sm:$0xff]
      %438 = vmatpush.msra.mxu0 0.0
      %439 = vmatpush.msra.mxu0 0.0
      %440 = vmatpush.msra.mxu0 0.0
      %441 = vmatpush.msra.mxu0 0.0
      %442 = vmatpush.msra.mxu0 0.0
      %443 = vmatpush.msra.mxu0 0.0
      %444 = vmatpush.msra.mxu0 0.0
      %445 = vmatpush.msra.mxu0 %v437
      %446 = vmatpush.msra.mxu0 %v436
      %447 = vmatpush.msra.mxu0 %v435
      %448 = vmatpush.msra.mxu0 %v434
      %449 = vmatpush.msra.mxu0 %v433
      %450 = vmatpush.msra.mxu0 %v432
      %451 = vmatpush.msra.mxu0 %v431
      %452 = vmatpush.msra.mxu0 %v430
      %453 = vmatpush.msra.mxu0 %v429
      %454 = vmatmul.f32.gmra.mxu0 %v363
      %v455 = vpop.f32.mrf.mxu0
      %v456 = vadd.f32 0.0, %v455
      %457 = vdwg.mxu0
      %s458 = scalar_lea.vmem [#allocation2], 3
      %v459 = vld [vmem:[%s458] ss:$2 sm:$0xff]
      %v461 = vsel %vm336, %v459, 0
      %463 = vmatpush.msra.mxu0 0.0
      %464 = vmatpush.msra.mxu0 0.0
      %465 = vmatpush.msra.mxu0 0.0
      %466 = vmatpush.msra.mxu0 0.0
      %467 = vmatpush.msra.mxu0 0.0
      %468 = vmatpush.msra.mxu0 0.0
      %469 = vmatpush.msra.mxu0 0.0
      %470 = vmatpush.msra.mxu0 %v437
      %471 = vmatpush.msra.mxu0 %v436
      %472 = vmatpush.msra.mxu0 %v435
      %473 = vmatpush.msra.mxu0 %v434
      %474 = vmatpush.msra.mxu0 %v433
      %475 = vmatpush.msra.mxu0 %v432
      %476 = vmatpush.msra.mxu0 %v431
      %477 = vmatpush.msra.mxu0 %v430
      %478 = vmatpush.msra.mxu0 %v429
      %479 = vmatmul.f32.gmra.mxu0 %v461
      %v480 = vpop.f32.mrf.mxu0
      %v481 = vadd.f32 0.0, %v480
      %482 = vdwg.mxu0
      %v483 = vadd.f32 %v406, %v456
      %v484 = vadd.f32 %v426, %v481
      %v485 = vmax.f32 %v483, %v484
      %487 = vrot.lane.b32.xlu0 %v485, 64
      %v488 = vpop.permute.xlu0 %487
      %v490 = vmax.f32 %v485, %v488
      %v492 = vperm.slane %v299, 0
      %v494 = vadd.f32 %v490, %v492
      %v495 = vmax.f32 %v494, 0.0
      %497 = vrot.lane.b32.xlu0 %v495, 8
      %v498 = vpop.permute.xlu0 %497
      %vm500 = vcmask 588864
      %501 = vst.msk [vmem:[#allocation3 + $0x1] sm:$0xff] %vm500, %v498
      %v502 = vld [vmem:[%s3] sm:$0xff]
      %v503 = vld [vmem:[%s3 + $0x8] sm:$0xff]
      %v504 = vld [vmem:[%s3 + $0x10] sm:$0xff]
      %v505 = vld [vmem:[%s3 + $0x18] sm:$0xff]
      %v506 = vld [vmem:[%s3 + $0x20] sm:$0xff]
      %v507 = vld [vmem:[%s3 + $0x28] sm:$0xff]
      %v508 = vld [vmem:[%s3 + $0x30] sm:$0xff]
      %v509 = vld [vmem:[%s3 + $0x38] sm:$0xff]
      %v510 = vld [vmem:[%s3 + $0x40] sm:$0xff]
      %v511 = vld [vmem:[%s3 + $0x48] sm:$0xff]
      %v512 = vld [vmem:[#allocation3] ss:$2 sm:$0xf]
      %s513 = scalar_lea.vmem [#allocation3], 1
      %v514 = vld [vmem:[%s513] ss:$2 sm:$0xf]
      %s515 = scalar_lea.vmem %s3, 80
      %v516 = vld [vmem:[%s515] sm:$0xff]
      %v517 = vld [vmem:[%s515 + $0x8] sm:$0xff]
      %v518 = vld [vmem:[%s515 + $0x10] sm:$0xff]
      %v519 = vld [vmem:[%s515 + $0x18] sm:$0xff]
      %v520 = vld [vmem:[%s515 + $0x20] sm:$0xff]
      %v521 = vld [vmem:[%s515 + $0x28] sm:$0xff]
      %v522 = vld [vmem:[%s515 + $0x30] sm:$0xff]
      %v523 = vld [vmem:[%s515 + $0x38] sm:$0xff]
      %v524 = vld [vmem:[%s515 + $0x40] sm:$0xff]
      %v525 = vld [vmem:[%s515 + $0x48] sm:$0xff]
      %vm526 = vcmask 654336
      %v528 = vsel %vm526, %v514, 0
      %530 = vmatpush.msra.mxu0 0.0
      %531 = vmatpush.msra.mxu0 0.0
      %532 = vmatpush.msra.mxu0 0.0
      %533 = vmatpush.msra.mxu0 0.0
      %534 = vmatpush.msra.mxu0 0.0
      %535 = vmatpush.msra.mxu0 0.0
      %536 = vmatpush.msra.mxu0 %v525
      %537 = vmatpush.msra.mxu0 %v524
      %538 = vmatpush.msra.mxu0 %v523
      %539 = vmatpush.msra.mxu0 %v522
      %540 = vmatpush.msra.mxu0 %v521
      %541 = vmatpush.msra.mxu0 %v520
      %542 = vmatpush.msra.mxu0 %v519
      %543 = vmatpush.msra.mxu0 %v518
      %544 = vmatpush.msra.mxu0 %v517
      %545 = vmatpush.msra.mxu0 %v516
      %546 = vmatmul.f32.gmra.mxu0 %v528
      %v547 = vpop.f32.mrf.mxu0
      %v548 = vadd.f32 0.0, %v547
      %549 = vdwg.mxu0
      %s550 = scalar_lea.vmem [#allocation3], 2
      %v551 = vld [vmem:[%s550] ss:$2 sm:$0xf]
      %v553 = vsel %vm526, %v551, 0
      %555 = vmatpush.msra.mxu0 0.0
      %556 = vmatpush.msra.mxu0 0.0
      %557 = vmatpush.msra.mxu0 0.0
      %558 = vmatpush.msra.mxu0 0.0
      %559 = vmatpush.msra.mxu0 0.0
      %560 = vmatpush.msra.mxu0 0.0
      %561 = vmatpush.msra.mxu0 %v525
      %562 = vmatpush.msra.mxu0 %v524
      %563 = vmatpush.msra.mxu0 %v523
      %564 = vmatpush.msra.mxu0 %v522
      %565 = vmatpush.msra.mxu0 %v521
      %566 = vmatpush.msra.mxu0 %v520
      %567 = vmatpush.msra.mxu0 %v519
      %568 = vmatpush.msra.mxu0 %v518
      %569 = vmatpush.msra.mxu0 %v517
      %570 = vmatpush.msra.mxu0 %v516
      %571 = vmatmul.f32.gmra.mxu0 %v553
      %v572 = vpop.f32.mrf.mxu0
      %v573 = vadd.f32 0.0, %v572
      %574 = vdwg.mxu0
      %v576 = vsel %vm526, %v512, 0
      %578 = vmatpush.msra.mxu0 0.0
      %579 = vmatpush.msra.mxu0 0.0
      %580 = vmatpush.msra.mxu0 0.0
      %581 = vmatpush.msra.mxu0 0.0
      %582 = vmatpush.msra.mxu0 0.0
      %583 = vmatpush.msra.mxu0 0.0
      %584 = vmatpush.msra.mxu0 %v511
      %585 = vmatpush.msra.mxu0 %v510
      %586 = vmatpush.msra.mxu0 %v509
      %587 = vmatpush.msra.mxu0 %v508
      %588 = vmatpush.msra.mxu0 %v507
      %589 = vmatpush.msra.mxu0 %v506
      %590 = vmatpush.msra.mxu0 %v505
      %591 = vmatpush.msra.mxu0 %v504
      %592 = vmatpush.msra.mxu0 %v503
      %593 = vmatpush.msra.mxu0 %v502
      %594 = vmatmul.f32.gmra.mxu0 %v576
      %v595 = vpop.f32.mrf.mxu0
      %v596 = vadd.f32 %v548, %v595
      %597 = vdwg.mxu0
      %598 = vmatpush.msra.mxu0 0.0
      %599 = vmatpush.msra.mxu0 0.0
      %600 = vmatpush.msra.mxu0 0.0
      %601 = vmatpush.msra.mxu0 0.0
      %602 = vmatpush.msra.mxu0 0.0
      %603 = vmatpush.msra.mxu0 0.0
      %604 = vmatpush.msra.mxu0 %v511
      %605 = vmatpush.msra.mxu0 %v510
      %606 = vmatpush.msra.mxu0 %v509
      %607 = vmatpush.msra.mxu0 %v508
      %608 = vmatpush.msra.mxu0 %v507
      %609 = vmatpush.msra.mxu0 %v506
      %610 = vmatpush.msra.mxu0 %v505
      %611 = vmatpush.msra.mxu0 %v504
      %612 = vmatpush.msra.mxu0 %v503
      %613 = vmatpush.msra.mxu0 %v502
      %614 = vmatmul.f32.gmra.mxu0 %v528
      %v615 = vpop.f32.mrf.mxu0
      %v616 = vadd.f32 %v573, %v615
      %617 = vdwg.mxu0
      %s618 = scalar_lea.vmem %s3, 160
      %v619 = vld [vmem:[%s618] sm:$0xff]
      %v620 = vld [vmem:[%s618 + $0x8] sm:$0xff]
      %v621 = vld [vmem:[%s618 + $0x10] sm:$0xff]
      %v622 = vld [vmem:[%s618 + $0x18] sm:$0xff]
      %v623 = vld [vmem:[%s618 + $0x20] sm:$0xff]
      %v624 = vld [vmem:[%s618 + $0x28] sm:$0xff]
      %v625 = vld [vmem:[%s618 + $0x30] sm:$0xff]
      %v626 = vld [vmem:[%s618 + $0x38] sm:$0xff]
      %v627 = vld [vmem:[%s618 + $0x40] sm:$0xff]
      %v628 = vld [vmem:[%s618 + $0x48] sm:$0xff]
      %629 = vmatpush.msra.mxu0 0.0
      %630 = vmatpush.msra.mxu0 0.0
      %631 = vmatpush.msra.mxu0 0.0
      %632 = vmatpush.msra.mxu0 0.0
      %633 = vmatpush.msra.mxu0 0.0
      %634 = vmatpush.msra.mxu0 0.0
      %635 = vmatpush.msra.mxu0 %v628
      %636 = vmatpush.msra.mxu0 %v627
      %637 = vmatpush.msra.mxu0 %v626
      %638 = vmatpush.msra.mxu0 %v625
      %639 = vmatpush.msra.mxu0 %v624
      %640 = vmatpush.msra.mxu0 %v623
      %641 = vmatpush.msra.mxu0 %v622
      %642 = vmatpush.msra.mxu0 %v621
      %643 = vmatpush.msra.mxu0 %v620
      %644 = vmatpush.msra.mxu0 %v619
      %645 = vmatmul.f32.gmra.mxu0 %v553
      %v646 = vpop.f32.mrf.mxu0
      %v647 = vadd.f32 0.0, %v646
      %648 = vdwg.mxu0
      %s649 = scalar_lea.vmem [#allocation3], 3
      %v650 = vld [vmem:[%s649] ss:$2 sm:$0xf]
      %v652 = vsel %vm526, %v650, 0
      %654 = vmatpush.msra.mxu0 0.0
      %655 = vmatpush.msra.mxu0 0.0
      %656 = vmatpush.msra.mxu0 0.0
      %657 = vmatpush.msra.mxu0 0.0
      %658 = vmatpush.msra.mxu0 0.0
      %659 = vmatpush.msra.mxu0 0.0
      %660 = vmatpush.msra.mxu0 %v628
      %661 = vmatpush.msra.mxu0 %v627
      %662 = vmatpush.msra.mxu0 %v626
      %663 = vmatpush.msra.mxu0 %v625
      %664 = vmatpush.msra.mxu0 %v624
      %665 = vmatpush.msra.mxu0 %v623
      %666 = vmatpush.msra.mxu0 %v622
      %667 = vmatpush.msra.mxu0 %v621
      %668 = vmatpush.msra.mxu0 %v620
      %669 = vmatpush.msra.mxu0 %v619
      %670 = vmatmul.f32.gmra.mxu0 %v652
      %v671 = vpop.f32.mrf.mxu0
      %v672 = vadd.f32 0.0, %v671
      %673 = vdwg.mxu0
      %v674 = vadd.f32 %v596, %v647
      %v675 = vadd.f32 %v616, %v672
      %v676 = vmax.f32 %v674, %v675
      %678 = vrot.lane.b32.xlu0 %v676, 64
      %v679 = vpop.permute.xlu0 %678
      %v681 = vmax.f32 %v676, %v679
      %v683 = vperm.slane %v300, 0
      %v685 = vadd.f32 %v681, %v683
      %v686 = vmax.f32 %v685, 0.0
      %v687 = vmul.f32 %v686, %v298
      %vm688 = vcmask 519168
      %v689 = vsel %vm688, %v687, 0.0
      %690 = vadd.xlane.f32.xlu0 %v689
      %v691 = vpop.xlane.xlu0 %690
      %v692 = vrot.slane %v691, 4
      %v693 = vadd.f32 %v691, %v692
      %v694 = vrot.slane %v693, 2
      %v695 = vadd.f32 %v693, %v694
      %v696 = vrot.slane %v695, 1
      %v697 = vadd.f32 %v695, %v696
      %s698 = vtos %v697
      %v699 = vstv %s698
      %s700 = scalar_lea.vmem %s277, 16
      %v701 = vld [vmem:[%s700] sm:$0xff]
      %v702 = vld [vmem:[%s700 + $0x8] sm:$0xff]
      %705 = vrot.lane.b32.xlu0 %v701, 4
      %v706 = vpop.permute.xlu0 %705
      %707 = vrot.lane.b32.xlu0 %v702, 4
      %v708 = vpop.permute.xlu0 %707
      %711 = vst.msk [vmem:[#allocation2 + $0x1] sm:$0xff] %vm311, %v706
      %712 = vst.msk [vmem:[#allocation2 + $0x9] sm:$0xff] %vm311, %v708
      %v713 = vld [vmem:[%s1] sm:$0xff]
      %v714 = vld [vmem:[%s1 + $0x8] sm:$0xff]
      %v715 = vld [vmem:[%s1 + $0x10] sm:$0xff]
      %v716 = vld [vmem:[%s1 + $0x18] sm:$0xff]
      %v717 = vld [vmem:[%s1 + $0x20] sm:$0xff]
      %v718 = vld [vmem:[%s1 + $0x28] sm:$0xff]
      %v719 = vld [vmem:[%s1 + $0x30] sm:$0xff]
      %v720 = vld [vmem:[%s1 + $0x38] sm:$0xff]
      %v721 = vld [vmem:[%s1 + $0x40] sm:$0xff]
      %v722 = vld [vmem:[#allocation2] ss:$2 sm:$0xff]
      %v723 = vld [vmem:[%s324] ss:$2 sm:$0xff]
      %v724 = vld [vmem:[%s326] sm:$0xff]
      %v725 = vld [vmem:[%s326 + $0x8] sm:$0xff]
      %v726 = vld [vmem:[%s326 + $0x10] sm:$0xff]
      %v727 = vld [vmem:[%s326 + $0x18] sm:$0xff]
      %v728 = vld [vmem:[%s326 + $0x20] sm:$0xff]
      %v729 = vld [vmem:[%s326 + $0x28] sm:$0xff]
      %v730 = vld [vmem:[%s326 + $0x30] sm:$0xff]
      %v731 = vld [vmem:[%s326 + $0x38] sm:$0xff]
      %v732 = vld [vmem:[%s326 + $0x40] sm:$0xff]
      %v734 = vsel %vm336, %v723, 0
      %736 = vmatpush.msra.mxu0 0.0
      %737 = vmatpush.msra.mxu0 0.0
      %738 = vmatpush.msra.mxu0 0.0
      %739 = vmatpush.msra.mxu0 0.0
      %740 = vmatpush.msra.mxu0 0.0
      %741 = vmatpush.msra.mxu0 0.0
      %742 = vmatpush.msra.mxu0 0.0
      %743 = vmatpush.msra.mxu0 %v732
      %744 = vmatpush.msra.mxu0 %v731
      %745 = vmatpush.msra.mxu0 %v730
      %746 = vmatpush.msra.mxu0 %v729
      %747 = vmatpush.msra.mxu0 %v728
      %748 = vmatpush.msra.mxu0 %v727
      %749 = vmatpush.msra.mxu0 %v726
      %750 = vmatpush.msra.mxu0 %v725
      %751 = vmatpush.msra.mxu0 %v724
      %752 = vmatmul.f32.gmra.mxu0 %v734
      %v753 = vpop.f32.mrf.mxu0
      %v754 = vadd.f32 0.0, %v753
      %755 = vdwg.mxu0
      %v756 = vld [vmem:[%s360] ss:$2 sm:$0xff]
      %v758 = vsel %vm336, %v756, 0
      %760 = vmatpush.msra.mxu0 0.0
      %761 = vmatpush.msra.mxu0 0.0
      %762 = vmatpush.msra.mxu0 0.0
      %763 = vmatpush.msra.mxu0 0.0
      %764 = vmatpush.msra.mxu0 0.0
      %765 = vmatpush.msra.mxu0 0.0
      %766 = vmatpush.msra.mxu0 0.0
      %767 = vmatpush.msra.mxu0 %v732
      %768 = vmatpush.msra.mxu0 %v731
      %769 = vmatpush.msra.mxu0 %v730
      %770 = vmatpush.msra.mxu0 %v729
      %771 = vmatpush.msra.mxu0 %v728
      %772 = vmatpush.msra.mxu0 %v727
      %773 = vmatpush.msra.mxu0 %v726
      %774 = vmatpush.msra.mxu0 %v725
      %775 = vmatpush.msra.mxu0 %v724
      %776 = vmatmul.f32.gmra.mxu0 %v758
      %v777 = vpop.f32.mrf.mxu0
      %v778 = vadd.f32 0.0, %v777
      %779 = vdwg.mxu0
      %v781 = vsel %vm336, %v722, 0
      %783 = vmatpush.msra.mxu0 0.0
      %784 = vmatpush.msra.mxu0 0.0
      %785 = vmatpush.msra.mxu0 0.0
      %786 = vmatpush.msra.mxu0 0.0
      %787 = vmatpush.msra.mxu0 0.0
      %788 = vmatpush.msra.mxu0 0.0
      %789 = vmatpush.msra.mxu0 0.0
      %790 = vmatpush.msra.mxu0 %v721
      %791 = vmatpush.msra.mxu0 %v720
      %792 = vmatpush.msra.mxu0 %v719
      %793 = vmatpush.msra.mxu0 %v718
      %794 = vmatpush.msra.mxu0 %v717
      %795 = vmatpush.msra.mxu0 %v716
      %796 = vmatpush.msra.mxu0 %v715
      %797 = vmatpush.msra.mxu0 %v714
      %798 = vmatpush.msra.mxu0 %v713
      %799 = vmatmul.f32.gmra.mxu0 %v781
      %v800 = vpop.f32.mrf.mxu0
      %v801 = vadd.f32 %v754, %v800
      %802 = vdwg.mxu0
      %803 = vmatpush.msra.mxu0 0.0
      %804 = vmatpush.msra.mxu0 0.0
      %805 = vmatpush.msra.mxu0 0.0
      %806 = vmatpush.msra.mxu0 0.0
      %807 = vmatpush.msra.mxu0 0.0
      %808 = vmatpush.msra.mxu0 0.0
      %809 = vmatpush.msra.mxu0 0.0
      %810 = vmatpush.msra.mxu0 %v721
      %811 = vmatpush.msra.mxu0 %v720
      %812 = vmatpush.msra.mxu0 %v719
      %813 = vmatpush.msra.mxu0 %v718
      %814 = vmatpush.msra.mxu0 %v717
      %815 = vmatpush.msra.mxu0 %v716
      %816 = vmatpush.msra.mxu0 %v715
      %817 = vmatpush.msra.mxu0 %v714
      %818 = vmatpush.msra.mxu0 %v713
      %819 = vmatmul.f32.gmra.mxu0 %v734
      %v820 = vpop.f32.mrf.mxu0
      %v821 = vadd.f32 %v778, %v820
      %822 = vdwg.mxu0
      %v823 = vld [vmem:[%s428] sm:$0xff]
      %v824 = vld [vmem:[%s428 + $0x8] sm:$0xff]
      %v825 = vld [vmem:[%s428 + $0x10] sm:$0xff]
      %v826 = vld [vmem:[%s428 + $0x18] sm:$0xff]
      %v827 = vld [vmem:[%s428 + $0x20] sm:$0xff]
      %v828 = vld [vmem:[%s428 + $0x28] sm:$0xff]
      %v829 = vld [vmem:[%s428 + $0x30] sm:$0xff]
      %v830 = vld [vmem:[%s428 + $0x38] sm:$0xff]
      %v831 = vld [vmem:[%s428 + $0x40] sm:$0xff]
      %832 = vmatpush.msra.mxu0 0.0
      %833 = vmatpush.msra.mxu0 0.0
      %834 = vmatpush.msra.mxu0 0.0
      %835 = vmatpush.msra.mxu0 0.0
      %836 = vmatpush.msra.mxu0 0.0
      %837 = vmatpush.msra.mxu0 0.0
      %838 = vmatpush.msra.mxu0 0.0
      %839 = vmatpush.msra.mxu0 %v831
      %840 = vmatpush.msra.mxu0 %v830
      %841 = vmatpush.msra.mxu0 %v829
      %842 = vmatpush.msra.mxu0 %v828
      %843 = vmatpush.msra.mxu0 %v827
      %844 = vmatpush.msra.mxu0 %v826
      %845 = vmatpush.msra.mxu0 %v825
      %846 = vmatpush.msra.mxu0 %v824
      %847 = vmatpush.msra.mxu0 %v823
      %848 = vmatmul.f32.gmra.mxu0 %v758
      %v849 = vpop.f32.mrf.mxu0
      %v850 = vadd.f32 0.0, %v849
      %851 = vdwg.mxu0
      %v852 = vld [vmem:[%s458] ss:$2 sm:$0xff]
      %v854 = vsel %vm336, %v852, 0
      %856 = vmatpush.msra.mxu0 0.0
      %857 = vmatpush.msra.mxu0 0.0
      %858 = vmatpush.msra.mxu0 0.0
      %859 = vmatpush.msra.mxu0 0.0
      %860 = vmatpush.msra.mxu0 0.0
      %861 = vmatpush.msra.mxu0 0.0
      %862 = vmatpush.msra.mxu0 0.0
      %863 = vmatpush.msra.mxu0 %v831
      %864 = vmatpush.msra.mxu0 %v830
      %865 = vmatpush.msra.mxu0 %v829
      %866 = vmatpush.msra.mxu0 %v828
      %867 = vmatpush.msra.mxu0 %v827
      %868 = vmatpush.msra.mxu0 %v826
      %869 = vmatpush.msra.mxu0 %v825
      %870 = vmatpush.msra.mxu0 %v824
      %871 = vmatpush.msra.mxu0 %v823
      %872 = vmatmul.f32.gmra.mxu0 %v854
      %v873 = vpop.f32.mrf.mxu0
      %v874 = vadd.f32 0.0, %v873
      %875 = vdwg.mxu0
      %v876 = vadd.f32 %v801, %v850
      %v877 = vadd.f32 %v821, %v874
      %v878 = vmax.f32 %v876, %v877
      %880 = vrot.lane.b32.xlu0 %v878, 64
      %v881 = vpop.permute.xlu0 %880
      %v883 = vmax.f32 %v878, %v881
      %v884 = vadd.f32 %v883, %v492
      %v885 = vmax.f32 %v884, 0.0
      %887 = vrot.lane.b32.xlu0 %v885, 8
      %v888 = vpop.permute.xlu0 %887
      %890 = vst.msk [vmem:[#allocation3 + $0x1] sm:$0xff] %vm500, %v888
      %v891 = vld [vmem:[%s3] sm:$0xff]
      %v892 = vld [vmem:[%s3 + $0x8] sm:$0xff]
      %v893 = vld [vmem:[%s3 + $0x10] sm:$0xff]
      %v894 = vld [vmem:[%s3 + $0x18] sm:$0xff]
      %v895 = vld [vmem:[%s3 + $0x20] sm:$0xff]
      %v896 = vld [vmem:[%s3 + $0x28] sm:$0xff]
      %v897 = vld [vmem:[%s3 + $0x30] sm:$0xff]
      %v898 = vld [vmem:[%s3 + $0x38] sm:$0xff]
      %v899 = vld [vmem:[%s3 + $0x40] sm:$0xff]
      %v900 = vld [vmem:[%s3 + $0x48] sm:$0xff]
      %v901 = vld [vmem:[#allocation3] ss:$2 sm:$0xf]
      %v902 = vld [vmem:[%s513] ss:$2 sm:$0xf]
      %v903 = vld [vmem:[%s515] sm:$0xff]
      %v904 = vld [vmem:[%s515 + $0x8] sm:$0xff]
      %v905 = vld [vmem:[%s515 + $0x10] sm:$0xff]
      %v906 = vld [vmem:[%s515 + $0x18] sm:$0xff]
      %v907 = vld [vmem:[%s515 + $0x20] sm:$0xff]
      %v908 = vld [vmem:[%s515 + $0x28] sm:$0xff]
      %v909 = vld [vmem:[%s515 + $0x30] sm:$0xff]
      %v910 = vld [vmem:[%s515 + $0x38] sm:$0xff]
      %v911 = vld [vmem:[%s515 + $0x40] sm:$0xff]
      %v912 = vld [vmem:[%s515 + $0x48] sm:$0xff]
      %v914 = vsel %vm526, %v902, 0
      %916 = vmatpush.msra.mxu0 0.0
      %917 = vmatpush.msra.mxu0 0.0
      %918 = vmatpush.msra.mxu0 0.0
      %919 = vmatpush.msra.mxu0 0.0
      %920 = vmatpush.msra.mxu0 0.0
      %921 = vmatpush.msra.mxu0 0.0
      %922 = vmatpush.msra.mxu0 %v912
      %923 = vmatpush.msra.mxu0 %v911
      %924 = vmatpush.msra.mxu0 %v910
      %925 = vmatpush.msra.mxu0 %v909
      %926 = vmatpush.msra.mxu0 %v908
      %927 = vmatpush.msra.mxu0 %v907
      %928 = vmatpush.msra.mxu0 %v906
      %929 = vmatpush.msra.mxu0 %v905
      %930 = vmatpush.msra.mxu0 %v904
      %931 = vmatpush.msra.mxu0 %v903
      %932 = vmatmul.f32.gmra.mxu0 %v914
      %v933 = vpop.f32.mrf.mxu0
      %v934 = vadd.f32 0.0, %v933
      %935 = vdwg.mxu0
      %v936 = vld [vmem:[%s550] ss:$2 sm:$0xf]
      %v938 = vsel %vm526, %v936, 0
      %940 = vmatpush.msra.mxu0 0.0
      %941 = vmatpush.msra.mxu0 0.0
      %942 = vmatpush.msra.mxu0 0.0
      %943 = vmatpush.msra.mxu0 0.0
      %944 = vmatpush.msra.mxu0 0.0
      %945 = vmatpush.msra.mxu0 0.0
      %946 = vmatpush.msra.mxu0 %v912
      %947 = vmatpush.msra.mxu0 %v911
      %948 = vmatpush.msra.mxu0 %v910
      %949 = vmatpush.msra.mxu0 %v909
      %950 = vmatpush.msra.mxu0 %v908
      %951 = vmatpush.msra.mxu0 %v907
      %952 = vmatpush.msra.mxu0 %v906
      %953 = vmatpush.msra.mxu0 %v905
      %954 = vmatpush.msra.mxu0 %v904
      %955 = vmatpush.msra.mxu0 %v903
      %956 = vmatmul.f32.gmra.mxu0 %v938
      %v957 = vpop.f32.mrf.mxu0
      %v958 = vadd.f32 0.0, %v957
      %959 = vdwg.mxu0
      %v961 = vsel %vm526, %v901, 0
      %963 = vmatpush.msra.mxu0 0.0
      %964 = vmatpush.msra.mxu0 0.0
      %965 = vmatpush.msra.mxu0 0.0
      %966 = vmatpush.msra.mxu0 0.0
      %967 = vmatpush.msra.mxu0 0.0
      %968 = vmatpush.msra.mxu0 0.0
      %969 = vmatpush.msra.mxu0 %v900
      %970 = vmatpush.msra.mxu0 %v899
      %971 = vmatpush.msra.mxu0 %v898
      %972 = vmatpush.msra.mxu0 %v897
      %973 = vmatpush.msra.mxu0 %v896
      %974 = vmatpush.msra.mxu0 %v895
      %975 = vmatpush.msra.mxu0 %v894
      %976 = vmatpush.msra.mxu0 %v893
      %977 = vmatpush.msra.mxu0 %v892
      %978 = vmatpush.msra.mxu0 %v891
      %979 = vmatmul.f32.gmra.mxu0 %v961
      %v980 = vpop.f32.mrf.mxu0
      %v981 = vadd.f32 %v934, %v980
      %982 = vdwg.mxu0
      %983 = vmatpush.msra.mxu0 0.0
      %984 = vmatpush.msra.mxu0 0.0
      %985 = vmatpush.msra.mxu0 0.0
      %986 = vmatpush.msra.mxu0 0.0
      %987 = vmatpush.msra.mxu0 0.0
      %988 = vmatpush.msra.mxu0 0.0
      %989 = vmatpush.msra.mxu0 %v900
      %990 = vmatpush.msra.mxu0 %v899
      %991 = vmatpush.msra.mxu0 %v898
      %992 = vmatpush.msra.mxu0 %v897
      %993 = vmatpush.msra.mxu0 %v896
      %994 = vmatpush.msra.mxu0 %v895
      %995 = vmatpush.msra.mxu0 %v894
      %996 = vmatpush.msra.mxu0 %v893
      %997 = vmatpush.msra.mxu0 %v892
      %998 = vmatpush.msra.mxu0 %v891
      %999 = vmatmul.f32.gmra.mxu0 %v914
      %v1000 = vpop.f32.mrf.mxu0
      %v1001 = vadd.f32 %v958, %v1000
      %1002 = vdwg.mxu0
      %v1003 = vld [vmem:[%s618] sm:$0xff]
      %v1004 = vld [vmem:[%s618 + $0x8] sm:$0xff]
      %v1005 = vld [vmem:[%s618 + $0x10] sm:$0xff]
      %v1006 = vld [vmem:[%s618 + $0x18] sm:$0xff]
      %v1007 = vld [vmem:[%s618 + $0x20] sm:$0xff]
      %v1008 = vld [vmem:[%s618 + $0x28] sm:$0xff]
      %v1009 = vld [vmem:[%s618 + $0x30] sm:$0xff]
      %v1010 = vld [vmem:[%s618 + $0x38] sm:$0xff]
      %v1011 = vld [vmem:[%s618 + $0x40] sm:$0xff]
      %v1012 = vld [vmem:[%s618 + $0x48] sm:$0xff]
      %1013 = vmatpush.msra.mxu0 0.0
      %1014 = vmatpush.msra.mxu0 0.0
      %1015 = vmatpush.msra.mxu0 0.0
      %1016 = vmatpush.msra.mxu0 0.0
      %1017 = vmatpush.msra.mxu0 0.0
      %1018 = vmatpush.msra.mxu0 0.0
      %1019 = vmatpush.msra.mxu0 %v1012
      %1020 = vmatpush.msra.mxu0 %v1011
      %1021 = vmatpush.msra.mxu0 %v1010
      %1022 = vmatpush.msra.mxu0 %v1009
      %1023 = vmatpush.msra.mxu0 %v1008
      %1024 = vmatpush.msra.mxu0 %v1007
      %1025 = vmatpush.msra.mxu0 %v1006
      %1026 = vmatpush.msra.mxu0 %v1005
      %1027 = vmatpush.msra.mxu0 %v1004
      %1028 = vmatpush.msra.mxu0 %v1003
      %1029 = vmatmul.f32.gmra.mxu0 %v938
      %v1030 = vpop.f32.mrf.mxu0
      %v1031 = vadd.f32 0.0, %v1030
      %1032 = vdwg.mxu0
      %v1033 = vld [vmem:[%s649] ss:$2 sm:$0xf]
      %v1035 = vsel %vm526, %v1033, 0
      %1037 = vmatpush.msra.mxu0 0.0
      %1038 = vmatpush.msra.mxu0 0.0
      %1039 = vmatpush.msra.mxu0 0.0
      %1040 = vmatpush.msra.mxu0 0.0
      %1041 = vmatpush.msra.mxu0 0.0
      %1042 = vmatpush.msra.mxu0 0.0
      %1043 = vmatpush.msra.mxu0 %v1012
      %1044 = vmatpush.msra.mxu0 %v1011
      %1045 = vmatpush.msra.mxu0 %v1010
      %1046 = vmatpush.msra.mxu0 %v1009
      %1047 = vmatpush.msra.mxu0 %v1008
      %1048 = vmatpush.msra.mxu0 %v1007
      %1049 = vmatpush.msra.mxu0 %v1006
      %1050 = vmatpush.msra.mxu0 %v1005
      %1051 = vmatpush.msra.mxu0 %v1004
      %1052 = vmatpush.msra.mxu0 %v1003
      %1053 = vmatmul.f32.gmra.mxu0 %v1035
      %v1054 = vpop.f32.mrf.mxu0
      %v1055 = vadd.f32 0.0, %v1054
      %1056 = vdwg.mxu0
      %v1057 = vadd.f32 %v981, %v1031
      %v1058 = vadd.f32 %v1001, %v1055
      %v1059 = vmax.f32 %v1057, %v1058
      %1061 = vrot.lane.b32.xlu0 %v1059, 64
      %v1062 = vpop.permute.xlu0 %1061
      %v1064 = vmax.f32 %v1059, %v1062
      %v1065 = vadd.f32 %v1064, %v683
      %v1066 = vmax.f32 %v1065, 0.0
      %v1067 = vmul.f32 %v1066, %v298
      %v1068 = vsel %vm688, %v1067, 0.0
      %1069 = vadd.xlane.f32.xlu0 %v1068
      %v1070 = vpop.xlane.xlu0 %1069
      %v1071 = vrot.slane %v1070, 4
      %v1072 = vadd.f32 %v1070, %v1071
      %v1073 = vrot.slane %v1072, 2
      %v1074 = vadd.f32 %v1072, %v1073
      %v1075 = vrot.slane %v1074, 1
      %v1076 = vadd.f32 %v1074, %v1075
      %s1077 = vtos %v1076
      %v1078 = vstv %s1077
      %s1079 = scalar_lea.vmem %s277, 32
      %v1080 = vld [vmem:[%s1079] sm:$0xff]
      %v1081 = vld [vmem:[%s1079 + $0x8] sm:$0xff]
      %1084 = vrot.lane.b32.xlu0 %v1080, 4
      %v1085 = vpop.permute.xlu0 %1084
      %1086 = vrot.lane.b32.xlu0 %v1081, 4
      %v1087 = vpop.permute.xlu0 %1086
      %1090 = vst.msk [vmem:[#allocation2 + $0x1] sm:$0xff] %vm311, %v1085
      %1091 = vst.msk [vmem:[#allocation2 + $0x9] sm:$0xff] %vm311, %v1087
      %v1092 = vld [vmem:[%s1] sm:$0xff]
      %v1093 = vld [vmem:[%s1 + $0x8] sm:$0xff]
      %v1094 = vld [vmem:[%s1 + $0x10] sm:$0xff]
      %v1095 = vld [vmem:[%s1 + $0x18] sm:$0xff]
      %v1096 = vld [vmem:[%s1 + $0x20] sm:$0xff]
      %v1097 = vld [vmem:[%s1 + $0x28] sm:$0xff]
      %v1098 = vld [vmem:[%s1 + $0x30] sm:$0xff]
      %v1099 = vld [vmem:[%s1 + $0x38] sm:$0xff]
      %v1100 = vld [vmem:[%s1 + $0x40] sm:$0xff]
      %v1101 = vld [vmem:[#allocation2] ss:$2 sm:$0xff]
      %v1102 = vld [vmem:[%s324] ss:$2 sm:$0xff]
      %v1103 = vld [vmem:[%s326] sm:$0xff]
      %v1104 = vld [vmem:[%s326 + $0x8] sm:$0xff]
      %v1105 = vld [vmem:[%s326 + $0x10] sm:$0xff]
      %v1106 = vld [vmem:[%s326 + $0x18] sm:$0xff]
      %v1107 = vld [vmem:[%s326 + $0x20] sm:$0xff]
      %v1108 = vld [vmem:[%s326 + $0x28] sm:$0xff]
      %v1109 = vld [vmem:[%s326 + $0x30] sm:$0xff]
      %v1110 = vld [vmem:[%s326 + $0x38] sm:$0xff]
      %v1111 = vld [vmem:[%s326 + $0x40] sm:$0xff]
      %v1113 = vsel %vm336, %v1102, 0
      %1115 = vmatpush.msra.mxu0 0.0
      %1116 = vmatpush.msra.mxu0 0.0
      %1117 = vmatpush.msra.mxu0 0.0
      %1118 = vmatpush.msra.mxu0 0.0
      %1119 = vmatpush.msra.mxu0 0.0
      %1120 = vmatpush.msra.mxu0 0.0
      %1121 = vmatpush.msra.mxu0 0.0
      %1122 = vmatpush.msra.mxu0 %v1111
      %1123 = vmatpush.msra.mxu0 %v1110
      %1124 = vmatpush.msra.mxu0 %v1109
      %1125 = vmatpush.msra.mxu0 %v1108
      %1126 = vmatpush.msra.mxu0 %v1107
      %1127 = vmatpush.msra.mxu0 %v1106
      %1128 = vmatpush.msra.mxu0 %v1105
      %1129 = vmatpush.msra.mxu0 %v1104
      %1130 = vmatpush.msra.mxu0 %v1103
      %1131 = vmatmul.f32.gmra.mxu0 %v1113
      %v1132 = vpop.f32.mrf.mxu0
      %v1133 = vadd.f32 0.0, %v1132
      %1134 = vdwg.mxu0
      %v1135 = vld [vmem:[%s360] ss:$2 sm:$0xff]
      %v1137 = vsel %vm336, %v1135, 0
      %1139 = vmatpush.msra.mxu0 0.0
      %1140 = vmatpush.msra.mxu0 0.0
      %1141 = vmatpush.msra.mxu0 0.0
      %1142 = vmatpush.msra.mxu0 0.0
      %1143 = vmatpush.msra.mxu0 0.0
      %1144 = vmatpush.msra.mxu0 0.0
      %1145 = vmatpush.msra.mxu0 0.0
      %1146 = vmatpush.msra.mxu0 %v1111
      %1147 = vmatpush.msra.mxu0 %v1110
      %1148 = vmatpush.msra.mxu0 %v1109
      %1149 = vmatpush.msra.mxu0 %v1108
      %1150 = vmatpush.msra.mxu0 %v1107
      %1151 = vmatpush.msra.mxu0 %v1106
      %1152 = vmatpush.msra.mxu0 %v1105
      %1153 = vmatpush.msra.mxu0 %v1104
      %1154 = vmatpush.msra.mxu0 %v1103
      %1155 = vmatmul.f32.gmra.mxu0 %v1137
      %v1156 = vpop.f32.mrf.mxu0
      %v1157 = vadd.f32 0.0, %v1156
      %1158 = vdwg.mxu0
      %v1160 = vsel %vm336, %v1101, 0
      %1162 = vmatpush.msra.mxu0 0.0
      %1163 = vmatpush.msra.mxu0 0.0
      %1164 = vmatpush.msra.mxu0 0.0
      %1165 = vmatpush.msra.mxu0 0.0
      %1166 = vmatpush.msra.mxu0 0.0
      %1167 = vmatpush.msra.mxu0 0.0
      %1168 = vmatpush.msra.mxu0 0.0
      %1169 = vmatpush.msra.mxu0 %v1100
      %1170 = vmatpush.msra.mxu0 %v1099
      %1171 = vmatpush.msra.mxu0 %v1098
      %1172 = vmatpush.msra.mxu0 %v1097
      %1173 = vmatpush.msra.mxu0 %v1096
      %1174 = vmatpush.msra.mxu0 %v1095
      %1175 = vmatpush.msra.mxu0 %v1094
      %1176 = vmatpush.msra.mxu0 %v1093
      %1177 = vmatpush.msra.mxu0 %v1092
      %1178 = vmatmul.f32.gmra.mxu0 %v1160
      %v1179 = vpop.f32.mrf.mxu0
      %v1180 = vadd.f32 %v1133, %v1179
      %1181 = vdwg.mxu0
      %1182 = vmatpush.msra.mxu0 0.0
      %1183 = vmatpush.msra.mxu0 0.0
      %1184 = vmatpush.msra.mxu0 0.0
      %1185 = vmatpush.msra.mxu0 0.0
      %1186 = vmatpush.msra.mxu0 0.0
      %1187 = vmatpush.msra.mxu0 0.0
      %1188 = vmatpush.msra.mxu0 0.0
      %1189 = vmatpush.msra.mxu0 %v1100
      %1190 = vmatpush.msra.mxu0 %v1099
      %1191 = vmatpush.msra.mxu0 %v1098
      %1192 = vmatpush.msra.mxu0 %v1097
      %1193 = vmatpush.msra.mxu0 %v1096
      %1194 = vmatpush.msra.mxu0 %v1095
      %1195 = vmatpush.msra.mxu0 %v1094
      %1196 = vmatpush.msra.mxu0 %v1093
      %1197 = vmatpush.msra.mxu0 %v1092
      %1198 = vmatmul.f32.gmra.mxu0 %v1113
      %v1199 = vpop.f32.mrf.mxu0
      %v1200 = vadd.f32 %v1157, %v1199
      %1201 = vdwg.mxu0
      %v1202 = vld [vmem:[%s428] sm:$0xff]
      %v1203 = vld [vmem:[%s428 + $0x8] sm:$0xff]
      %v1204 = vld [vmem:[%s428 + $0x10] sm:$0xff]
      %v1205 = vld [vmem:[%s428 + $0x18] sm:$0xff]
      %v1206 = vld [vmem:[%s428 + $0x20] sm:$0xff]
      %v1207 = vld [vmem:[%s428 + $0x28] sm:$0xff]
      %v1208 = vld [vmem:[%s428 + $0x30] sm:$0xff]
      %v1209 = vld [vmem:[%s428 + $0x38] sm:$0xff]
      %v1210 = vld [vmem:[%s428 + $0x40] sm:$0xff]
      %1211 = vmatpush.msra.mxu0 0.0
      %1212 = vmatpush.msra.mxu0 0.0
      %1213 = vmatpush.msra.mxu0 0.0
      %1214 = vmatpush.msra.mxu0 0.0
      %1215 = vmatpush.msra.mxu0 0.0
      %1216 = vmatpush.msra.mxu0 0.0
      %1217 = vmatpush.msra.mxu0 0.0
      %1218 = vmatpush.msra.mxu0 %v1210
      %1219 = vmatpush.msra.mxu0 %v1209
      %1220 = vmatpush.msra.mxu0 %v1208
      %1221 = vmatpush.msra.mxu0 %v1207
      %1222 = vmatpush.msra.mxu0 %v1206
      %1223 = vmatpush.msra.mxu0 %v1205
      %1224 = vmatpush.msra.mxu0 %v1204
      %1225 = vmatpush.msra.mxu0 %v1203
      %1226 = vmatpush.msra.mxu0 %v1202
      %1227 = vmatmul.f32.gmra.mxu0 %v1137
      %v1228 = vpop.f32.mrf.mxu0
      %v1229 = vadd.f32 0.0, %v1228
      %1230 = vdwg.mxu0
      %v1231 = vld [vmem:[%s458] ss:$2 sm:$0xff]
      %v1233 = vsel %vm336, %v1231, 0
      %1235 = vmatpush.msra.mxu0 0.0
      %1236 = vmatpush.msra.mxu0 0.0
      %1237 = vmatpush.msra.mxu0 0.0
      %1238 = vmatpush.msra.mxu0 0.0
      %1239 = vmatpush.msra.mxu0 0.0
      %1240 = vmatpush.msra.mxu0 0.0
      %1241 = vmatpush.msra.mxu0 0.0
      %1242 = vmatpush.msra.mxu0 %v1210
      %1243 = vmatpush.msra.mxu0 %v1209
      %1244 = vmatpush.msra.mxu0 %v1208
      %1245 = vmatpush.msra.mxu0 %v1207
      %1246 = vmatpush.msra.mxu0 %v1206
      %1247 = vmatpush.msra.mxu0 %v1205
      %1248 = vmatpush.msra.mxu0 %v1204
      %1249 = vmatpush.msra.mxu0 %v1203
      %1250 = vmatpush.msra.mxu0 %v1202
      %1251 = vmatmul.f32.gmra.mxu0 %v1233
      %v1252 = vpop.f32.mrf.mxu0
      %v1253 = vadd.f32 0.0, %v1252
      %1254 = vdwg.mxu0
      %v1255 = vadd.f32 %v1180, %v1229
      %v1256 = vadd.f32 %v1200, %v1253
      %v1257 = vmax.f32 %v1255, %v1256
      %1259 = vrot.lane.b32.xlu0 %v1257, 64
      %v1260 = vpop.permute.xlu0 %1259
      %v1262 = vmax.f32 %v1257, %v1260
      %v1263 = vadd.f32 %v1262, %v492
      %v1264 = vmax.f32 %v1263, 0.0
      %1266 = vrot.lane.b32.xlu0 %v1264, 8
      %v1267 = vpop.permute.xlu0 %1266
      %1269 = vst.msk [vmem:[#allocation3 + $0x1] sm:$0xff] %vm500, %v1267
      %v1270 = vld [vmem:[%s3] sm:$0xff]
      %v1271 = vld [vmem:[%s3 + $0x8] sm:$0xff]
      %v1272 = vld [vmem:[%s3 + $0x10] sm:$0xff]
      %v1273 = vld [vmem:[%s3 + $0x18] sm:$0xff]
      %v1274 = vld [vmem:[%s3 + $0x20] sm:$0xff]
      %v1275 = vld [vmem:[%s3 + $0x28] sm:$0xff]
      %v1276 = vld [vmem:[%s3 + $0x30] sm:$0xff]
      %v1277 = vld [vmem:[%s3 + $0x38] sm:$0xff]
      %v1278 = vld [vmem:[%s3 + $0x40] sm:$0xff]
      %v1279 = vld [vmem:[%s3 + $0x48] sm:$0xff]
      %v1280 = vld [vmem:[#allocation3] ss:$2 sm:$0xf]
      %v1281 = vld [vmem:[%s513] ss:$2 sm:$0xf]
      %v1282 = vld [vmem:[%s515] sm:$0xff]
      %v1283 = vld [vmem:[%s515 + $0x8] sm:$0xff]
      %v1284 = vld [vmem:[%s515 + $0x10] sm:$0xff]
      %v1285 = vld [vmem:[%s515 + $0x18] sm:$0xff]
      %v1286 = vld [vmem:[%s515 + $0x20] sm:$0xff]
      %v1287 = vld [vmem:[%s515 + $0x28] sm:$0xff]
      %v1288 = vld [vmem:[%s515 + $0x30] sm:$0xff]
      %v1289 = vld [vmem:[%s515 + $0x38] sm:$0xff]
      %v1290 = vld [vmem:[%s515 + $0x40] sm:$0xff]
      %v1291 = vld [vmem:[%s515 + $0x48] sm:$0xff]
      %v1293 = vsel %vm526, %v1281, 0
      %1295 = vmatpush.msra.mxu0 0.0
      %1296 = vmatpush.msra.mxu0 0.0
      %1297 = vmatpush.msra.mxu0 0.0
      %1298 = vmatpush.msra.mxu0 0.0
      %1299 = vmatpush.msra.mxu0 0.0
      %1300 = vmatpush.msra.mxu0 0.0
      %1301 = vmatpush.msra.mxu0 %v1291
      %1302 = vmatpush.msra.mxu0 %v1290
      %1303 = vmatpush.msra.mxu0 %v1289
      %1304 = vmatpush.msra.mxu0 %v1288
      %1305 = vmatpush.msra.mxu0 %v1287
      %1306 = vmatpush.msra.mxu0 %v1286
      %1307 = vmatpush.msra.mxu0 %v1285
      %1308 = vmatpush.msra.mxu0 %v1284
      %1309 = vmatpush.msra.mxu0 %v1283
      %1310 = vmatpush.msra.mxu0 %v1282
      %1311 = vmatmul.f32.gmra.mxu0 %v1293
      %v1312 = vpop.f32.mrf.mxu0
      %v1313 = vadd.f32 0.0, %v1312
      %1314 = vdwg.mxu0
      %v1315 = vld [vmem:[%s550] ss:$2 sm:$0xf]
      %v1317 = vsel %vm526, %v1315, 0
      %1319 = vmatpush.msra.mxu0 0.0
      %1320 = vmatpush.msra.mxu0 0.0
      %1321 = vmatpush.msra.mxu0 0.0
      %1322 = vmatpush.msra.mxu0 0.0
      %1323 = vmatpush.msra.mxu0 0.0
      %1324 = vmatpush.msra.mxu0 0.0
      %1325 = vmatpush.msra.mxu0 %v1291
      %1326 = vmatpush.msra.mxu0 %v1290
      %1327 = vmatpush.msra.mxu0 %v1289
      %1328 = vmatpush.msra.mxu0 %v1288
      %1329 = vmatpush.msra.mxu0 %v1287
      %1330 = vmatpush.msra.mxu0 %v1286
      %1331 = vmatpush.msra.mxu0 %v1285
      %1332 = vmatpush.msra.mxu0 %v1284
      %1333 = vmatpush.msra.mxu0 %v1283
      %1334 = vmatpush.msra.mxu0 %v1282
      %1335 = vmatmul.f32.gmra.mxu0 %v1317
      %v1336 = vpop.f32.mrf.mxu0
      %v1337 = vadd.f32 0.0, %v1336
      %1338 = vdwg.mxu0
      %v1340 = vsel %vm526, %v1280, 0
      %1342 = vmatpush.msra.mxu0 0.0
      %1343 = vmatpush.msra.mxu0 0.0
      %1344 = vmatpush.msra.mxu0 0.0
      %1345 = vmatpush.msra.mxu0 0.0
      %1346 = vmatpush.msra.mxu0 0.0
      %1347 = vmatpush.msra.mxu0 0.0
      %1348 = vmatpush.msra.mxu0 %v1279
      %1349 = vmatpush.msra.mxu0 %v1278
      %1350 = vmatpush.msra.mxu0 %v1277
      %1351 = vmatpush.msra.mxu0 %v1276
      %1352 = vmatpush.msra.mxu0 %v1275
      %1353 = vmatpush.msra.mxu0 %v1274
      %1354 = vmatpush.msra.mxu0 %v1273
      %1355 = vmatpush.msra.mxu0 %v1272
      %1356 = vmatpush.msra.mxu0 %v1271
      %1357 = vmatpush.msra.mxu0 %v1270
      %1358 = vmatmul.f32.gmra.mxu0 %v1340
      %v1359 = vpop.f32.mrf.mxu0
      %v1360 = vadd.f32 %v1313, %v1359
      %1361 = vdwg.mxu0
      %1362 = vmatpush.msra.mxu0 0.0
      %1363 = vmatpush.msra.mxu0 0.0
      %1364 = vmatpush.msra.mxu0 0.0
      %1365 = vmatpush.msra.mxu0 0.0
      %1366 = vmatpush.msra.mxu0 0.0
      %1367 = vmatpush.msra.mxu0 0.0
      %1368 = vmatpush.msra.mxu0 %v1279
      %1369 = vmatpush.msra.mxu0 %v1278
      %1370 = vmatpush.msra.mxu0 %v1277
      %1371 = vmatpush.msra.mxu0 %v1276
      %1372 = vmatpush.msra.mxu0 %v1275
      %1373 = vmatpush.msra.mxu0 %v1274
      %1374 = vmatpush.msra.mxu0 %v1273
      %1375 = vmatpush.msra.mxu0 %v1272
      %1376 = vmatpush.msra.mxu0 %v1271
      %1377 = vmatpush.msra.mxu0 %v1270
      %1378 = vmatmul.f32.gmra.mxu0 %v1293
      %v1379 = vpop.f32.mrf.mxu0
      %v1380 = vadd.f32 %v1337, %v1379
      %1381 = vdwg.mxu0
      %v1382 = vld [vmem:[%s618] sm:$0xff]
      %v1383 = vld [vmem:[%s618 + $0x8] sm:$0xff]
      %v1384 = vld [vmem:[%s618 + $0x10] sm:$0xff]
      %v1385 = vld [vmem:[%s618 + $0x18] sm:$0xff]
      %v1386 = vld [vmem:[%s618 + $0x20] sm:$0xff]
      %v1387 = vld [vmem:[%s618 + $0x28] sm:$0xff]
      %v1388 = vld [vmem:[%s618 + $0x30] sm:$0xff]
      %v1389 = vld [vmem:[%s618 + $0x38] sm:$0xff]
      %v1390 = vld [vmem:[%s618 + $0x40] sm:$0xff]
      %v1391 = vld [vmem:[%s618 + $0x48] sm:$0xff]
      %1392 = vmatpush.msra.mxu0 0.0
      %1393 = vmatpush.msra.mxu0 0.0
      %1394 = vmatpush.msra.mxu0 0.0
      %1395 = vmatpush.msra.mxu0 0.0
      %1396 = vmatpush.msra.mxu0 0.0
      %1397 = vmatpush.msra.mxu0 0.0
      %1398 = vmatpush.msra.mxu0 %v1391
      %1399 = vmatpush.msra.mxu0 %v1390
      %1400 = vmatpush.msra.mxu0 %v1389
      %1401 = vmatpush.msra.mxu0 %v1388
      %1402 = vmatpush.msra.mxu0 %v1387
      %1403 = vmatpush.msra.mxu0 %v1386
      %1404 = vmatpush.msra.mxu0 %v1385
      %1405 = vmatpush.msra.mxu0 %v1384
      %1406 = vmatpush.msra.mxu0 %v1383
      %1407 = vmatpush.msra.mxu0 %v1382
      %1408 = vmatmul.f32.gmra.mxu0 %v1317
      %v1409 = vpop.f32.mrf.mxu0
      %v1410 = vadd.f32 0.0, %v1409
      %1411 = vdwg.mxu0
      %v1412 = vld [vmem:[%s649] ss:$2 sm:$0xf]
      %v1414 = vsel %vm526, %v1412, 0
      %1416 = vmatpush.msra.mxu0 0.0
      %1417 = vmatpush.msra.mxu0 0.0
      %1418 = vmatpush.msra.mxu0 0.0
      %1419 = vmatpush.msra.mxu0 0.0
      %1420 = vmatpush.msra.mxu0 0.0
      %1421 = vmatpush.msra.mxu0 0.0
      %1422 = vmatpush.msra.mxu0 %v1391
      %1423 = vmatpush.msra.mxu0 %v1390
      %1424 = vmatpush.msra.mxu0 %v1389
      %1425 = vmatpush.msra.mxu0 %v1388
      %1426 = vmatpush.msra.mxu0 %v1387
      %1427 = vmatpush.msra.mxu0 %v1386
      %1428 = vmatpush.msra.mxu0 %v1385
      %1429 = vmatpush.msra.mxu0 %v1384
      %1430 = vmatpush.msra.mxu0 %v1383
      %1431 = vmatpush.msra.mxu0 %v1382
      %1432 = vmatmul.f32.gmra.mxu0 %v1414
      %v1433 = vpop.f32.mrf.mxu0
      %v1434 = vadd.f32 0.0, %v1433
      %1435 = vdwg.mxu0
      %v1436 = vadd.f32 %v1360, %v1410
      %v1437 = vadd.f32 %v1380, %v1434
      %v1438 = vmax.f32 %v1436, %v1437
      %1440 = vrot.lane.b32.xlu0 %v1438, 64
      %v1441 = vpop.permute.xlu0 %1440
      %v1443 = vmax.f32 %v1438, %v1441
      %v1444 = vadd.f32 %v1443, %v683
      %v1445 = vmax.f32 %v1444, 0.0
      %v1446 = vmul.f32 %v1445, %v298
      %v1447 = vsel %vm688, %v1446, 0.0
      %1448 = vadd.xlane.f32.xlu0 %v1447
      %v1449 = vpop.xlane.xlu0 %1448
      %v1450 = vrot.slane %v1449, 4
      %v1451 = vadd.f32 %v1449, %v1450
      %v1452 = vrot.slane %v1451, 2
      %v1453 = vadd.f32 %v1451, %v1452
      %v1454 = vrot.slane %v1453, 1
      %v1455 = vadd.f32 %v1453, %v1454
      %s1456 = vtos %v1455
      %v1457 = vstv %s1456
      %s1458 = scalar_lea.vmem %s277, 48
      %v1459 = vld [vmem:[%s1458] sm:$0xff]
      %v1460 = vld [vmem:[%s1458 + $0x8] sm:$0xff]
      %1463 = vrot.lane.b32.xlu0 %v1459, 4
      %v1464 = vpop.permute.xlu0 %1463
      %1465 = vrot.lane.b32.xlu0 %v1460, 4
      %v1466 = vpop.permute.xlu0 %1465
      %1469 = vst.msk [vmem:[#allocation2 + $0x1] sm:$0xff] %vm311, %v1464
      %1470 = vst.msk [vmem:[#allocation2 + $0x9] sm:$0xff] %vm311, %v1466
      %v1471 = vld [vmem:[%s1] sm:$0xff]
      %v1472 = vld [vmem:[%s1 + $0x8] sm:$0xff]
      %v1473 = vld [vmem:[%s1 + $0x10] sm:$0xff]
      %v1474 = vld [vmem:[%s1 + $0x18] sm:$0xff]
      %v1475 = vld [vmem:[%s1 + $0x20] sm:$0xff]
      %v1476 = vld [vmem:[%s1 + $0x28] sm:$0xff]
      %v1477 = vld [vmem:[%s1 + $0x30] sm:$0xff]
      %v1478 = vld [vmem:[%s1 + $0x38] sm:$0xff]
      %v1479 = vld [vmem:[%s1 + $0x40] sm:$0xff]
      %v1480 = vld [vmem:[#allocation2] ss:$2 sm:$0xff]
      %v1481 = vld [vmem:[%s324] ss:$2 sm:$0xff]
      %v1482 = vld [vmem:[%s326] sm:$0xff]
      %v1483 = vld [vmem:[%s326 + $0x8] sm:$0xff]
      %v1484 = vld [vmem:[%s326 + $0x10] sm:$0xff]
      %v1485 = vld [vmem:[%s326 + $0x18] sm:$0xff]
      %v1486 = vld [vmem:[%s326 + $0x20] sm:$0xff]
      %v1487 = vld [vmem:[%s326 + $0x28] sm:$0xff]
      %v1488 = vld [vmem:[%s326 + $0x30] sm:$0xff]
      %v1489 = vld [vmem:[%s326 + $0x38] sm:$0xff]
      %v1490 = vld [vmem:[%s326 + $0x40] sm:$0xff]
      %v1492 = vsel %vm336, %v1481, 0
      %1494 = vmatpush.msra.mxu0 0.0
      %1495 = vmatpush.msra.mxu0 0.0
      %1496 = vmatpush.msra.mxu0 0.0
      %1497 = vmatpush.msra.mxu0 0.0
      %1498 = vmatpush.msra.mxu0 0.0
      %1499 = vmatpush.msra.mxu0 0.0
      %1500 = vmatpush.msra.mxu0 0.0
      %1501 = vmatpush.msra.mxu0 %v1490
      %1502 = vmatpush.msra.mxu0 %v1489
      %1503 = vmatpush.msra.mxu0 %v1488
      %1504 = vmatpush.msra.mxu0 %v1487
      %1505 = vmatpush.msra.mxu0 %v1486
      %1506 = vmatpush.msra.mxu0 %v1485
      %1507 = vmatpush.msra.mxu0 %v1484
      %1508 = vmatpush.msra.mxu0 %v1483
      %1509 = vmatpush.msra.mxu0 %v1482
      %1510 = vmatmul.f32.gmra.mxu0 %v1492
      %v1511 = vpop.f32.mrf.mxu0
      %v1512 = vadd.f32 0.0, %v1511
      %1513 = vdwg.mxu0
      %v1514 = vld [vmem:[%s360] ss:$2 sm:$0xff]
      %v1516 = vsel %vm336, %v1514, 0
      %1518 = vmatpush.msra.mxu0 0.0
      %1519 = vmatpush.msra.mxu0 0.0
      %1520 = vmatpush.msra.mxu0 0.0
      %1521 = vmatpush.msra.mxu0 0.0
      %1522 = vmatpush.msra.mxu0 0.0
      %1523 = vmatpush.msra.mxu0 0.0
      %1524 = vmatpush.msra.mxu0 0.0
      %1525 = vmatpush.msra.mxu0 %v1490
      %1526 = vmatpush.msra.mxu0 %v1489
      %1527 = vmatpush.msra.mxu0 %v1488
      %1528 = vmatpush.msra.mxu0 %v1487
      %1529 = vmatpush.msra.mxu0 %v1486
      %1530 = vmatpush.msra.mxu0 %v1485
      %1531 = vmatpush.msra.mxu0 %v1484
      %1532 = vmatpush.msra.mxu0 %v1483
      %1533 = vmatpush.msra.mxu0 %v1482
      %1534 = vmatmul.f32.gmra.mxu0 %v1516
      %v1535 = vpop.f32.mrf.mxu0
      %v1536 = vadd.f32 0.0, %v1535
      %1537 = vdwg.mxu0
      %v1539 = vsel %vm336, %v1480, 0
      %1541 = vmatpush.msra.mxu0 0.0
      %1542 = vmatpush.msra.mxu0 0.0
      %1543 = vmatpush.msra.mxu0 0.0
      %1544 = vmatpush.msra.mxu0 0.0
      %1545 = vmatpush.msra.mxu0 0.0
      %1546 = vmatpush.msra.mxu0 0.0
      %1547 = vmatpush.msra.mxu0 0.0
      %1548 = vmatpush.msra.mxu0 %v1479
      %1549 = vmatpush.msra.mxu0 %v1478
      %1550 = vmatpush.msra.mxu0 %v1477
      %1551 = vmatpush.msra.mxu0 %v1476
      %1552 = vmatpush.msra.mxu0 %v1475
      %1553 = vmatpush.msra.mxu0 %v1474
      %1554 = vmatpush.msra.mxu0 %v1473
      %1555 = vmatpush.msra.mxu0 %v1472
      %1556 = vmatpush.msra.mxu0 %v1471
      %1557 = vmatmul.f32.gmra.mxu0 %v1539
      %v1558 = vpop.f32.mrf.mxu0
      %v1559 = vadd.f32 %v1512, %v1558
      %1560 = vdwg.mxu0
      %1561 = vmatpush.msra.mxu0 0.0
      %1562 = vmatpush.msra.mxu0 0.0
      %1563 = vmatpush.msra.mxu0 0.0
      %1564 = vmatpush.msra.mxu0 0.0
      %1565 = vmatpush.msra.mxu0 0.0
      %1566 = vmatpush.msra.mxu0 0.0
      %1567 = vmatpush.msra.mxu0 0.0
      %1568 = vmatpush.msra.mxu0 %v1479
      %1569 = vmatpush.msra.mxu0 %v1478
      %1570 = vmatpush.msra.mxu0 %v1477
      %1571 = vmatpush.msra.mxu0 %v1476
      %1572 = vmatpush.msra.mxu0 %v1475
      %1573 = vmatpush.msra.mxu0 %v1474
      %1574 = vmatpush.msra.mxu0 %v1473
      %1575 = vmatpush.msra.mxu0 %v1472
      %1576 = vmatpush.msra.mxu0 %v1471
      %1577 = vmatmul.f32.gmra.mxu0 %v1492
      %v1578 = vpop.f32.mrf.mxu0
      %v1579 = vadd.f32 %v1536, %v1578
      %1580 = vdwg.mxu0
      %v1581 = vld [vmem:[%s428] sm:$0xff]
      %v1582 = vld [vmem:[%s428 + $0x8] sm:$0xff]
      %v1583 = vld [vmem:[%s428 + $0x10] sm:$0xff]
      %v1584 = vld [vmem:[%s428 + $0x18] sm:$0xff]
      %v1585 = vld [vmem:[%s428 + $0x20] sm:$0xff]
      %v1586 = vld [vmem:[%s428 + $0x28] sm:$0xff]
      %v1587 = vld [vmem:[%s428 + $0x30] sm:$0xff]
      %v1588 = vld [vmem:[%s428 + $0x38] sm:$0xff]
      %v1589 = vld [vmem:[%s428 + $0x40] sm:$0xff]
      %1590 = vmatpush.msra.mxu0 0.0
      %1591 = vmatpush.msra.mxu0 0.0
      %1592 = vmatpush.msra.mxu0 0.0
      %1593 = vmatpush.msra.mxu0 0.0
      %1594 = vmatpush.msra.mxu0 0.0
      %1595 = vmatpush.msra.mxu0 0.0
      %1596 = vmatpush.msra.mxu0 0.0
      %1597 = vmatpush.msra.mxu0 %v1589
      %1598 = vmatpush.msra.mxu0 %v1588
      %1599 = vmatpush.msra.mxu0 %v1587
      %1600 = vmatpush.msra.mxu0 %v1586
      %1601 = vmatpush.msra.mxu0 %v1585
      %1602 = vmatpush.msra.mxu0 %v1584
      %1603 = vmatpush.msra.mxu0 %v1583
      %1604 = vmatpush.msra.mxu0 %v1582
      %1605 = vmatpush.msra.mxu0 %v1581
      %1606 = vmatmul.f32.gmra.mxu0 %v1516
      %v1607 = vpop.f32.mrf.mxu0
      %v1608 = vadd.f32 0.0, %v1607
      %1609 = vdwg.mxu0
      %v1610 = vld [vmem:[%s458] ss:$2 sm:$0xff]
      %v1612 = vsel %vm336, %v1610, 0
      %1614 = vmatpush.msra.mxu0 0.0
      %1615 = vmatpush.msra.mxu0 0.0
      %1616 = vmatpush.msra.mxu0 0.0
      %1617 = vmatpush.msra.mxu0 0.0
      %1618 = vmatpush.msra.mxu0 0.0
      %1619 = vmatpush.msra.mxu0 0.0
      %1620 = vmatpush.msra.mxu0 0.0
      %1621 = vmatpush.msra.mxu0 %v1589
      %1622 = vmatpush.msra.mxu0 %v1588
      %1623 = vmatpush.msra.mxu0 %v1587
      %1624 = vmatpush.msra.mxu0 %v1586
      %1625 = vmatpush.msra.mxu0 %v1585
      %1626 = vmatpush.msra.mxu0 %v1584
      %1627 = vmatpush.msra.mxu0 %v1583
      %1628 = vmatpush.msra.mxu0 %v1582
      %1629 = vmatpush.msra.mxu0 %v1581
      %1630 = vmatmul.f32.gmra.mxu0 %v1612
      %v1631 = vpop.f32.mrf.mxu0
      %v1632 = vadd.f32 0.0, %v1631
      %1633 = vdwg.mxu0
      %v1634 = vadd.f32 %v1559, %v1608
      %v1635 = vadd.f32 %v1579, %v1632
      %v1636 = vmax.f32 %v1634, %v1635
      %1638 = vrot.lane.b32.xlu0 %v1636, 64
      %v1639 = vpop.permute.xlu0 %1638
      %v1641 = vmax.f32 %v1636, %v1639
      %v1642 = vadd.f32 %v1641, %v492
      %v1643 = vmax.f32 %v1642, 0.0
      %1645 = vrot.lane.b32.xlu0 %v1643, 8
      %v1646 = vpop.permute.xlu0 %1645
      %1648 = vst.msk [vmem:[#allocation3 + $0x1] sm:$0xff] %vm500, %v1646
      %v1649 = vld [vmem:[%s3] sm:$0xff]
      %v1650 = vld [vmem:[%s3 + $0x8] sm:$0xff]
      %v1651 = vld [vmem:[%s3 + $0x10] sm:$0xff]
      %v1652 = vld [vmem:[%s3 + $0x18] sm:$0xff]
      %v1653 = vld [vmem:[%s3 + $0x20] sm:$0xff]
      %v1654 = vld [vmem:[%s3 + $0x28] sm:$0xff]
      %v1655 = vld [vmem:[%s3 + $0x30] sm:$0xff]
      %v1656 = vld [vmem:[%s3 + $0x38] sm:$0xff]
      %v1657 = vld [vmem:[%s3 + $0x40] sm:$0xff]
      %v1658 = vld [vmem:[%s3 + $0x48] sm:$0xff]
      %v1659 = vld [vmem:[#allocation3] ss:$2 sm:$0xf]
      %v1660 = vld [vmem:[%s513] ss:$2 sm:$0xf]
      %v1661 = vld [vmem:[%s515] sm:$0xff]
      %v1662 = vld [vmem:[%s515 + $0x8] sm:$0xff]
      %v1663 = vld [vmem:[%s515 + $0x10] sm:$0xff]
      %v1664 = vld [vmem:[%s515 + $0x18] sm:$0xff]
      %v1665 = vld [vmem:[%s515 + $0x20] sm:$0xff]
      %v1666 = vld [vmem:[%s515 + $0x28] sm:$0xff]
      %v1667 = vld [vmem:[%s515 + $0x30] sm:$0xff]
      %v1668 = vld [vmem:[%s515 + $0x38] sm:$0xff]
      %v1669 = vld [vmem:[%s515 + $0x40] sm:$0xff]
      %v1670 = vld [vmem:[%s515 + $0x48] sm:$0xff]
      %v1672 = vsel %vm526, %v1660, 0
      %1674 = vmatpush.msra.mxu0 0.0
      %1675 = vmatpush.msra.mxu0 0.0
      %1676 = vmatpush.msra.mxu0 0.0
      %1677 = vmatpush.msra.mxu0 0.0
      %1678 = vmatpush.msra.mxu0 0.0
      %1679 = vmatpush.msra.mxu0 0.0
      %1680 = vmatpush.msra.mxu0 %v1670
      %1681 = vmatpush.msra.mxu0 %v1669
      %1682 = vmatpush.msra.mxu0 %v1668
      %1683 = vmatpush.msra.mxu0 %v1667
      %1684 = vmatpush.msra.mxu0 %v1666
      %1685 = vmatpush.msra.mxu0 %v1665
      %1686 = vmatpush.msra.mxu0 %v1664
      %1687 = vmatpush.msra.mxu0 %v1663
      %1688 = vmatpush.msra.mxu0 %v1662
      %1689 = vmatpush.msra.mxu0 %v1661
      %1690 = vmatmul.f32.gmra.mxu0 %v1672
      %v1691 = vpop.f32.mrf.mxu0
      %v1692 = vadd.f32 0.0, %v1691
      %1693 = vdwg.mxu0
      %v1694 = vld [vmem:[%s550] ss:$2 sm:$0xf]
      %v1696 = vsel %vm526, %v1694, 0
      %1698 = vmatpush.msra.mxu0 0.0
      %1699 = vmatpush.msra.mxu0 0.0
      %1700 = vmatpush.msra.mxu0 0.0
      %1701 = vmatpush.msra.mxu0 0.0
      %1702 = vmatpush.msra.mxu0 0.0
      %1703 = vmatpush.msra.mxu0 0.0
      %1704 = vmatpush.msra.mxu0 %v1670
      %1705 = vmatpush.msra.mxu0 %v1669
      %1706 = vmatpush.msra.mxu0 %v1668
      %1707 = vmatpush.msra.mxu0 %v1667
      %1708 = vmatpush.msra.mxu0 %v1666
      %1709 = vmatpush.msra.mxu0 %v1665
      %1710 = vmatpush.msra.mxu0 %v1664
      %1711 = vmatpush.msra.mxu0 %v1663
      %1712 = vmatpush.msra.mxu0 %v1662
      %1713 = vmatpush.msra.mxu0 %v1661
      %1714 = vmatmul.f32.gmra.mxu0 %v1696
      %v1715 = vpop.f32.mrf.mxu0
      %v1716 = vadd.f32 0.0, %v1715
      %1717 = vdwg.mxu0
      %v1719 = vsel %vm526, %v1659, 0
      %1721 = vmatpush.msra.mxu0 0.0
      %1722 = vmatpush.msra.mxu0 0.0
      %1723 = vmatpush.msra.mxu0 0.0
      %1724 = vmatpush.msra.mxu0 0.0
      %1725 = vmatpush.msra.mxu0 0.0
      %1726 = vmatpush.msra.mxu0 0.0
      %1727 = vmatpush.msra.mxu0 %v1658
      %1728 = vmatpush.msra.mxu0 %v1657
      %1729 = vmatpush.msra.mxu0 %v1656
      %1730 = vmatpush.msra.mxu0 %v1655
      %1731 = vmatpush.msra.mxu0 %v1654
      %1732 = vmatpush.msra.mxu0 %v1653
      %1733 = vmatpush.msra.mxu0 %v1652
      %1734 = vmatpush.msra.mxu0 %v1651
      %1735 = vmatpush.msra.mxu0 %v1650
      %1736 = vmatpush.msra.mxu0 %v1649
      %1737 = vmatmul.f32.gmra.mxu0 %v1719
      %v1738 = vpop.f32.mrf.mxu0
      %v1739 = vadd.f32 %v1692, %v1738
      %1740 = vdwg.mxu0
      %1741 = vmatpush.msra.mxu0 0.0
      %1742 = vmatpush.msra.mxu0 0.0
      %1743 = vmatpush.msra.mxu0 0.0
      %1744 = vmatpush.msra.mxu0 0.0
      %1745 = vmatpush.msra.mxu0 0.0
      %1746 = vmatpush.msra.mxu0 0.0
      %1747 = vmatpush.msra.mxu0 %v1658
      %1748 = vmatpush.msra.mxu0 %v1657
      %1749 = vmatpush.msra.mxu0 %v1656
      %1750 = vmatpush.msra.mxu0 %v1655
      %1751 = vmatpush.msra.mxu0 %v1654
      %1752 = vmatpush.msra.mxu0 %v1653
      %1753 = vmatpush.msra.mxu0 %v1652
      %1754 = vmatpush.msra.mxu0 %v1651
      %1755 = vmatpush.msra.mxu0 %v1650
      %1756 = vmatpush.msra.mxu0 %v1649
      %1757 = vmatmul.f32.gmra.mxu0 %v1672
      %v1758 = vpop.f32.mrf.mxu0
      %v1759 = vadd.f32 %v1716, %v1758
      %1760 = vdwg.mxu0
      %v1761 = vld [vmem:[%s618] sm:$0xff]
      %v1762 = vld [vmem:[%s618 + $0x8] sm:$0xff]
      %v1763 = vld [vmem:[%s618 + $0x10] sm:$0xff]
      %v1764 = vld [vmem:[%s618 + $0x18] sm:$0xff]
      %v1765 = vld [vmem:[%s618 + $0x20] sm:$0xff]
      %v1766 = vld [vmem:[%s618 + $0x28] sm:$0xff]
      %v1767 = vld [vmem:[%s618 + $0x30] sm:$0xff]
      %v1768 = vld [vmem:[%s618 + $0x38] sm:$0xff]
      %v1769 = vld [vmem:[%s618 + $0x40] sm:$0xff]
      %v1770 = vld [vmem:[%s618 + $0x48] sm:$0xff]
      %1771 = vmatpush.msra.mxu0 0.0
      %1772 = vmatpush.msra.mxu0 0.0
      %1773 = vmatpush.msra.mxu0 0.0
      %1774 = vmatpush.msra.mxu0 0.0
      %1775 = vmatpush.msra.mxu0 0.0
      %1776 = vmatpush.msra.mxu0 0.0
      %1777 = vmatpush.msra.mxu0 %v1770
      %1778 = vmatpush.msra.mxu0 %v1769
      %1779 = vmatpush.msra.mxu0 %v1768
      %1780 = vmatpush.msra.mxu0 %v1767
      %1781 = vmatpush.msra.mxu0 %v1766
      %1782 = vmatpush.msra.mxu0 %v1765
      %1783 = vmatpush.msra.mxu0 %v1764
      %1784 = vmatpush.msra.mxu0 %v1763
      %1785 = vmatpush.msra.mxu0 %v1762
      %1786 = vmatpush.msra.mxu0 %v1761
      %1787 = vmatmul.f32.gmra.mxu0 %v1696
      %v1788 = vpop.f32.mrf.mxu0
      %v1789 = vadd.f32 0.0, %v1788
      %1790 = vdwg.mxu0
      %v1791 = vld [vmem:[%s649] ss:$2 sm:$0xf]
      %v1793 = vsel %vm526, %v1791, 0
      %1795 = vmatpush.msra.mxu0 0.0
      %1796 = vmatpush.msra.mxu0 0.0
      %1797 = vmatpush.msra.mxu0 0.0
      %1798 = vmatpush.msra.mxu0 0.0
      %1799 = vmatpush.msra.mxu0 0.0
      %1800 = vmatpush.msra.mxu0 0.0
      %1801 = vmatpush.msra.mxu0 %v1770
      %1802 = vmatpush.msra.mxu0 %v1769
      %1803 = vmatpush.msra.mxu0 %v1768
      %1804 = vmatpush.msra.mxu0 %v1767
      %1805 = vmatpush.msra.mxu0 %v1766
      %1806 = vmatpush.msra.mxu0 %v1765
      %1807 = vmatpush.msra.mxu0 %v1764
      %1808 = vmatpush.msra.mxu0 %v1763
      %1809 = vmatpush.msra.mxu0 %v1762
      %1810 = vmatpush.msra.mxu0 %v1761
      %1811 = vmatmul.f32.gmra.mxu0 %v1793
      %v1812 = vpop.f32.mrf.mxu0
      %v1813 = vadd.f32 0.0, %v1812
      %1814 = vdwg.mxu0
      %v1815 = vadd.f32 %v1739, %v1789
      %v1816 = vadd.f32 %v1759, %v1813
      %v1817 = vmax.f32 %v1815, %v1816
      %1819 = vrot.lane.b32.xlu0 %v1817, 64
      %v1820 = vpop.permute.xlu0 %1819
      %v1822 = vmax.f32 %v1817, %v1820
      %v1823 = vadd.f32 %v1822, %v683
      %v1824 = vmax.f32 %v1823, 0.0
      %v1825 = vmul.f32 %v1824, %v298
      %v1826 = vsel %vm688, %v1825, 0.0
      %1827 = vadd.xlane.f32.xlu0 %v1826
      %v1828 = vpop.xlane.xlu0 %1827
      %v1829 = vrot.slane %v1828, 4
      %v1830 = vadd.f32 %v1828, %v1829
      %v1831 = vrot.slane %v1830, 2
      %v1832 = vadd.f32 %v1830, %v1831
      %v1833 = vrot.slane %v1832, 1
      %v1834 = vadd.f32 %v1832, %v1833
      %s1835 = vtos %v1834
      %v1836 = vstv %s1835
      %s1837 = scalar_lea.vmem %s277, 64
      %v1838 = vld [vmem:[%s1837] sm:$0xff]
      %v1839 = vld [vmem:[%s1837 + $0x8] sm:$0xff]
      %1842 = vrot.lane.b32.xlu0 %v1838, 4
      %v1843 = vpop.permute.xlu0 %1842
      %1844 = vrot.lane.b32.xlu0 %v1839, 4
      %v1845 = vpop.permute.xlu0 %1844
      %1848 = vst.msk [vmem:[#allocation2 + $0x1] sm:$0xff] %vm311, %v1843
      %1849 = vst.msk [vmem:[#allocation2 + $0x9] sm:$0xff] %vm311, %v1845
      %v1850 = vld [vmem:[%s1] sm:$0xff]
      %v1851 = vld [vmem:[%s1 + $0x8] sm:$0xff]
      %v1852 = vld [vmem:[%s1 + $0x10] sm:$0xff]
      %v1853 = vld [vmem:[%s1 + $0x18] sm:$0xff]
      %v1854 = vld [vmem:[%s1 + $0x20] sm:$0xff]
      %v1855 = vld [vmem:[%s1 + $0x28] sm:$0xff]
      %v1856 = vld [vmem:[%s1 + $0x30] sm:$0xff]
      %v1857 = vld [vmem:[%s1 + $0x38] sm:$0xff]
      %v1858 = vld [vmem:[%s1 + $0x40] sm:$0xff]
      %v1859 = vld [vmem:[#allocation2] ss:$2 sm:$0xff]
      %v1860 = vld [vmem:[%s324] ss:$2 sm:$0xff]
      %v1861 = vld [vmem:[%s326] sm:$0xff]
      %v1862 = vld [vmem:[%s326 + $0x8] sm:$0xff]
      %v1863 = vld [vmem:[%s326 + $0x10] sm:$0xff]
      %v1864 = vld [vmem:[%s326 + $0x18] sm:$0xff]
      %v1865 = vld [vmem:[%s326 + $0x20] sm:$0xff]
      %v1866 = vld [vmem:[%s326 + $0x28] sm:$0xff]
      %v1867 = vld [vmem:[%s326 + $0x30] sm:$0xff]
      %v1868 = vld [vmem:[%s326 + $0x38] sm:$0xff]
      %v1869 = vld [vmem:[%s326 + $0x40] sm:$0xff]
      %v1871 = vsel %vm336, %v1860, 0
      %1873 = vmatpush.msra.mxu0 0.0
      %1874 = vmatpush.msra.mxu0 0.0
      %1875 = vmatpush.msra.mxu0 0.0
      %1876 = vmatpush.msra.mxu0 0.0
      %1877 = vmatpush.msra.mxu0 0.0
      %1878 = vmatpush.msra.mxu0 0.0
      %1879 = vmatpush.msra.mxu0 0.0
      %1880 = vmatpush.msra.mxu0 %v1869
      %1881 = vmatpush.msra.mxu0 %v1868
      %1882 = vmatpush.msra.mxu0 %v1867
      %1883 = vmatpush.msra.mxu0 %v1866
      %1884 = vmatpush.msra.mxu0 %v1865
      %1885 = vmatpush.msra.mxu0 %v1864
      %1886 = vmatpush.msra.mxu0 %v1863
      %1887 = vmatpush.msra.mxu0 %v1862
      %1888 = vmatpush.msra.mxu0 %v1861
      %1889 = vmatmul.f32.gmra.mxu0 %v1871
      %v1890 = vpop.f32.mrf.mxu0
      %v1891 = vadd.f32 0.0, %v1890
      %1892 = vdwg.mxu0
      %v1893 = vld [vmem:[%s360] ss:$2 sm:$0xff]
      %v1895 = vsel %vm336, %v1893, 0
      %1897 = vmatpush.msra.mxu0 0.0
      %1898 = vmatpush.msra.mxu0 0.0
      %1899 = vmatpush.msra.mxu0 0.0
      %1900 = vmatpush.msra.mxu0 0.0
      %1901 = vmatpush.msra.mxu0 0.0
      %1902 = vmatpush.msra.mxu0 0.0
      %1903 = vmatpush.msra.mxu0 0.0
      %1904 = vmatpush.msra.mxu0 %v1869
      %1905 = vmatpush.msra.mxu0 %v1868
      %1906 = vmatpush.msra.mxu0 %v1867
      %1907 = vmatpush.msra.mxu0 %v1866
      %1908 = vmatpush.msra.mxu0 %v1865
      %1909 = vmatpush.msra.mxu0 %v1864
      %1910 = vmatpush.msra.mxu0 %v1863
      %1911 = vmatpush.msra.mxu0 %v1862
      %1912 = vmatpush.msra.mxu0 %v1861
      %1913 = vmatmul.f32.gmra.mxu0 %v1895
      %v1914 = vpop.f32.mrf.mxu0
      %v1915 = vadd.f32 0.0, %v1914
      %1916 = vdwg.mxu0
      %v1918 = vsel %vm336, %v1859, 0
      %1920 = vmatpush.msra.mxu0 0.0
      %1921 = vmatpush.msra.mxu0 0.0
      %1922 = vmatpush.msra.mxu0 0.0
      %1923 = vmatpush.msra.mxu0 0.0
      %1924 = vmatpush.msra.mxu0 0.0
      %1925 = vmatpush.msra.mxu0 0.0
      %1926 = vmatpush.msra.mxu0 0.0
      %1927 = vmatpush.msra.mxu0 %v1858
      %1928 = vmatpush.msra.mxu0 %v1857
      %1929 = vmatpush.msra.mxu0 %v1856
      %1930 = vmatpush.msra.mxu0 %v1855
      %1931 = vmatpush.msra.mxu0 %v1854
      %1932 = vmatpush.msra.mxu0 %v1853
      %1933 = vmatpush.msra.mxu0 %v1852
      %1934 = vmatpush.msra.mxu0 %v1851
      %1935 = vmatpush.msra.mxu0 %v1850
      %1936 = vmatmul.f32.gmra.mxu0 %v1918
      %v1937 = vpop.f32.mrf.mxu0
      %v1938 = vadd.f32 %v1891, %v1937
      %1939 = vdwg.mxu0
      %1940 = vmatpush.msra.mxu0 0.0
      %1941 = vmatpush.msra.mxu0 0.0
      %1942 = vmatpush.msra.mxu0 0.0
      %1943 = vmatpush.msra.mxu0 0.0
      %1944 = vmatpush.msra.mxu0 0.0
      %1945 = vmatpush.msra.mxu0 0.0
      %1946 = vmatpush.msra.mxu0 0.0
      %1947 = vmatpush.msra.mxu0 %v1858
      %1948 = vmatpush.msra.mxu0 %v1857
      %1949 = vmatpush.msra.mxu0 %v1856
      %1950 = vmatpush.msra.mxu0 %v1855
      %1951 = vmatpush.msra.mxu0 %v1854
      %1952 = vmatpush.msra.mxu0 %v1853
      %1953 = vmatpush.msra.mxu0 %v1852
      %1954 = vmatpush.msra.mxu0 %v1851
      %1955 = vmatpush.msra.mxu0 %v1850
      %1956 = vmatmul.f32.gmra.mxu0 %v1871
      %v1957 = vpop.f32.mrf.mxu0
      %v1958 = vadd.f32 %v1915, %v1957
      %1959 = vdwg.mxu0
      %v1960 = vld [vmem:[%s428] sm:$0xff]
      %v1961 = vld [vmem:[%s428 + $0x8] sm:$0xff]
      %v1962 = vld [vmem:[%s428 + $0x10] sm:$0xff]
      %v1963 = vld [vmem:[%s428 + $0x18] sm:$0xff]
      %v1964 = vld [vmem:[%s428 + $0x20] sm:$0xff]
      %v1965 = vld [vmem:[%s428 + $0x28] sm:$0xff]
      %v1966 = vld [vmem:[%s428 + $0x30] sm:$0xff]
      %v1967 = vld [vmem:[%s428 + $0x38] sm:$0xff]
      %v1968 = vld [vmem:[%s428 + $0x40] sm:$0xff]
      %1969 = vmatpush.msra.mxu0 0.0
      %1970 = vmatpush.msra.mxu0 0.0
      %1971 = vmatpush.msra.mxu0 0.0
      %1972 = vmatpush.msra.mxu0 0.0
      %1973 = vmatpush.msra.mxu0 0.0
      %1974 = vmatpush.msra.mxu0 0.0
      %1975 = vmatpush.msra.mxu0 0.0
      %1976 = vmatpush.msra.mxu0 %v1968
      %1977 = vmatpush.msra.mxu0 %v1967
      %1978 = vmatpush.msra.mxu0 %v1966
      %1979 = vmatpush.msra.mxu0 %v1965
      %1980 = vmatpush.msra.mxu0 %v1964
      %1981 = vmatpush.msra.mxu0 %v1963
      %1982 = vmatpush.msra.mxu0 %v1962
      %1983 = vmatpush.msra.mxu0 %v1961
      %1984 = vmatpush.msra.mxu0 %v1960
      %1985 = vmatmul.f32.gmra.mxu0 %v1895
      %v1986 = vpop.f32.mrf.mxu0
      %v1987 = vadd.f32 0.0, %v1986
      %1988 = vdwg.mxu0
      %v1989 = vld [vmem:[%s458] ss:$2 sm:$0xff]
      %v1991 = vsel %vm336, %v1989, 0
      %1993 = vmatpush.msra.mxu0 0.0
      %1994 = vmatpush.msra.mxu0 0.0
      %1995 = vmatpush.msra.mxu0 0.0
      %1996 = vmatpush.msra.mxu0 0.0
      %1997 = vmatpush.msra.mxu0 0.0
      %1998 = vmatpush.msra.mxu0 0.0
      %1999 = vmatpush.msra.mxu0 0.0
      %2000 = vmatpush.msra.mxu0 %v1968
      %2001 = vmatpush.msra.mxu0 %v1967
      %2002 = vmatpush.msra.mxu0 %v1966
      %2003 = vmatpush.msra.mxu0 %v1965
      %2004 = vmatpush.msra.mxu0 %v1964
      %2005 = vmatpush.msra.mxu0 %v1963
      %2006 = vmatpush.msra.mxu0 %v1962
      %2007 = vmatpush.msra.mxu0 %v1961
      %2008 = vmatpush.msra.mxu0 %v1960
      %2009 = vmatmul.f32.gmra.mxu0 %v1991
      %v2010 = vpop.f32.mrf.mxu0
      %v2011 = vadd.f32 0.0, %v2010
      %2012 = vdwg.mxu0
      %v2013 = vadd.f32 %v1938, %v1987
      %v2014 = vadd.f32 %v1958, %v2011
      %v2015 = vmax.f32 %v2013, %v2014
      %2017 = vrot.lane.b32.xlu0 %v2015, 64
      %v2018 = vpop.permute.xlu0 %2017
      %v2020 = vmax.f32 %v2015, %v2018
      %v2021 = vadd.f32 %v2020, %v492
      %v2022 = vmax.f32 %v2021, 0.0
      %2024 = vrot.lane.b32.xlu0 %v2022, 8
      %v2025 = vpop.permute.xlu0 %2024
      %2027 = vst.msk [vmem:[#allocation3 + $0x1] sm:$0xff] %vm500, %v2025
      %v2028 = vld [vmem:[%s3] sm:$0xff]
      %v2029 = vld [vmem:[%s3 + $0x8] sm:$0xff]
      %v2030 = vld [vmem:[%s3 + $0x10] sm:$0xff]
      %v2031 = vld [vmem:[%s3 + $0x18] sm:$0xff]
      %v2032 = vld [vmem:[%s3 + $0x20] sm:$0xff]
      %v2033 = vld [vmem:[%s3 + $0x28] sm:$0xff]
      %v2034 = vld [vmem:[%s3 + $0x30] sm:$0xff]
      %v2035 = vld [vmem:[%s3 + $0x38] sm:$0xff]
      %v2036 = vld [vmem:[%s3 + $0x40] sm:$0xff]
      %v2037 = vld [vmem:[%s3 + $0x48] sm:$0xff]
      %v2038 = vld [vmem:[#allocation3] ss:$2 sm:$0xf]
      %v2039 = vld [vmem:[%s513] ss:$2 sm:$0xf]
      %v2040 = vld [vmem:[%s515] sm:$0xff]
      %v2041 = vld [vmem:[%s515 + $0x8] sm:$0xff]
      %v2042 = vld [vmem:[%s515 + $0x10] sm:$0xff]
      %v2043 = vld [vmem:[%s515 + $0x18] sm:$0xff]
      %v2044 = vld [vmem:[%s515 + $0x20] sm:$0xff]
      %v2045 = vld [vmem:[%s515 + $0x28] sm:$0xff]
      %v2046 = vld [vmem:[%s515 + $0x30] sm:$0xff]
      %v2047 = vld [vmem:[%s515 + $0x38] sm:$0xff]
      %v2048 = vld [vmem:[%s515 + $0x40] sm:$0xff]
      %v2049 = vld [vmem:[%s515 + $0x48] sm:$0xff]
      %v2051 = vsel %vm526, %v2039, 0
      %2053 = vmatpush.msra.mxu0 0.0
      %2054 = vmatpush.msra.mxu0 0.0
      %2055 = vmatpush.msra.mxu0 0.0
      %2056 = vmatpush.msra.mxu0 0.0
      %2057 = vmatpush.msra.mxu0 0.0
      %2058 = vmatpush.msra.mxu0 0.0
      %2059 = vmatpush.msra.mxu0 %v2049
      %2060 = vmatpush.msra.mxu0 %v2048
      %2061 = vmatpush.msra.mxu0 %v2047
      %2062 = vmatpush.msra.mxu0 %v2046
      %2063 = vmatpush.msra.mxu0 %v2045
      %2064 = vmatpush.msra.mxu0 %v2044
      %2065 = vmatpush.msra.mxu0 %v2043
      %2066 = vmatpush.msra.mxu0 %v2042
      %2067 = vmatpush.msra.mxu0 %v2041
      %2068 = vmatpush.msra.mxu0 %v2040
      %2069 = vmatmul.f32.gmra.mxu0 %v2051
      %v2070 = vpop.f32.mrf.mxu0
      %v2071 = vadd.f32 0.0, %v2070
      %2072 = vdwg.mxu0
      %v2073 = vld [vmem:[%s550] ss:$2 sm:$0xf]
      %v2075 = vsel %vm526, %v2073, 0
      %2077 = vmatpush.msra.mxu0 0.0
      %2078 = vmatpush.msra.mxu0 0.0
      %2079 = vmatpush.msra.mxu0 0.0
      %2080 = vmatpush.msra.mxu0 0.0
      %2081 = vmatpush.msra.mxu0 0.0
      %2082 = vmatpush.msra.mxu0 0.0
      %2083 = vmatpush.msra.mxu0 %v2049
      %2084 = vmatpush.msra.mxu0 %v2048
      %2085 = vmatpush.msra.mxu0 %v2047
      %2086 = vmatpush.msra.mxu0 %v2046
      %2087 = vmatpush.msra.mxu0 %v2045
      %2088 = vmatpush.msra.mxu0 %v2044
      %2089 = vmatpush.msra.mxu0 %v2043
      %2090 = vmatpush.msra.mxu0 %v2042
      %2091 = vmatpush.msra.mxu0 %v2041
      %2092 = vmatpush.msra.mxu0 %v2040
      %2093 = vmatmul.f32.gmra.mxu0 %v2075
      %v2094 = vpop.f32.mrf.mxu0
      %v2095 = vadd.f32 0.0, %v2094
      %2096 = vdwg.mxu0
      %v2098 = vsel %vm526, %v2038, 0
      %2100 = vmatpush.msra.mxu0 0.0
      %2101 = vmatpush.msra.mxu0 0.0
      %2102 = vmatpush.msra.mxu0 0.0
      %2103 = vmatpush.msra.mxu0 0.0
      %2104 = vmatpush.msra.mxu0 0.0
      %2105 = vmatpush.msra.mxu0 0.0
      %2106 = vmatpush.msra.mxu0 %v2037
      %2107 = vmatpush.msra.mxu0 %v2036
      %2108 = vmatpush.msra.mxu0 %v2035
      %2109 = vmatpush.msra.mxu0 %v2034
      %2110 = vmatpush.msra.mxu0 %v2033
      %2111 = vmatpush.msra.mxu0 %v2032
      %2112 = vmatpush.msra.mxu0 %v2031
      %2113 = vmatpush.msra.mxu0 %v2030
      %2114 = vmatpush.msra.mxu0 %v2029
      %2115 = vmatpush.msra.mxu0 %v2028
      %2116 = vmatmul.f32.gmra.mxu0 %v2098
      %v2117 = vpop.f32.mrf.mxu0
      %v2118 = vadd.f32 %v2071, %v2117
      %2119 = vdwg.mxu0
      %2120 = vmatpush.msra.mxu0 0.0
      %2121 = vmatpush.msra.mxu0 0.0
      %2122 = vmatpush.msra.mxu0 0.0
      %2123 = vmatpush.msra.mxu0 0.0
      %2124 = vmatpush.msra.mxu0 0.0
      %2125 = vmatpush.msra.mxu0 0.0
      %2126 = vmatpush.msra.mxu0 %v2037
      %2127 = vmatpush.msra.mxu0 %v2036
      %2128 = vmatpush.msra.mxu0 %v2035
      %2129 = vmatpush.msra.mxu0 %v2034
      %2130 = vmatpush.msra.mxu0 %v2033
      %2131 = vmatpush.msra.mxu0 %v2032
      %2132 = vmatpush.msra.mxu0 %v2031
      %2133 = vmatpush.msra.mxu0 %v2030
      %2134 = vmatpush.msra.mxu0 %v2029
      %2135 = vmatpush.msra.mxu0 %v2028
      %2136 = vmatmul.f32.gmra.mxu0 %v2051
      %v2137 = vpop.f32.mrf.mxu0
      %v2138 = vadd.f32 %v2095, %v2137
      %2139 = vdwg.mxu0
      %v2140 = vld [vmem:[%s618] sm:$0xff]
      %v2141 = vld [vmem:[%s618 + $0x8] sm:$0xff]
      %v2142 = vld [vmem:[%s618 + $0x10] sm:$0xff]
      %v2143 = vld [vmem:[%s618 + $0x18] sm:$0xff]
      %v2144 = vld [vmem:[%s618 + $0x20] sm:$0xff]
      %v2145 = vld [vmem:[%s618 + $0x28] sm:$0xff]
      %v2146 = vld [vmem:[%s618 + $0x30] sm:$0xff]
      %v2147 = vld [vmem:[%s618 + $0x38] sm:$0xff]
      %v2148 = vld [vmem:[%s618 + $0x40] sm:$0xff]
      %v2149 = vld [vmem:[%s618 + $0x48] sm:$0xff]
      %2150 = vmatpush.msra.mxu0 0.0
      %2151 = vmatpush.msra.mxu0 0.0
      %2152 = vmatpush.msra.mxu0 0.0
      %2153 = vmatpush.msra.mxu0 0.0
      %2154 = vmatpush.msra.mxu0 0.0
      %2155 = vmatpush.msra.mxu0 0.0
      %2156 = vmatpush.msra.mxu0 %v2149
      %2157 = vmatpush.msra.mxu0 %v2148
      %2158 = vmatpush.msra.mxu0 %v2147
      %2159 = vmatpush.msra.mxu0 %v2146
      %2160 = vmatpush.msra.mxu0 %v2145
      %2161 = vmatpush.msra.mxu0 %v2144
      %2162 = vmatpush.msra.mxu0 %v2143
      %2163 = vmatpush.msra.mxu0 %v2142
      %2164 = vmatpush.msra.mxu0 %v2141
      %2165 = vmatpush.msra.mxu0 %v2140
      %2166 = vmatmul.f32.gmra.mxu0 %v2075
      %v2167 = vpop.f32.mrf.mxu0
      %v2168 = vadd.f32 0.0, %v2167
      %2169 = vdwg.mxu0
      %v2170 = vld [vmem:[%s649] ss:$2 sm:$0xf]
      %v2172 = vsel %vm526, %v2170, 0
      %2174 = vmatpush.msra.mxu0 0.0
      %2175 = vmatpush.msra.mxu0 0.0
      %2176 = vmatpush.msra.mxu0 0.0
      %2177 = vmatpush.msra.mxu0 0.0
      %2178 = vmatpush.msra.mxu0 0.0
      %2179 = vmatpush.msra.mxu0 0.0
      %2180 = vmatpush.msra.mxu0 %v2149
      %2181 = vmatpush.msra.mxu0 %v2148
      %2182 = vmatpush.msra.mxu0 %v2147
      %2183 = vmatpush.msra.mxu0 %v2146
      %2184 = vmatpush.msra.mxu0 %v2145
      %2185 = vmatpush.msra.mxu0 %v2144
      %2186 = vmatpush.msra.mxu0 %v2143
      %2187 = vmatpush.msra.mxu0 %v2142
      %2188 = vmatpush.msra.mxu0 %v2141
      %2189 = vmatpush.msra.mxu0 %v2140
      %2190 = vmatmul.f32.gmra.mxu0 %v2172
      %v2191 = vpop.f32.mrf.mxu0
      %v2192 = vadd.f32 0.0, %v2191
      %2193 = vdwg.mxu0
      %v2194 = vadd.f32 %v2118, %v2168
      %v2195 = vadd.f32 %v2138, %v2192
      %v2196 = vmax.f32 %v2194, %v2195
      %2198 = vrot.lane.b32.xlu0 %v2196, 64
      %v2199 = vpop.permute.xlu0 %2198
      %v2201 = vmax.f32 %v2196, %v2199
      %v2202 = vadd.f32 %v2201, %v683
      %v2203 = vmax.f32 %v2202, 0.0
      %v2204 = vmul.f32 %v2203, %v298
      %v2205 = vsel %vm688, %v2204, 0.0
      %2206 = vadd.xlane.f32.xlu0 %v2205
      %v2207 = vpop.xlane.xlu0 %2206
      %v2208 = vrot.slane %v2207, 4
      %v2209 = vadd.f32 %v2207, %v2208
      %v2210 = vrot.slane %v2209, 2
      %v2211 = vadd.f32 %v2209, %v2210
      %v2212 = vrot.slane %v2211, 1
      %v2213 = vadd.f32 %v2211, %v2212
      %s2214 = vtos %v2213
      %v2215 = vstv %s2214
      %s2216 = scalar_lea.vmem %s277, 80
      %v2217 = vld [vmem:[%s2216] sm:$0xff]
      %v2218 = vld [vmem:[%s2216 + $0x8] sm:$0xff]
      %2221 = vrot.lane.b32.xlu0 %v2217, 4
      %v2222 = vpop.permute.xlu0 %2221
      %2223 = vrot.lane.b32.xlu0 %v2218, 4
      %v2224 = vpop.permute.xlu0 %2223
      %2227 = vst.msk [vmem:[#allocation2 + $0x1] sm:$0xff] %vm311, %v2222
      %2228 = vst.msk [vmem:[#allocation2 + $0x9] sm:$0xff] %vm311, %v2224
      %v2229 = vld [vmem:[%s1] sm:$0xff]
      %v2230 = vld [vmem:[%s1 + $0x8] sm:$0xff]
      %v2231 = vld [vmem:[%s1 + $0x10] sm:$0xff]
      %v2232 = vld [vmem:[%s1 + $0x18] sm:$0xff]
      %v2233 = vld [vmem:[%s1 + $0x20] sm:$0xff]
      %v2234 = vld [vmem:[%s1 + $0x28] sm:$0xff]
      %v2235 = vld [vmem:[%s1 + $0x30] sm:$0xff]
      %v2236 = vld [vmem:[%s1 + $0x38] sm:$0xff]
      %v2237 = vld [vmem:[%s1 + $0x40] sm:$0xff]
      %v2238 = vld [vmem:[#allocation2] ss:$2 sm:$0xff]
      %v2239 = vld [vmem:[%s324] ss:$2 sm:$0xff]
      %v2240 = vld [vmem:[%s326] sm:$0xff]
      %v2241 = vld [vmem:[%s326 + $0x8] sm:$0xff]
      %v2242 = vld [vmem:[%s326 + $0x10] sm:$0xff]
      %v2243 = vld [vmem:[%s326 + $0x18] sm:$0xff]
      %v2244 = vld [vmem:[%s326 + $0x20] sm:$0xff]
      %v2245 = vld [vmem:[%s326 + $0x28] sm:$0xff]
      %v2246 = vld [vmem:[%s326 + $0x30] sm:$0xff]
      %v2247 = vld [vmem:[%s326 + $0x38] sm:$0xff]
      %v2248 = vld [vmem:[%s326 + $0x40] sm:$0xff]
      %v2250 = vsel %vm336, %v2239, 0
      %2252 = vmatpush.msra.mxu0 0.0
      %2253 = vmatpush.msra.mxu0 0.0
      %2254 = vmatpush.msra.mxu0 0.0
      %2255 = vmatpush.msra.mxu0 0.0
      %2256 = vmatpush.msra.mxu0 0.0
      %2257 = vmatpush.msra.mxu0 0.0
      %2258 = vmatpush.msra.mxu0 0.0
      %2259 = vmatpush.msra.mxu0 %v2248
      %2260 = vmatpush.msra.mxu0 %v2247
      %2261 = vmatpush.msra.mxu0 %v2246
      %2262 = vmatpush.msra.mxu0 %v2245
      %2263 = vmatpush.msra.mxu0 %v2244
      %2264 = vmatpush.msra.mxu0 %v2243
      %2265 = vmatpush.msra.mxu0 %v2242
      %2266 = vmatpush.msra.mxu0 %v2241
      %2267 = vmatpush.msra.mxu0 %v2240
      %2268 = vmatmul.f32.gmra.mxu0 %v2250
      %v2269 = vpop.f32.mrf.mxu0
      %v2270 = vadd.f32 0.0, %v2269
      %2271 = vdwg.mxu0
      %v2272 = vld [vmem:[%s360] ss:$2 sm:$0xff]
      %v2274 = vsel %vm336, %v2272, 0
      %2276 = vmatpush.msra.mxu0 0.0
      %2277 = vmatpush.msra.mxu0 0.0
      %2278 = vmatpush.msra.mxu0 0.0
      %2279 = vmatpush.msra.mxu0 0.0
      %2280 = vmatpush.msra.mxu0 0.0
      %2281 = vmatpush.msra.mxu0 0.0
      %2282 = vmatpush.msra.mxu0 0.0
      %2283 = vmatpush.msra.mxu0 %v2248
      %2284 = vmatpush.msra.mxu0 %v2247
      %2285 = vmatpush.msra.mxu0 %v2246
      %2286 = vmatpush.msra.mxu0 %v2245
      %2287 = vmatpush.msra.mxu0 %v2244
      %2288 = vmatpush.msra.mxu0 %v2243
      %2289 = vmatpush.msra.mxu0 %v2242
      %2290 = vmatpush.msra.mxu0 %v2241
      %2291 = vmatpush.msra.mxu0 %v2240
      %2292 = vmatmul.f32.gmra.mxu0 %v2274
      %v2293 = vpop.f32.mrf.mxu0
      %v2294 = vadd.f32 0.0, %v2293
      %2295 = vdwg.mxu0
      %v2297 = vsel %vm336, %v2238, 0
      %2299 = vmatpush.msra.mxu0 0.0
      %2300 = vmatpush.msra.mxu0 0.0
      %2301 = vmatpush.msra.mxu0 0.0
      %2302 = vmatpush.msra.mxu0 0.0
      %2303 = vmatpush.msra.mxu0 0.0
      %2304 = vmatpush.msra.mxu0 0.0
      %2305 = vmatpush.msra.mxu0 0.0
      %2306 = vmatpush.msra.mxu0 %v2237
      %2307 = vmatpush.msra.mxu0 %v2236
      %2308 = vmatpush.msra.mxu0 %v2235
      %2309 = vmatpush.msra.mxu0 %v2234
      %2310 = vmatpush.msra.mxu0 %v2233
      %2311 = vmatpush.msra.mxu0 %v2232
      %2312 = vmatpush.msra.mxu0 %v2231
      %2313 = vmatpush.msra.mxu0 %v2230
      %2314 = vmatpush.msra.mxu0 %v2229
      %2315 = vmatmul.f32.gmra.mxu0 %v2297
      %v2316 = vpop.f32.mrf.mxu0
      %v2317 = vadd.f32 %v2270, %v2316
      %2318 = vdwg.mxu0
      %2319 = vmatpush.msra.mxu0 0.0
      %2320 = vmatpush.msra.mxu0 0.0
      %2321 = vmatpush.msra.mxu0 0.0
      %2322 = vmatpush.msra.mxu0 0.0
      %2323 = vmatpush.msra.mxu0 0.0
      %2324 = vmatpush.msra.mxu0 0.0
      %2325 = vmatpush.msra.mxu0 0.0
      %2326 = vmatpush.msra.mxu0 %v2237
      %2327 = vmatpush.msra.mxu0 %v2236
      %2328 = vmatpush.msra.mxu0 %v2235
      %2329 = vmatpush.msra.mxu0 %v2234
      %2330 = vmatpush.msra.mxu0 %v2233
      %2331 = vmatpush.msra.mxu0 %v2232
      %2332 = vmatpush.msra.mxu0 %v2231
      %2333 = vmatpush.msra.mxu0 %v2230
      %2334 = vmatpush.msra.mxu0 %v2229
      %2335 = vmatmul.f32.gmra.mxu0 %v2250
      %v2336 = vpop.f32.mrf.mxu0
      %v2337 = vadd.f32 %v2294, %v2336
      %2338 = vdwg.mxu0
      %v2339 = vld [vmem:[%s428] sm:$0xff]
      %v2340 = vld [vmem:[%s428 + $0x8] sm:$0xff]
      %v2341 = vld [vmem:[%s428 + $0x10] sm:$0xff]
      %v2342 = vld [vmem:[%s428 + $0x18] sm:$0xff]
      %v2343 = vld [vmem:[%s428 + $0x20] sm:$0xff]
      %v2344 = vld [vmem:[%s428 + $0x28] sm:$0xff]
      %v2345 = vld [vmem:[%s428 + $0x30] sm:$0xff]
      %v2346 = vld [vmem:[%s428 + $0x38] sm:$0xff]
      %v2347 = vld [vmem:[%s428 + $0x40] sm:$0xff]
      %2348 = vmatpush.msra.mxu0 0.0
      %2349 = vmatpush.msra.mxu0 0.0
      %2350 = vmatpush.msra.mxu0 0.0
      %2351 = vmatpush.msra.mxu0 0.0
      %2352 = vmatpush.msra.mxu0 0.0
      %2353 = vmatpush.msra.mxu0 0.0
      %2354 = vmatpush.msra.mxu0 0.0
      %2355 = vmatpush.msra.mxu0 %v2347
      %2356 = vmatpush.msra.mxu0 %v2346
      %2357 = vmatpush.msra.mxu0 %v2345
      %2358 = vmatpush.msra.mxu0 %v2344
      %2359 = vmatpush.msra.mxu0 %v2343
      %2360 = vmatpush.msra.mxu0 %v2342
      %2361 = vmatpush.msra.mxu0 %v2341
      %2362 = vmatpush.msra.mxu0 %v2340
      %2363 = vmatpush.msra.mxu0 %v2339
      %2364 = vmatmul.f32.gmra.mxu0 %v2274
      %v2365 = vpop.f32.mrf.mxu0
      %v2366 = vadd.f32 0.0, %v2365
      %2367 = vdwg.mxu0
      %v2368 = vld [vmem:[%s458] ss:$2 sm:$0xff]
      %v2370 = vsel %vm336, %v2368, 0
      %2372 = vmatpush.msra.mxu0 0.0
      %2373 = vmatpush.msra.mxu0 0.0
      %2374 = vmatpush.msra.mxu0 0.0
      %2375 = vmatpush.msra.mxu0 0.0
      %2376 = vmatpush.msra.mxu0 0.0
      %2377 = vmatpush.msra.mxu0 0.0
      %2378 = vmatpush.msra.mxu0 0.0
      %2379 = vmatpush.msra.mxu0 %v2347
      %2380 = vmatpush.msra.mxu0 %v2346
      %2381 = vmatpush.msra.mxu0 %v2345
      %2382 = vmatpush.msra.mxu0 %v2344
      %2383 = vmatpush.msra.mxu0 %v2343
      %2384 = vmatpush.msra.mxu0 %v2342
      %2385 = vmatpush.msra.mxu0 %v2341
      %2386 = vmatpush.msra.mxu0 %v2340
      %2387 = vmatpush.msra.mxu0 %v2339
      %2388 = vmatmul.f32.gmra.mxu0 %v2370
      %v2389 = vpop.f32.mrf.mxu0
      %v2390 = vadd.f32 0.0, %v2389
      %2391 = vdwg.mxu0
      %v2392 = vadd.f32 %v2317, %v2366
      %v2393 = vadd.f32 %v2337, %v2390
      %v2394 = vmax.f32 %v2392, %v2393
      %2396 = vrot.lane.b32.xlu0 %v2394, 64
      %v2397 = vpop.permute.xlu0 %2396
      %v2399 = vmax.f32 %v2394, %v2397
      %v2400 = vadd.f32 %v2399, %v492
      %v2401 = vmax.f32 %v2400, 0.0
      %2403 = vrot.lane.b32.xlu0 %v2401, 8
      %v2404 = vpop.permute.xlu0 %2403
      %2406 = vst.msk [vmem:[#allocation3 + $0x1] sm:$0xff] %vm500, %v2404
      %v2407 = vld [vmem:[%s3] sm:$0xff]
      %v2408 = vld [vmem:[%s3 + $0x8] sm:$0xff]
      %v2409 = vld [vmem:[%s3 + $0x10] sm:$0xff]
      %v2410 = vld [vmem:[%s3 + $0x18] sm:$0xff]
      %v2411 = vld [vmem:[%s3 + $0x20] sm:$0xff]
      %v2412 = vld [vmem:[%s3 + $0x28] sm:$0xff]
      %v2413 = vld [vmem:[%s3 + $0x30] sm:$0xff]
      %v2414 = vld [vmem:[%s3 + $0x38] sm:$0xff]
      %v2415 = vld [vmem:[%s3 + $0x40] sm:$0xff]
      %v2416 = vld [vmem:[%s3 + $0x48] sm:$0xff]
      %v2417 = vld [vmem:[#allocation3] ss:$2 sm:$0xf]
      %v2418 = vld [vmem:[%s513] ss:$2 sm:$0xf]
      %v2419 = vld [vmem:[%s515] sm:$0xff]
      %v2420 = vld [vmem:[%s515 + $0x8] sm:$0xff]
      %v2421 = vld [vmem:[%s515 + $0x10] sm:$0xff]
      %v2422 = vld [vmem:[%s515 + $0x18] sm:$0xff]
      %v2423 = vld [vmem:[%s515 + $0x20] sm:$0xff]
      %v2424 = vld [vmem:[%s515 + $0x28] sm:$0xff]
      %v2425 = vld [vmem:[%s515 + $0x30] sm:$0xff]
      %v2426 = vld [vmem:[%s515 + $0x38] sm:$0xff]
      %v2427 = vld [vmem:[%s515 + $0x40] sm:$0xff]
      %v2428 = vld [vmem:[%s515 + $0x48] sm:$0xff]
      %v2430 = vsel %vm526, %v2418, 0
      %2432 = vmatpush.msra.mxu0 0.0
      %2433 = vmatpush.msra.mxu0 0.0
      %2434 = vmatpush.msra.mxu0 0.0
      %2435 = vmatpush.msra.mxu0 0.0
      %2436 = vmatpush.msra.mxu0 0.0
      %2437 = vmatpush.msra.mxu0 0.0
      %2438 = vmatpush.msra.mxu0 %v2428
      %2439 = vmatpush.msra.mxu0 %v2427
      %2440 = vmatpush.msra.mxu0 %v2426
      %2441 = vmatpush.msra.mxu0 %v2425
      %2442 = vmatpush.msra.mxu0 %v2424
      %2443 = vmatpush.msra.mxu0 %v2423
      %2444 = vmatpush.msra.mxu0 %v2422
      %2445 = vmatpush.msra.mxu0 %v2421
      %2446 = vmatpush.msra.mxu0 %v2420
      %2447 = vmatpush.msra.mxu0 %v2419
      %2448 = vmatmul.f32.gmra.mxu0 %v2430
      %v2449 = vpop.f32.mrf.mxu0
      %v2450 = vadd.f32 0.0, %v2449
      %2451 = vdwg.mxu0
      %v2452 = vld [vmem:[%s550] ss:$2 sm:$0xf]
      %v2454 = vsel %vm526, %v2452, 0
      %2456 = vmatpush.msra.mxu0 0.0
      %2457 = vmatpush.msra.mxu0 0.0
      %2458 = vmatpush.msra.mxu0 0.0
      %2459 = vmatpush.msra.mxu0 0.0
      %2460 = vmatpush.msra.mxu0 0.0
      %2461 = vmatpush.msra.mxu0 0.0
      %2462 = vmatpush.msra.mxu0 %v2428
      %2463 = vmatpush.msra.mxu0 %v2427
      %2464 = vmatpush.msra.mxu0 %v2426
      %2465 = vmatpush.msra.mxu0 %v2425
      %2466 = vmatpush.msra.mxu0 %v2424
      %2467 = vmatpush.msra.mxu0 %v2423
      %2468 = vmatpush.msra.mxu0 %v2422
      %2469 = vmatpush.msra.mxu0 %v2421
      %2470 = vmatpush.msra.mxu0 %v2420
      %2471 = vmatpush.msra.mxu0 %v2419
      %2472 = vmatmul.f32.gmra.mxu0 %v2454
      %v2473 = vpop.f32.mrf.mxu0
      %v2474 = vadd.f32 0.0, %v2473
      %2475 = vdwg.mxu0
      %v2477 = vsel %vm526, %v2417, 0
      %2479 = vmatpush.msra.mxu0 0.0
      %2480 = vmatpush.msra.mxu0 0.0
      %2481 = vmatpush.msra.mxu0 0.0
      %2482 = vmatpush.msra.mxu0 0.0
      %2483 = vmatpush.msra.mxu0 0.0
      %2484 = vmatpush.msra.mxu0 0.0
      %2485 = vmatpush.msra.mxu0 %v2416
      %2486 = vmatpush.msra.mxu0 %v2415
      %2487 = vmatpush.msra.mxu0 %v2414
      %2488 = vmatpush.msra.mxu0 %v2413
      %2489 = vmatpush.msra.mxu0 %v2412
      %2490 = vmatpush.msra.mxu0 %v2411
      %2491 = vmatpush.msra.mxu0 %v2410
      %2492 = vmatpush.msra.mxu0 %v2409
      %2493 = vmatpush.msra.mxu0 %v2408
      %2494 = vmatpush.msra.mxu0 %v2407
      %2495 = vmatmul.f32.gmra.mxu0 %v2477
      %v2496 = vpop.f32.mrf.mxu0
      %v2497 = vadd.f32 %v2450, %v2496
      %2498 = vdwg.mxu0
      %2499 = vmatpush.msra.mxu0 0.0
      %2500 = vmatpush.msra.mxu0 0.0
      %2501 = vmatpush.msra.mxu0 0.0
      %2502 = vmatpush.msra.mxu0 0.0
      %2503 = vmatpush.msra.mxu0 0.0
      %2504 = vmatpush.msra.mxu0 0.0
      %2505 = vmatpush.msra.mxu0 %v2416
      %2506 = vmatpush.msra.mxu0 %v2415
      %2507 = vmatpush.msra.mxu0 %v2414
      %2508 = vmatpush.msra.mxu0 %v2413
      %2509 = vmatpush.msra.mxu0 %v2412
      %2510 = vmatpush.msra.mxu0 %v2411
      %2511 = vmatpush.msra.mxu0 %v2410
      %2512 = vmatpush.msra.mxu0 %v2409
      %2513 = vmatpush.msra.mxu0 %v2408
      %2514 = vmatpush.msra.mxu0 %v2407
      %2515 = vmatmul.f32.gmra.mxu0 %v2430
      %v2516 = vpop.f32.mrf.mxu0
      %v2517 = vadd.f32 %v2474, %v2516
      %2518 = vdwg.mxu0
      %v2519 = vld [vmem:[%s618] sm:$0xff]
      %v2520 = vld [vmem:[%s618 + $0x8] sm:$0xff]
      %v2521 = vld [vmem:[%s618 + $0x10] sm:$0xff]
      %v2522 = vld [vmem:[%s618 + $0x18] sm:$0xff]
      %v2523 = vld [vmem:[%s618 + $0x20] sm:$0xff]
      %v2524 = vld [vmem:[%s618 + $0x28] sm:$0xff]
      %v2525 = vld [vmem:[%s618 + $0x30] sm:$0xff]
      %v2526 = vld [vmem:[%s618 + $0x38] sm:$0xff]
      %v2527 = vld [vmem:[%s618 + $0x40] sm:$0xff]
      %v2528 = vld [vmem:[%s618 + $0x48] sm:$0xff]
      %2529 = vmatpush.msra.mxu0 0.0
      %2530 = vmatpush.msra.mxu0 0.0
      %2531 = vmatpush.msra.mxu0 0.0
      %2532 = vmatpush.msra.mxu0 0.0
      %2533 = vmatpush.msra.mxu0 0.0
      %2534 = vmatpush.msra.mxu0 0.0
      %2535 = vmatpush.msra.mxu0 %v2528
      %2536 = vmatpush.msra.mxu0 %v2527
      %2537 = vmatpush.msra.mxu0 %v2526
      %2538 = vmatpush.msra.mxu0 %v2525
      %2539 = vmatpush.msra.mxu0 %v2524
      %2540 = vmatpush.msra.mxu0 %v2523
      %2541 = vmatpush.msra.mxu0 %v2522
      %2542 = vmatpush.msra.mxu0 %v2521
      %2543 = vmatpush.msra.mxu0 %v2520
      %2544 = vmatpush.msra.mxu0 %v2519
      %2545 = vmatmul.f32.gmra.mxu0 %v2454
      %v2546 = vpop.f32.mrf.mxu0
      %v2547 = vadd.f32 0.0, %v2546
      %2548 = vdwg.mxu0
      %v2549 = vld [vmem:[%s649] ss:$2 sm:$0xf]
      %v2551 = vsel %vm526, %v2549, 0
      %2553 = vmatpush.msra.mxu0 0.0
      %2554 = vmatpush.msra.mxu0 0.0
      %2555 = vmatpush.msra.mxu0 0.0
      %2556 = vmatpush.msra.mxu0 0.0
      %2557 = vmatpush.msra.mxu0 0.0
      %2558 = vmatpush.msra.mxu0 0.0
      %2559 = vmatpush.msra.mxu0 %v2528
      %2560 = vmatpush.msra.mxu0 %v2527
      %2561 = vmatpush.msra.mxu0 %v2526
      %2562 = vmatpush.msra.mxu0 %v2525
      %2563 = vmatpush.msra.mxu0 %v2524
      %2564 = vmatpush.msra.mxu0 %v2523
      %2565 = vmatpush.msra.mxu0 %v2522
      %2566 = vmatpush.msra.mxu0 %v2521
      %2567 = vmatpush.msra.mxu0 %v2520
      %2568 = vmatpush.msra.mxu0 %v2519
      %2569 = vmatmul.f32.gmra.mxu0 %v2551
      %v2570 = vpop.f32.mrf.mxu0
      %v2571 = vadd.f32 0.0, %v2570
      %2572 = vdwg.mxu0
      %v2573 = vadd.f32 %v2497, %v2547
      %v2574 = vadd.f32 %v2517, %v2571
      %v2575 = vmax.f32 %v2573, %v2574
      %2577 = vrot.lane.b32.xlu0 %v2575, 64
      %v2578 = vpop.permute.xlu0 %2577
      %v2580 = vmax.f32 %v2575, %v2578
      %v2581 = vadd.f32 %v2580, %v683
      %v2582 = vmax.f32 %v2581, 0.0
      %v2583 = vmul.f32 %v2582, %v298
      %v2584 = vsel %vm688, %v2583, 0.0
      %2585 = vadd.xlane.f32.xlu0 %v2584
      %v2586 = vpop.xlane.xlu0 %2585
      %v2587 = vrot.slane %v2586, 4
      %v2588 = vadd.f32 %v2586, %v2587
      %v2589 = vrot.slane %v2588, 2
      %v2590 = vadd.f32 %v2588, %v2589
      %v2591 = vrot.slane %v2590, 1
      %v2592 = vadd.f32 %v2590, %v2591
      %s2593 = vtos %v2592
      %v2594 = vstv %s2593
      %s2595 = scalar_lea.vmem %s277, 96
      %v2596 = vld [vmem:[%s2595] sm:$0xff]
      %v2597 = vld [vmem:[%s2595 + $0x8] sm:$0xff]
      %2600 = vrot.lane.b32.xlu0 %v2596, 4
      %v2601 = vpop.permute.xlu0 %2600
      %2602 = vrot.lane.b32.xlu0 %v2597, 4
      %v2603 = vpop.permute.xlu0 %2602
      %2606 = vst.msk [vmem:[#allocation2 + $0x1] sm:$0xff] %vm311, %v2601
      %2607 = vst.msk [vmem:[#allocation2 + $0x9] sm:$0xff] %vm311, %v2603
      %v2608 = vld [vmem:[%s1] sm:$0xff]
      %v2609 = vld [vmem:[%s1 + $0x8] sm:$0xff]
      %v2610 = vld [vmem:[%s1 + $0x10] sm:$0xff]
      %v2611 = vld [vmem:[%s1 + $0x18] sm:$0xff]
      %v2612 = vld [vmem:[%s1 + $0x20] sm:$0xff]
      %v2613 = vld [vmem:[%s1 + $0x28] sm:$0xff]
      %v2614 = vld [vmem:[%s1 + $0x30] sm:$0xff]
      %v2615 = vld [vmem:[%s1 + $0x38] sm:$0xff]
      %v2616 = vld [vmem:[%s1 + $0x40] sm:$0xff]
      %v2617 = vld [vmem:[#allocation2] ss:$2 sm:$0xff]
      %v2618 = vld [vmem:[%s324] ss:$2 sm:$0xff]
      %v2619 = vld [vmem:[%s326] sm:$0xff]
      %v2620 = vld [vmem:[%s326 + $0x8] sm:$0xff]
      %v2621 = vld [vmem:[%s326 + $0x10] sm:$0xff]
      %v2622 = vld [vmem:[%s326 + $0x18] sm:$0xff]
      %v2623 = vld [vmem:[%s326 + $0x20] sm:$0xff]
      %v2624 = vld [vmem:[%s326 + $0x28] sm:$0xff]
      %v2625 = vld [vmem:[%s326 + $0x30] sm:$0xff]
      %v2626 = vld [vmem:[%s326 + $0x38] sm:$0xff]
      %v2627 = vld [vmem:[%s326 + $0x40] sm:$0xff]
      %v2629 = vsel %vm336, %v2618, 0
      %2631 = vmatpush.msra.mxu0 0.0
      %2632 = vmatpush.msra.mxu0 0.0
      %2633 = vmatpush.msra.mxu0 0.0
      %2634 = vmatpush.msra.mxu0 0.0
      %2635 = vmatpush.msra.mxu0 0.0
      %2636 = vmatpush.msra.mxu0 0.0
      %2637 = vmatpush.msra.mxu0 0.0
      %2638 = vmatpush.msra.mxu0 %v2627
      %2639 = vmatpush.msra.mxu0 %v2626
      %2640 = vmatpush.msra.mxu0 %v2625
      %2641 = vmatpush.msra.mxu0 %v2624
      %2642 = vmatpush.msra.mxu0 %v2623
      %2643 = vmatpush.msra.mxu0 %v2622
      %2644 = vmatpush.msra.mxu0 %v2621
      %2645 = vmatpush.msra.mxu0 %v2620
      %2646 = vmatpush.msra.mxu0 %v2619
      %2647 = vmatmul.f32.gmra.mxu0 %v2629
      %v2648 = vpop.f32.mrf.mxu0
      %v2649 = vadd.f32 0.0, %v2648
      %2650 = vdwg.mxu0
      %v2651 = vld [vmem:[%s360] ss:$2 sm:$0xff]
      %v2653 = vsel %vm336, %v2651, 0
      %2655 = vmatpush.msra.mxu0 0.0
      %2656 = vmatpush.msra.mxu0 0.0
      %2657 = vmatpush.msra.mxu0 0.0
      %2658 = vmatpush.msra.mxu0 0.0
      %2659 = vmatpush.msra.mxu0 0.0
      %2660 = vmatpush.msra.mxu0 0.0
      %2661 = vmatpush.msra.mxu0 0.0
      %2662 = vmatpush.msra.mxu0 %v2627
      %2663 = vmatpush.msra.mxu0 %v2626
      %2664 = vmatpush.msra.mxu0 %v2625
      %2665 = vmatpush.msra.mxu0 %v2624
      %2666 = vmatpush.msra.mxu0 %v2623
      %2667 = vmatpush.msra.mxu0 %v2622
      %2668 = vmatpush.msra.mxu0 %v2621
      %2669 = vmatpush.msra.mxu0 %v2620
      %2670 = vmatpush.msra.mxu0 %v2619
      %2671 = vmatmul.f32.gmra.mxu0 %v2653
      %v2672 = vpop.f32.mrf.mxu0
      %v2673 = vadd.f32 0.0, %v2672
      %2674 = vdwg.mxu0
      %v2676 = vsel %vm336, %v2617, 0
      %2678 = vmatpush.msra.mxu0 0.0
      %2679 = vmatpush.msra.mxu0 0.0
      %2680 = vmatpush.msra.mxu0 0.0
      %2681 = vmatpush.msra.mxu0 0.0
      %2682 = vmatpush.msra.mxu0 0.0
      %2683 = vmatpush.msra.mxu0 0.0
      %2684 = vmatpush.msra.mxu0 0.0
      %2685 = vmatpush.msra.mxu0 %v2616
      %2686 = vmatpush.msra.mxu0 %v2615
      %2687 = vmatpush.msra.mxu0 %v2614
      %2688 = vmatpush.msra.mxu0 %v2613
      %2689 = vmatpush.msra.mxu0 %v2612
      %2690 = vmatpush.msra.mxu0 %v2611
      %2691 = vmatpush.msra.mxu0 %v2610
      %2692 = vmatpush.msra.mxu0 %v2609
      %2693 = vmatpush.msra.mxu0 %v2608
      %2694 = vmatmul.f32.gmra.mxu0 %v2676
      %v2695 = vpop.f32.mrf.mxu0
      %v2696 = vadd.f32 %v2649, %v2695
      %2697 = vdwg.mxu0
      %2698 = vmatpush.msra.mxu0 0.0
      %2699 = vmatpush.msra.mxu0 0.0
      %2700 = vmatpush.msra.mxu0 0.0
      %2701 = vmatpush.msra.mxu0 0.0
      %2702 = vmatpush.msra.mxu0 0.0
      %2703 = vmatpush.msra.mxu0 0.0
      %2704 = vmatpush.msra.mxu0 0.0
      %2705 = vmatpush.msra.mxu0 %v2616
      %2706 = vmatpush.msra.mxu0 %v2615
      %2707 = vmatpush.msra.mxu0 %v2614
      %2708 = vmatpush.msra.mxu0 %v2613
      %2709 = vmatpush.msra.mxu0 %v2612
      %2710 = vmatpush.msra.mxu0 %v2611
      %2711 = vmatpush.msra.mxu0 %v2610
      %2712 = vmatpush.msra.mxu0 %v2609
      %2713 = vmatpush.msra.mxu0 %v2608
      %2714 = vmatmul.f32.gmra.mxu0 %v2629
      %v2715 = vpop.f32.mrf.mxu0
      %v2716 = vadd.f32 %v2673, %v2715
      %2717 = vdwg.mxu0
      %v2718 = vld [vmem:[%s428] sm:$0xff]
      %v2719 = vld [vmem:[%s428 + $0x8] sm:$0xff]
      %v2720 = vld [vmem:[%s428 + $0x10] sm:$0xff]
      %v2721 = vld [vmem:[%s428 + $0x18] sm:$0xff]
      %v2722 = vld [vmem:[%s428 + $0x20] sm:$0xff]
      %v2723 = vld [vmem:[%s428 + $0x28] sm:$0xff]
      %v2724 = vld [vmem:[%s428 + $0x30] sm:$0xff]
      %v2725 = vld [vmem:[%s428 + $0x38] sm:$0xff]
      %v2726 = vld [vmem:[%s428 + $0x40] sm:$0xff]
      %2727 = vmatpush.msra.mxu0 0.0
      %2728 = vmatpush.msra.mxu0 0.0
      %2729 = vmatpush.msra.mxu0 0.0
      %2730 = vmatpush.msra.mxu0 0.0
      %2731 = vmatpush.msra.mxu0 0.0
      %2732 = vmatpush.msra.mxu0 0.0
      %2733 = vmatpush.msra.mxu0 0.0
      %2734 = vmatpush.msra.mxu0 %v2726
      %2735 = vmatpush.msra.mxu0 %v2725
      %2736 = vmatpush.msra.mxu0 %v2724
      %2737 = vmatpush.msra.mxu0 %v2723
      %2738 = vmatpush.msra.mxu0 %v2722
      %2739 = vmatpush.msra.mxu0 %v2721
      %2740 = vmatpush.msra.mxu0 %v2720
      %2741 = vmatpush.msra.mxu0 %v2719
      %2742 = vmatpush.msra.mxu0 %v2718
      %2743 = vmatmul.f32.gmra.mxu0 %v2653
      %v2744 = vpop.f32.mrf.mxu0
      %v2745 = vadd.f32 0.0, %v2744
      %2746 = vdwg.mxu0
      %v2747 = vld [vmem:[%s458] ss:$2 sm:$0xff]
      %v2749 = vsel %vm336, %v2747, 0
      %2751 = vmatpush.msra.mxu0 0.0
      %2752 = vmatpush.msra.mxu0 0.0
      %2753 = vmatpush.msra.mxu0 0.0
      %2754 = vmatpush.msra.mxu0 0.0
      %2755 = vmatpush.msra.mxu0 0.0
      %2756 = vmatpush.msra.mxu0 0.0
      %2757 = vmatpush.msra.mxu0 0.0
      %2758 = vmatpush.msra.mxu0 %v2726
      %2759 = vmatpush.msra.mxu0 %v2725
      %2760 = vmatpush.msra.mxu0 %v2724
      %2761 = vmatpush.msra.mxu0 %v2723
      %2762 = vmatpush.msra.mxu0 %v2722
      %2763 = vmatpush.msra.mxu0 %v2721
      %2764 = vmatpush.msra.mxu0 %v2720
      %2765 = vmatpush.msra.mxu0 %v2719
      %2766 = vmatpush.msra.mxu0 %v2718
      %2767 = vmatmul.f32.gmra.mxu0 %v2749
      %v2768 = vpop.f32.mrf.mxu0
      %v2769 = vadd.f32 0.0, %v2768
      %2770 = vdwg.mxu0
      %v2771 = vadd.f32 %v2696, %v2745
      %v2772 = vadd.f32 %v2716, %v2769
      %v2773 = vmax.f32 %v2771, %v2772
      %2775 = vrot.lane.b32.xlu0 %v2773, 64
      %v2776 = vpop.permute.xlu0 %2775
      %v2778 = vmax.f32 %v2773, %v2776
      %v2779 = vadd.f32 %v2778, %v492
      %v2780 = vmax.f32 %v2779, 0.0
      %2782 = vrot.lane.b32.xlu0 %v2780, 8
      %v2783 = vpop.permute.xlu0 %2782
      %2785 = vst.msk [vmem:[#allocation3 + $0x1] sm:$0xff] %vm500, %v2783
      %v2786 = vld [vmem:[%s3] sm:$0xff]
      %v2787 = vld [vmem:[%s3 + $0x8] sm:$0xff]
      %v2788 = vld [vmem:[%s3 + $0x10] sm:$0xff]
      %v2789 = vld [vmem:[%s3 + $0x18] sm:$0xff]
      %v2790 = vld [vmem:[%s3 + $0x20] sm:$0xff]
      %v2791 = vld [vmem:[%s3 + $0x28] sm:$0xff]
      %v2792 = vld [vmem:[%s3 + $0x30] sm:$0xff]
      %v2793 = vld [vmem:[%s3 + $0x38] sm:$0xff]
      %v2794 = vld [vmem:[%s3 + $0x40] sm:$0xff]
      %v2795 = vld [vmem:[%s3 + $0x48] sm:$0xff]
      %v2796 = vld [vmem:[#allocation3] ss:$2 sm:$0xf]
      %v2797 = vld [vmem:[%s513] ss:$2 sm:$0xf]
      %v2798 = vld [vmem:[%s515] sm:$0xff]
      %v2799 = vld [vmem:[%s515 + $0x8] sm:$0xff]
      %v2800 = vld [vmem:[%s515 + $0x10] sm:$0xff]
      %v2801 = vld [vmem:[%s515 + $0x18] sm:$0xff]
      %v2802 = vld [vmem:[%s515 + $0x20] sm:$0xff]
      %v2803 = vld [vmem:[%s515 + $0x28] sm:$0xff]
      %v2804 = vld [vmem:[%s515 + $0x30] sm:$0xff]
      %v2805 = vld [vmem:[%s515 + $0x38] sm:$0xff]
      %v2806 = vld [vmem:[%s515 + $0x40] sm:$0xff]
      %v2807 = vld [vmem:[%s515 + $0x48] sm:$0xff]
      %v2809 = vsel %vm526, %v2797, 0
      %2811 = vmatpush.msra.mxu0 0.0
      %2812 = vmatpush.msra.mxu0 0.0
      %2813 = vmatpush.msra.mxu0 0.0
      %2814 = vmatpush.msra.mxu0 0.0
      %2815 = vmatpush.msra.mxu0 0.0
      %2816 = vmatpush.msra.mxu0 0.0
      %2817 = vmatpush.msra.mxu0 %v2807
      %2818 = vmatpush.msra.mxu0 %v2806
      %2819 = vmatpush.msra.mxu0 %v2805
      %2820 = vmatpush.msra.mxu0 %v2804
      %2821 = vmatpush.msra.mxu0 %v2803
      %2822 = vmatpush.msra.mxu0 %v2802
      %2823 = vmatpush.msra.mxu0 %v2801
      %2824 = vmatpush.msra.mxu0 %v2800
      %2825 = vmatpush.msra.mxu0 %v2799
      %2826 = vmatpush.msra.mxu0 %v2798
      %2827 = vmatmul.f32.gmra.mxu0 %v2809
      %v2828 = vpop.f32.mrf.mxu0
      %v2829 = vadd.f32 0.0, %v2828
      %2830 = vdwg.mxu0
      %v2831 = vld [vmem:[%s550] ss:$2 sm:$0xf]
      %v2833 = vsel %vm526, %v2831, 0
      %2835 = vmatpush.msra.mxu0 0.0
      %2836 = vmatpush.msra.mxu0 0.0
      %2837 = vmatpush.msra.mxu0 0.0
      %2838 = vmatpush.msra.mxu0 0.0
      %2839 = vmatpush.msra.mxu0 0.0
      %2840 = vmatpush.msra.mxu0 0.0
      %2841 = vmatpush.msra.mxu0 %v2807
      %2842 = vmatpush.msra.mxu0 %v2806
      %2843 = vmatpush.msra.mxu0 %v2805
      %2844 = vmatpush.msra.mxu0 %v2804
      %2845 = vmatpush.msra.mxu0 %v2803
      %2846 = vmatpush.msra.mxu0 %v2802
      %2847 = vmatpush.msra.mxu0 %v2801
      %2848 = vmatpush.msra.mxu0 %v2800
      %2849 = vmatpush.msra.mxu0 %v2799
      %2850 = vmatpush.msra.mxu0 %v2798
      %2851 = vmatmul.f32.gmra.mxu0 %v2833
      %v2852 = vpop.f32.mrf.mxu0
      %v2853 = vadd.f32 0.0, %v2852
      %2854 = vdwg.mxu0
      %v2856 = vsel %vm526, %v2796, 0
      %2858 = vmatpush.msra.mxu0 0.0
      %2859 = vmatpush.msra.mxu0 0.0
      %2860 = vmatpush.msra.mxu0 0.0
      %2861 = vmatpush.msra.mxu0 0.0
      %2862 = vmatpush.msra.mxu0 0.0
      %2863 = vmatpush.msra.mxu0 0.0
      %2864 = vmatpush.msra.mxu0 %v2795
      %2865 = vmatpush.msra.mxu0 %v2794
      %2866 = vmatpush.msra.mxu0 %v2793
      %2867 = vmatpush.msra.mxu0 %v2792
      %2868 = vmatpush.msra.mxu0 %v2791
      %2869 = vmatpush.msra.mxu0 %v2790
      %2870 = vmatpush.msra.mxu0 %v2789
      %2871 = vmatpush.msra.mxu0 %v2788
      %2872 = vmatpush.msra.mxu0 %v2787
      %2873 = vmatpush.msra.mxu0 %v2786
      %2874 = vmatmul.f32.gmra.mxu0 %v2856
      %v2875 = vpop.f32.mrf.mxu0
      %v2876 = vadd.f32 %v2829, %v2875
      %2877 = vdwg.mxu0
      %2878 = vmatpush.msra.mxu0 0.0
      %2879 = vmatpush.msra.mxu0 0.0
      %2880 = vmatpush.msra.mxu0 0.0
      %2881 = vmatpush.msra.mxu0 0.0
      %2882 = vmatpush.msra.mxu0 0.0
      %2883 = vmatpush.msra.mxu0 0.0
      %2884 = vmatpush.msra.mxu0 %v2795
      %2885 = vmatpush.msra.mxu0 %v2794
      %2886 = vmatpush.msra.mxu0 %v2793
      %2887 = vmatpush.msra.mxu0 %v2792
      %2888 = vmatpush.msra.mxu0 %v2791
      %2889 = vmatpush.msra.mxu0 %v2790
      %2890 = vmatpush.msra.mxu0 %v2789
      %2891 = vmatpush.msra.mxu0 %v2788
      %2892 = vmatpush.msra.mxu0 %v2787
      %2893 = vmatpush.msra.mxu0 %v2786
      %2894 = vmatmul.f32.gmra.mxu0 %v2809
      %v2895 = vpop.f32.mrf.mxu0
      %v2896 = vadd.f32 %v2853, %v2895
      %2897 = vdwg.mxu0
      %v2898 = vld [vmem:[%s618] sm:$0xff]
      %v2899 = vld [vmem:[%s618 + $0x8] sm:$0xff]
      %v2900 = vld [vmem:[%s618 + $0x10] sm:$0xff]
      %v2901 = vld [vmem:[%s618 + $0x18] sm:$0xff]
      %v2902 = vld [vmem:[%s618 + $0x20] sm:$0xff]
      %v2903 = vld [vmem:[%s618 + $0x28] sm:$0xff]
      %v2904 = vld [vmem:[%s618 + $0x30] sm:$0xff]
      %v2905 = vld [vmem:[%s618 + $0x38] sm:$0xff]
      %v2906 = vld [vmem:[%s618 + $0x40] sm:$0xff]
      %v2907 = vld [vmem:[%s618 + $0x48] sm:$0xff]
      %2908 = vmatpush.msra.mxu0 0.0
      %2909 = vmatpush.msra.mxu0 0.0
      %2910 = vmatpush.msra.mxu0 0.0
      %2911 = vmatpush.msra.mxu0 0.0
      %2912 = vmatpush.msra.mxu0 0.0
      %2913 = vmatpush.msra.mxu0 0.0
      %2914 = vmatpush.msra.mxu0 %v2907
      %2915 = vmatpush.msra.mxu0 %v2906
      %2916 = vmatpush.msra.mxu0 %v2905
      %2917 = vmatpush.msra.mxu0 %v2904
      %2918 = vmatpush.msra.mxu0 %v2903
      %2919 = vmatpush.msra.mxu0 %v2902
      %2920 = vmatpush.msra.mxu0 %v2901
      %2921 = vmatpush.msra.mxu0 %v2900
      %2922 = vmatpush.msra.mxu0 %v2899
      %2923 = vmatpush.msra.mxu0 %v2898
      %2924 = vmatmul.f32.gmra.mxu0 %v2833
      %v2925 = vpop.f32.mrf.mxu0
      %v2926 = vadd.f32 0.0, %v2925
      %2927 = vdwg.mxu0
      %v2928 = vld [vmem:[%s649] ss:$2 sm:$0xf]
      %v2930 = vsel %vm526, %v2928, 0
      %2932 = vmatpush.msra.mxu0 0.0
      %2933 = vmatpush.msra.mxu0 0.0
      %2934 = vmatpush.msra.mxu0 0.0
      %2935 = vmatpush.msra.mxu0 0.0
      %2936 = vmatpush.msra.mxu0 0.0
      %2937 = vmatpush.msra.mxu0 0.0
      %2938 = vmatpush.msra.mxu0 %v2907
      %2939 = vmatpush.msra.mxu0 %v2906
      %2940 = vmatpush.msra.mxu0 %v2905
      %2941 = vmatpush.msra.mxu0 %v2904
      %2942 = vmatpush.msra.mxu0 %v2903
      %2943 = vmatpush.msra.mxu0 %v2902
      %2944 = vmatpush.msra.mxu0 %v2901
      %2945 = vmatpush.msra.mxu0 %v2900
      %2946 = vmatpush.msra.mxu0 %v2899
      %2947 = vmatpush.msra.mxu0 %v2898
      %2948 = vmatmul.f32.gmra.mxu0 %v2930
      %v2949 = vpop.f32.mrf.mxu0
      %v2950 = vadd.f32 0.0, %v2949
      %2951 = vdwg.mxu0
      %v2952 = vadd.f32 %v2876, %v2926
      %v2953 = vadd.f32 %v2896, %v2950
      %v2954 = vmax.f32 %v2952, %v2953
      %2956 = vrot.lane.b32.xlu0 %v2954, 64
      %v2957 = vpop.permute.xlu0 %2956
      %v2959 = vmax.f32 %v2954, %v2957
      %v2960 = vadd.f32 %v2959, %v683
      %v2961 = vmax.f32 %v2960, 0.0
      %v2962 = vmul.f32 %v2961, %v298
      %v2963 = vsel %vm688, %v2962, 0.0
      %2964 = vadd.xlane.f32.xlu0 %v2963
      %v2965 = vpop.xlane.xlu0 %2964
      %v2966 = vrot.slane %v2965, 4
      %v2967 = vadd.f32 %v2965, %v2966
      %v2968 = vrot.slane %v2967, 2
      %v2969 = vadd.f32 %v2967, %v2968
      %v2970 = vrot.slane %v2969, 1
      %v2971 = vadd.f32 %v2969, %v2970
      %s2972 = vtos %v2971
      %v2973 = vstv %s2972
      %s2974 = scalar_lea.vmem %s277, 112
      %v2975 = vld [vmem:[%s2974] sm:$0xff]
      %v2976 = vld [vmem:[%s2974 + $0x8] sm:$0xff]
      %2979 = vrot.lane.b32.xlu0 %v2975, 4
      %v2980 = vpop.permute.xlu0 %2979
      %2981 = vrot.lane.b32.xlu0 %v2976, 4
      %v2982 = vpop.permute.xlu0 %2981
      %2985 = vst.msk [vmem:[#allocation2 + $0x1] sm:$0xff] %vm311, %v2980
      %2986 = vst.msk [vmem:[#allocation2 + $0x9] sm:$0xff] %vm311, %v2982
      %v2987 = vld [vmem:[%s1] sm:$0xff]
      %v2988 = vld [vmem:[%s1 + $0x8] sm:$0xff]
      %v2989 = vld [vmem:[%s1 + $0x10] sm:$0xff]
      %v2990 = vld [vmem:[%s1 + $0x18] sm:$0xff]
      %v2991 = vld [vmem:[%s1 + $0x20] sm:$0xff]
      %v2992 = vld [vmem:[%s1 + $0x28] sm:$0xff]
      %v2993 = vld [vmem:[%s1 + $0x30] sm:$0xff]
      %v2994 = vld [vmem:[%s1 + $0x38] sm:$0xff]
      %v2995 = vld [vmem:[%s1 + $0x40] sm:$0xff]
      %v2996 = vld [vmem:[#allocation2] ss:$2 sm:$0xff]
      %v2997 = vld [vmem:[%s324] ss:$2 sm:$0xff]
      %v2998 = vld [vmem:[%s326] sm:$0xff]
      %v2999 = vld [vmem:[%s326 + $0x8] sm:$0xff]
      %v3000 = vld [vmem:[%s326 + $0x10] sm:$0xff]
      %v3001 = vld [vmem:[%s326 + $0x18] sm:$0xff]
      %v3002 = vld [vmem:[%s326 + $0x20] sm:$0xff]
      %v3003 = vld [vmem:[%s326 + $0x28] sm:$0xff]
      %v3004 = vld [vmem:[%s326 + $0x30] sm:$0xff]
      %v3005 = vld [vmem:[%s326 + $0x38] sm:$0xff]
      %v3006 = vld [vmem:[%s326 + $0x40] sm:$0xff]
      %v3008 = vsel %vm336, %v2997, 0
      %3010 = vmatpush.msra.mxu0 0.0
      %3011 = vmatpush.msra.mxu0 0.0
      %3012 = vmatpush.msra.mxu0 0.0
      %3013 = vmatpush.msra.mxu0 0.0
      %3014 = vmatpush.msra.mxu0 0.0
      %3015 = vmatpush.msra.mxu0 0.0
      %3016 = vmatpush.msra.mxu0 0.0
      %3017 = vmatpush.msra.mxu0 %v3006
      %3018 = vmatpush.msra.mxu0 %v3005
      %3019 = vmatpush.msra.mxu0 %v3004
      %3020 = vmatpush.msra.mxu0 %v3003
      %3021 = vmatpush.msra.mxu0 %v3002
      %3022 = vmatpush.msra.mxu0 %v3001
      %3023 = vmatpush.msra.mxu0 %v3000
      %3024 = vmatpush.msra.mxu0 %v2999
      %3025 = vmatpush.msra.mxu0 %v2998
      %3026 = vmatmul.f32.gmra.mxu0 %v3008
      %v3027 = vpop.f32.mrf.mxu0
      %v3028 = vadd.f32 0.0, %v3027
      %3029 = vdwg.mxu0
      %v3030 = vld [vmem:[%s360] ss:$2 sm:$0xff]
      %v3032 = vsel %vm336, %v3030, 0
      %3034 = vmatpush.msra.mxu0 0.0
      %3035 = vmatpush.msra.mxu0 0.0
      %3036 = vmatpush.msra.mxu0 0.0
      %3037 = vmatpush.msra.mxu0 0.0
      %3038 = vmatpush.msra.mxu0 0.0
      %3039 = vmatpush.msra.mxu0 0.0
      %3040 = vmatpush.msra.mxu0 0.0
      %3041 = vmatpush.msra.mxu0 %v3006
      %3042 = vmatpush.msra.mxu0 %v3005
      %3043 = vmatpush.msra.mxu0 %v3004
      %3044 = vmatpush.msra.mxu0 %v3003
      %3045 = vmatpush.msra.mxu0 %v3002
      %3046 = vmatpush.msra.mxu0 %v3001
      %3047 = vmatpush.msra.mxu0 %v3000
      %3048 = vmatpush.msra.mxu0 %v2999
      %3049 = vmatpush.msra.mxu0 %v2998
      %3050 = vmatmul.f32.gmra.mxu0 %v3032
      %v3051 = vpop.f32.mrf.mxu0
      %v3052 = vadd.f32 0.0, %v3051
      %3053 = vdwg.mxu0
      %v3055 = vsel %vm336, %v2996, 0
      %3057 = vmatpush.msra.mxu0 0.0
      %3058 = vmatpush.msra.mxu0 0.0
      %3059 = vmatpush.msra.mxu0 0.0
      %3060 = vmatpush.msra.mxu0 0.0
      %3061 = vmatpush.msra.mxu0 0.0
      %3062 = vmatpush.msra.mxu0 0.0
      %3063 = vmatpush.msra.mxu0 0.0
      %3064 = vmatpush.msra.mxu0 %v2995
      %3065 = vmatpush.msra.mxu0 %v2994
      %3066 = vmatpush.msra.mxu0 %v2993
      %3067 = vmatpush.msra.mxu0 %v2992
      %3068 = vmatpush.msra.mxu0 %v2991
      %3069 = vmatpush.msra.mxu0 %v2990
      %3070 = vmatpush.msra.mxu0 %v2989
      %3071 = vmatpush.msra.mxu0 %v2988
      %3072 = vmatpush.msra.mxu0 %v2987
      %3073 = vmatmul.f32.gmra.mxu0 %v3055
      %v3074 = vpop.f32.mrf.mxu0
      %v3075 = vadd.f32 %v3028, %v3074
      %3076 = vdwg.mxu0
      %3077 = vmatpush.msra.mxu0 0.0
      %3078 = vmatpush.msra.mxu0 0.0
      %3079 = vmatpush.msra.mxu0 0.0
      %3080 = vmatpush.msra.mxu0 0.0
      %3081 = vmatpush.msra.mxu0 0.0
      %3082 = vmatpush.msra.mxu0 0.0
      %3083 = vmatpush.msra.mxu0 0.0
      %3084 = vmatpush.msra.mxu0 %v2995
      %3085 = vmatpush.msra.mxu0 %v2994
      %3086 = vmatpush.msra.mxu0 %v2993
      %3087 = vmatpush.msra.mxu0 %v2992
      %3088 = vmatpush.msra.mxu0 %v2991
      %3089 = vmatpush.msra.mxu0 %v2990
      %3090 = vmatpush.msra.mxu0 %v2989
      %3091 = vmatpush.msra.mxu0 %v2988
      %3092 = vmatpush.msra.mxu0 %v2987
      %3093 = vmatmul.f32.gmra.mxu0 %v3008
      %v3094 = vpop.f32.mrf.mxu0
      %v3095 = vadd.f32 %v3052, %v3094
      %3096 = vdwg.mxu0
      %v3097 = vld [vmem:[%s428] sm:$0xff]
      %v3098 = vld [vmem:[%s428 + $0x8] sm:$0xff]
      %v3099 = vld [vmem:[%s428 + $0x10] sm:$0xff]
      %v3100 = vld [vmem:[%s428 + $0x18] sm:$0xff]
      %v3101 = vld [vmem:[%s428 + $0x20] sm:$0xff]
      %v3102 = vld [vmem:[%s428 + $0x28] sm:$0xff]
      %v3103 = vld [vmem:[%s428 + $0x30] sm:$0xff]
      %v3104 = vld [vmem:[%s428 + $0x38] sm:$0xff]
      %v3105 = vld [vmem:[%s428 + $0x40] sm:$0xff]
      %3106 = vmatpush.msra.mxu0 0.0
      %3107 = vmatpush.msra.mxu0 0.0
      %3108 = vmatpush.msra.mxu0 0.0
      %3109 = vmatpush.msra.mxu0 0.0
      %3110 = vmatpush.msra.mxu0 0.0
      %3111 = vmatpush.msra.mxu0 0.0
      %3112 = vmatpush.msra.mxu0 0.0
      %3113 = vmatpush.msra.mxu0 %v3105
      %3114 = vmatpush.msra.mxu0 %v3104
      %3115 = vmatpush.msra.mxu0 %v3103
      %3116 = vmatpush.msra.mxu0 %v3102
      %3117 = vmatpush.msra.mxu0 %v3101
      %3118 = vmatpush.msra.mxu0 %v3100
      %3119 = vmatpush.msra.mxu0 %v3099
      %3120 = vmatpush.msra.mxu0 %v3098
      %3121 = vmatpush.msra.mxu0 %v3097
      %3122 = vmatmul.f32.gmra.mxu0 %v3032
      %v3123 = vpop.f32.mrf.mxu0
      %v3124 = vadd.f32 0.0, %v3123
      %3125 = vdwg.mxu0
      %v3126 = vld [vmem:[%s458] ss:$2 sm:$0xff]
      %v3128 = vsel %vm336, %v3126, 0
      %3130 = vmatpush.msra.mxu0 0.0
      %3131 = vmatpush.msra.mxu0 0.0
      %3132 = vmatpush.msra.mxu0 0.0
      %3133 = vmatpush.msra.mxu0 0.0
      %3134 = vmatpush.msra.mxu0 0.0
      %3135 = vmatpush.msra.mxu0 0.0
      %3136 = vmatpush.msra.mxu0 0.0
      %3137 = vmatpush.msra.mxu0 %v3105
      %3138 = vmatpush.msra.mxu0 %v3104
      %3139 = vmatpush.msra.mxu0 %v3103
      %3140 = vmatpush.msra.mxu0 %v3102
      %3141 = vmatpush.msra.mxu0 %v3101
      %3142 = vmatpush.msra.mxu0 %v3100
      %3143 = vmatpush.msra.mxu0 %v3099
      %3144 = vmatpush.msra.mxu0 %v3098
      %3145 = vmatpush.msra.mxu0 %v3097
      %3146 = vmatmul.f32.gmra.mxu0 %v3128
      %v3147 = vpop.f32.mrf.mxu0
      %v3148 = vadd.f32 0.0, %v3147
      %3149 = vdwg.mxu0
      %v3150 = vadd.f32 %v3075, %v3124
      %v3151 = vadd.f32 %v3095, %v3148
      %v3152 = vmax.f32 %v3150, %v3151
      %3154 = vrot.lane.b32.xlu0 %v3152, 64
      %v3155 = vpop.permute.xlu0 %3154
      %v3157 = vmax.f32 %v3152, %v3155
      %v3158 = vadd.f32 %v3157, %v492
      %v3159 = vmax.f32 %v3158, 0.0
      %3161 = vrot.lane.b32.xlu0 %v3159, 8
      %v3162 = vpop.permute.xlu0 %3161
      %3164 = vst.msk [vmem:[#allocation3 + $0x1] sm:$0xff] %vm500, %v3162
      %v3165 = vld [vmem:[%s3] sm:$0xff]
      %v3166 = vld [vmem:[%s3 + $0x8] sm:$0xff]
      %v3167 = vld [vmem:[%s3 + $0x10] sm:$0xff]
      %v3168 = vld [vmem:[%s3 + $0x18] sm:$0xff]
      %v3169 = vld [vmem:[%s3 + $0x20] sm:$0xff]
      %v3170 = vld [vmem:[%s3 + $0x28] sm:$0xff]
      %v3171 = vld [vmem:[%s3 + $0x30] sm:$0xff]
      %v3172 = vld [vmem:[%s3 + $0x38] sm:$0xff]
      %v3173 = vld [vmem:[%s3 + $0x40] sm:$0xff]
      %v3174 = vld [vmem:[%s3 + $0x48] sm:$0xff]
      %v3175 = vld [vmem:[#allocation3] ss:$2 sm:$0xf]
      %v3176 = vld [vmem:[%s513] ss:$2 sm:$0xf]
      %v3177 = vld [vmem:[%s515] sm:$0xff]
      %v3178 = vld [vmem:[%s515 + $0x8] sm:$0xff]
      %v3179 = vld [vmem:[%s515 + $0x10] sm:$0xff]
      %v3180 = vld [vmem:[%s515 + $0x18] sm:$0xff]
      %v3181 = vld [vmem:[%s515 + $0x20] sm:$0xff]
      %v3182 = vld [vmem:[%s515 + $0x28] sm:$0xff]
      %v3183 = vld [vmem:[%s515 + $0x30] sm:$0xff]
      %v3184 = vld [vmem:[%s515 + $0x38] sm:$0xff]
      %v3185 = vld [vmem:[%s515 + $0x40] sm:$0xff]
      %v3186 = vld [vmem:[%s515 + $0x48] sm:$0xff]
      %v3188 = vsel %vm526, %v3176, 0
      %3190 = vmatpush.msra.mxu0 0.0
      %3191 = vmatpush.msra.mxu0 0.0
      %3192 = vmatpush.msra.mxu0 0.0
      %3193 = vmatpush.msra.mxu0 0.0
      %3194 = vmatpush.msra.mxu0 0.0
      %3195 = vmatpush.msra.mxu0 0.0
      %3196 = vmatpush.msra.mxu0 %v3186
      %3197 = vmatpush.msra.mxu0 %v3185
      %3198 = vmatpush.msra.mxu0 %v3184
      %3199 = vmatpush.msra.mxu0 %v3183
      %3200 = vmatpush.msra.mxu0 %v3182
      %3201 = vmatpush.msra.mxu0 %v3181
      %3202 = vmatpush.msra.mxu0 %v3180
      %3203 = vmatpush.msra.mxu0 %v3179
      %3204 = vmatpush.msra.mxu0 %v3178
      %3205 = vmatpush.msra.mxu0 %v3177
      %3206 = vmatmul.f32.gmra.mxu0 %v3188
      %v3207 = vpop.f32.mrf.mxu0
      %v3208 = vadd.f32 0.0, %v3207
      %3209 = vdwg.mxu0
      %v3210 = vld [vmem:[%s550] ss:$2 sm:$0xf]
      %v3212 = vsel %vm526, %v3210, 0
      %3214 = vmatpush.msra.mxu0 0.0
      %3215 = vmatpush.msra.mxu0 0.0
      %3216 = vmatpush.msra.mxu0 0.0
      %3217 = vmatpush.msra.mxu0 0.0
      %3218 = vmatpush.msra.mxu0 0.0
      %3219 = vmatpush.msra.mxu0 0.0
      %3220 = vmatpush.msra.mxu0 %v3186
      %3221 = vmatpush.msra.mxu0 %v3185
      %3222 = vmatpush.msra.mxu0 %v3184
      %3223 = vmatpush.msra.mxu0 %v3183
      %3224 = vmatpush.msra.mxu0 %v3182
      %3225 = vmatpush.msra.mxu0 %v3181
      %3226 = vmatpush.msra.mxu0 %v3180
      %3227 = vmatpush.msra.mxu0 %v3179
      %3228 = vmatpush.msra.mxu0 %v3178
      %3229 = vmatpush.msra.mxu0 %v3177
      %3230 = vmatmul.f32.gmra.mxu0 %v3212
      %v3231 = vpop.f32.mrf.mxu0
      %v3232 = vadd.f32 0.0, %v3231
      %3233 = vdwg.mxu0
      %v3235 = vsel %vm526, %v3175, 0
      %3237 = vmatpush.msra.mxu0 0.0
      %3238 = vmatpush.msra.mxu0 0.0
      %3239 = vmatpush.msra.mxu0 0.0
      %3240 = vmatpush.msra.mxu0 0.0
      %3241 = vmatpush.msra.mxu0 0.0
      %3242 = vmatpush.msra.mxu0 0.0
      %3243 = vmatpush.msra.mxu0 %v3174
      %3244 = vmatpush.msra.mxu0 %v3173
      %3245 = vmatpush.msra.mxu0 %v3172
      %3246 = vmatpush.msra.mxu0 %v3171
      %3247 = vmatpush.msra.mxu0 %v3170
      %3248 = vmatpush.msra.mxu0 %v3169
      %3249 = vmatpush.msra.mxu0 %v3168
      %3250 = vmatpush.msra.mxu0 %v3167
      %3251 = vmatpush.msra.mxu0 %v3166
      %3252 = vmatpush.msra.mxu0 %v3165
      %3253 = vmatmul.f32.gmra.mxu0 %v3235
      %v3254 = vpop.f32.mrf.mxu0
      %v3255 = vadd.f32 %v3208, %v3254
      %3256 = vdwg.mxu0
      %3257 = vmatpush.msra.mxu0 0.0
      %3258 = vmatpush.msra.mxu0 0.0
      %3259 = vmatpush.msra.mxu0 0.0
      %3260 = vmatpush.msra.mxu0 0.0
      %3261 = vmatpush.msra.mxu0 0.0
      %3262 = vmatpush.msra.mxu0 0.0
      %3263 = vmatpush.msra.mxu0 %v3174
      %3264 = vmatpush.msra.mxu0 %v3173
      %3265 = vmatpush.msra.mxu0 %v3172
      %3266 = vmatpush.msra.mxu0 %v3171
      %3267 = vmatpush.msra.mxu0 %v3170
      %3268 = vmatpush.msra.mxu0 %v3169
      %3269 = vmatpush.msra.mxu0 %v3168
      %3270 = vmatpush.msra.mxu0 %v3167
      %3271 = vmatpush.msra.mxu0 %v3166
      %3272 = vmatpush.msra.mxu0 %v3165
      %3273 = vmatmul.f32.gmra.mxu0 %v3188
      %v3274 = vpop.f32.mrf.mxu0
      %v3275 = vadd.f32 %v3232, %v3274
      %3276 = vdwg.mxu0
      %v3277 = vld [vmem:[%s618] sm:$0xff]
      %v3278 = vld [vmem:[%s618 + $0x8] sm:$0xff]
      %v3279 = vld [vmem:[%s618 + $0x10] sm:$0xff]
      %v3280 = vld [vmem:[%s618 + $0x18] sm:$0xff]
      %v3281 = vld [vmem:[%s618 + $0x20] sm:$0xff]
      %v3282 = vld [vmem:[%s618 + $0x28] sm:$0xff]
      %v3283 = vld [vmem:[%s618 + $0x30] sm:$0xff]
      %v3284 = vld [vmem:[%s618 + $0x38] sm:$0xff]
      %v3285 = vld [vmem:[%s618 + $0x40] sm:$0xff]
      %v3286 = vld [vmem:[%s618 + $0x48] sm:$0xff]
      %3287 = vmatpush.msra.mxu0 0.0
      %3288 = vmatpush.msra.mxu0 0.0
      %3289 = vmatpush.msra.mxu0 0.0
      %3290 = vmatpush.msra.mxu0 0.0
      %3291 = vmatpush.msra.mxu0 0.0
      %3292 = vmatpush.msra.mxu0 0.0
      %3293 = vmatpush.msra.mxu0 %v3286
      %3294 = vmatpush.msra.mxu0 %v3285
      %3295 = vmatpush.msra.mxu0 %v3284
      %3296 = vmatpush.msra.mxu0 %v3283
      %3297 = vmatpush.msra.mxu0 %v3282
      %3298 = vmatpush.msra.mxu0 %v3281
      %3299 = vmatpush.msra.mxu0 %v3280
      %3300 = vmatpush.msra.mxu0 %v3279
      %3301 = vmatpush.msra.mxu0 %v3278
      %3302 = vmatpush.msra.mxu0 %v3277
      %3303 = vmatmul.f32.gmra.mxu0 %v3212
      %v3304 = vpop.f32.mrf.mxu0
      %v3305 = vadd.f32 0.0, %v3304
      %3306 = vdwg.mxu0
      %v3307 = vld [vmem:[%s649] ss:$2 sm:$0xf]
      %v3309 = vsel %vm526, %v3307, 0
      %3311 = vmatpush.msra.mxu0 0.0
      %3312 = vmatpush.msra.mxu0 0.0
      %3313 = vmatpush.msra.mxu0 0.0
      %3314 = vmatpush.msra.mxu0 0.0
      %3315 = vmatpush.msra.mxu0 0.0
      %3316 = vmatpush.msra.mxu0 0.0
      %3317 = vmatpush.msra.mxu0 %v3286
      %3318 = vmatpush.msra.mxu0 %v3285
      %3319 = vmatpush.msra.mxu0 %v3284
      %3320 = vmatpush.msra.mxu0 %v3283
      %3321 = vmatpush.msra.mxu0 %v3282
      %3322 = vmatpush.msra.mxu0 %v3281
      %3323 = vmatpush.msra.mxu0 %v3280
      %3324 = vmatpush.msra.mxu0 %v3279
      %3325 = vmatpush.msra.mxu0 %v3278
      %3326 = vmatpush.msra.mxu0 %v3277
      %3327 = vmatmul.f32.gmra.mxu0 %v3309
      %v3328 = vpop.f32.mrf.mxu0
      %v3329 = vadd.f32 0.0, %v3328
      %3330 = vdwg.mxu0
      %v3331 = vadd.f32 %v3255, %v3305
      %v3332 = vadd.f32 %v3275, %v3329
      %v3333 = vmax.f32 %v3331, %v3332
      %3335 = vrot.lane.b32.xlu0 %v3333, 64
      %v3336 = vpop.permute.xlu0 %3335
      %v3338 = vmax.f32 %v3333, %v3336
      %v3339 = vadd.f32 %v3338, %v683
      %v3340 = vmax.f32 %v3339, 0.0
      %v3341 = vmul.f32 %v3340, %v298
      %v3342 = vsel %vm688, %v3341, 0.0
      %3343 = vadd.xlane.f32.xlu0 %v3342
      %v3344 = vpop.xlane.xlu0 %3343
      %v3345 = vrot.slane %v3344, 4
      %v3346 = vadd.f32 %v3344, %v3345
      %v3347 = vrot.slane %v3346, 2
      %v3348 = vadd.f32 %v3346, %v3347
      %v3349 = vrot.slane %v3348, 1
      %v3350 = vadd.f32 %v3348, %v3349
      %s3351 = vtos %v3350
      %v3352 = vstv %s3351
      %vm3353 = vcmask 7168
      %v3354 = vsel %vm3353, %v699, %v1078
      %vm3355 = vcmask 15360
      %v3356 = vsel %vm3355, %v3354, %v1457
      %vm3357 = vcmask 23552
      %v3358 = vsel %vm3357, %v3356, %v1836
      %v3359 = vsel %vm285, %v3358, %v2215
      %vm3360 = vcmask 39936
      %v3361 = vsel %vm3360, %v3359, %v2594
      %vm3362 = vcmask 48128
      %v3363 = vsel %vm3362, %v3361, %v2973
      %vm3364 = vcmask 56320
      %v3365 = vsel %vm3364, %v3363, %v3352
      %v3366 = vld [vmem:[#allocation4] sm:$0x1]
      %3368 = vset.pattern.permute.xlu0 0
      %3369 = vperm.xlu0 %3368, %v3366
      %v3370 = vpop.permute.xlu0 %3369
      %v3372 = vperm.slane %v3370, 0
      %v3373 = vadd.f32 %v3365, %v3372
      %vm3374 = vcmask 57344
      %3375 = vst.msk [vmem:[%s281] sm:$0x1] %vm3374, %v3373
      %p3376 = scmp.lt.s32.totalorder %s20, 1
      %s3377 = scalar_select %p3376, %s20, 1
      %s3378 = scalar_lea.vmem %s7, %s3377
      // Predicated region
      $region49: #{forward.1} parent=47 // pred_check
        %p3379 = pneg %p190
      $region50: #{forward.1} parent=47 // pred_check_branch
        %3381 = sbr.rel (%p3379) target = $region52
      $region51: #{forward.1} parent=47 // pred_region
        _
      $region52: #{forward.1} parent=47 // pred_fallthru
        _
    $region48: #{forward.1} parent=5 // pred_fallthru
      _
    %p3382 = scmp.le.s32.totalorder 2, %s15
    // Predicated region
    $region53: #{forward.1} parent=5 // pred_check
      %p3383 = pneg %p3382
    $region54: #{forward.1} parent=5 // pred_check_branch
      %3385 = sbr.rel (%p3383) target = $region56
    $region55: #{forward.1} parent=5 // pred_region
      %s3386 = ssub.s32 %s15, 2
      // Predicated region
      $region57: #{forward.1} parent=55 // pred_check
        %p3387 = pneg %p196
      $region58: #{forward.1} parent=55 // pred_check_branch
        %3389 = sbr.rel (%p3387) target = $region60
      $region59: #{forward.1} parent=55 // pred_region
        %p3390 = scmp.lt.s32.totalorder %s21, 1
        %s3391 = scalar_select %p3390, %s21, 1
        %s3392 = scalar_lea.vmem %s7, %s3391
      $region60: #{forward.1} parent=55 // pred_fallthru
        _
    $region56: #{forward.1} parent=5 // pred_fallthru
      _
  $region6: #{forward.1} parent=0 // loop_footer
    %s19 = sadd.s32 1, %s15
  $region7: #{forward.1} parent=0 // loop_footer_branch
    %14 = sbr.rel target = $region3
  $region8: #{forward.1} parent=0 // loop_exit
    _

</llo_original>
